<compile_context>
chip_gen: v6e
topology: v6e:2x2x1
jax: 0.10.0
libtpu: 0.0.40
codegen_flags: <defaults>
</compile_context>

<pallas_src>
import functools

import jax
import jax.numpy as jnp
import numpy as np
from jax.experimental import pallas as pl
from jax.experimental.pallas import tpu as pltpu

BN_EPS = 1e-5
LANE = 128


def _round_up(v, m):
    return (v + m - 1) // m * m


def _head_kernel(x_ref, attn_ref, w1_ref, b1_ref, w2_ref, b2_ref, out_ref, acc_ref, *, cc):
    # x_ref:   (tb, cc, S) f32 feature chunk in the backbone's native channel-major layout.
    # attn_ref:(C, S) f32 resident softmax weights; w1_ref:(C,H1) bf16; w2_ref:(H1,NCP) bf16.
    c = pl.program_id(1)

    @pl.when(c == 0)
    def _():
        acc_ref[...] = jnp.zeros_like(acc_ref)

    # Softmax-weighted pool for this channel chunk: VPU multiply + lane (S) reduce (XLU).
    # x stays f32 (safe on v5e, which has no bf16 VALU); attn is resident f32.
    off = pl.multiple_of(c * cc, cc)
    a = attn_ref[pl.ds(off, cc), :]                             # (cc, S) f32
    pooled_c = jnp.sum(x_ref[...] * a[None, :, :], axis=-1)     # (tb, cc) f32, lane-dense

    # First Linear (BN folded into w1/b1), accumulated chunk-by-chunk on the bf16 MXU
    # path with an f32 VMEM accumulator.
    w1_c = w1_ref[pl.ds(off, cc), :]                            # (cc, H1) bf16, resident
    acc_ref[...] += jnp.dot(pooled_c.astype(jnp.bfloat16), w1_c,
                            preferred_element_type=jnp.float32)

    @pl.when(c == pl.num_programs(1) - 1)
    def _():
        # Bias + ReLU (dropout layers are identity in eval mode), then the second Linear.
        h = jnp.maximum(acc_ref[...] + b1_ref[...], 0.0)
        out = jnp.dot(h.astype(jnp.bfloat16), w2_ref[...],
                      preferred_element_type=jnp.float32) + b2_ref[...]
        out_ref[...] = out.astype(out_ref.dtype)


def _default_batch_tile(B, nc):
    # Multiple of 8 (unmasked output block), >= 2 batch tiles (v7x dual-TC sharding),
    # >= 4 total grid steps (pipeline depth), tile capped at 32 rows (VMEM-friendly).
    if B % 8 != 0:
        return B  # correct, but no pipelining / megacore sharding for odd batches
    for tb in (32, 24, 16, 8):
        if tb <= B and B % tb == 0 and B // tb >= 2 and (B // tb) * nc >= 4:
            return tb
    return 8


def resnext_weighted_head(x_nchw, params, *, batch_tile=None, channel_tile=None):
    """x_nchw: (B, C, H, W) float32 backbone features. Returns (B, num_classes) logits."""
    B, C, H, W = x_nchw.shape
    S = H * W
    H1, NC = params["w2"].shape

    # Native layout: (B, C, S) — a free reshape of NCHW, no transpose or dtype copy in HBM.
    x = x_nchw.reshape(B, C, S)

    # Grid-invariant softmax attention (eval mode), computed once here, laid out (C, S).
    attn = jax.nn.softmax(params["pool_logits"].reshape(C, S).astype(jnp.float32), axis=-1)

    # Fold BatchNorm1d (eval, running stats) into the first linear; ship weights in bf16.
    inv_std = jax.lax.rsqrt(params["bn_var"].astype(jnp.float32) + BN_EPS)
    scale = params["bn_gamma"].astype(jnp.float32) * inv_std                     # (H1,)
    w1 = (params["w1"].astype(jnp.float32) * scale[None, :]).astype(jnp.bfloat16)  # (C, H1)
    b1 = ((params["b1"].astype(jnp.float32) - params["bn_mean"]) * scale
          + params["bn_beta"]).reshape(1, H1).astype(jnp.float32)                # (1, H1)

    # Pad the tiny class dim to a full 128-lane block (unmasked stores, full MXU N dim).
    NCP = _round_up(NC, LANE)
    w2p = jnp.zeros((H1, NCP), jnp.bfloat16).at[:, :NC].set(params["w2"].astype(jnp.bfloat16))
    b2p = jnp.zeros((1, NCP), jnp.float32).at[:, :NC].set(params["b2"].astype(jnp.float32))

    # Channel chunking (reduction grid axis): keeps per-step feature buffers small and
    # avoids a full (tb, C, S) f32 temp.
    if channel_tile is None:
        cc = 256 if C % 256 == 0 else C
    else:
        cc = channel_tile
    assert C % cc == 0 and (cc % 8 == 0 or cc == C), "bad channel_tile"
    nc = C // cc

    if batch_tile is None:
        batch_tile = _default_batch_tile(B, nc)
    tb = batch_tile
    assert B % tb == 0, "batch_tile must divide batch"
    nb = B // tb
    grid = (nb, nc)

    def _invariant(shape):
        n = len(shape)
        return pl.BlockSpec(shape, lambda i, c, _n=n: (0,) * _n)

    # VMEM budget from actual buffer math (double-buffered tiles + resident weights +
    # scratch + pool-temp headroom). Defaults keep this well under v7x's 64 MiB physical.
    s_pad = _round_up(S, LANE)
    est = (2 * tb * cc * s_pad * 4              # feature tiles (f32, double-buffered, lane-padded)
           + 2 * C * s_pad * 4                  # attn (resident)
           + 2 * C * H1 * 2                     # w1 bf16 (resident)
           + 2 * 8 * _round_up(H1, LANE) * 4    # b1
           + 2 * _round_up(H1, 8) * NCP * 2     # w2 bf16
           + 2 * 8 * NCP * 4                    # b2
           + 2 * _round_up(tb, 8) * NCP * 4     # output tiles
           + _round_up(tb, 8) * _round_up(H1, LANE) * 4   # acc scratch
           + 2 * tb * cc * s_pad * 4)           # pool temp / relayout headroom
    vmem_limit = int(min(96 * 1024 * 1024, max(32 * 1024 * 1024, int(1.25 * est))))

    kernel = functools.partial(_head_kernel, cc=cc)
    out = pl.pallas_call(
        kernel,
        out_shape=jax.ShapeDtypeStruct((B, NCP), jnp.float32),
        grid_spec=pltpu.PrefetchScalarGridSpec(
            num_scalar_prefetch=0,
            grid=grid,
            in_specs=[
                pl.BlockSpec((tb, cc, S), lambda i, c: (i, c, 0)),   # feature chunks
                _invariant(attn.shape),                              # attn (C, S)
                _invariant(w1.shape), _invariant(b1.shape),
                _invariant(w2p.shape), _invariant(b2p.shape),
            ],
            out_specs=pl.BlockSpec((tb, NCP), lambda i, c: (i, 0)),
            scratch_shapes=[pltpu.VMEM((tb, H1), jnp.float32)],
        ),
        compiler_params=pltpu.CompilerParams(
            dimension_semantics=("parallel", "arbitrary"),
            vmem_limit_bytes=vmem_limit),
    )(x, attn, w1, b1, w2p, b2p)
    # The (B, NCP)->(B, NC) slice is a few KB and fuses into the consumer.
    return out[:, :NC]


def _reference(x_nchw, params):
    """Pure-JAX f32 eval-mode reference (un-folded BN)."""
    B, C, H, W = x_nchw.shape
    logits = params["pool_logits"].reshape(1, C, H * W)
    attn = jax.nn.softmax(logits, axis=-1).reshape(1, C, H, W)
    pooled = jnp.sum(x_nchw * attn, axis=(2, 3))
    h = pooled @ params["w1"] + params["b1"]
    h = (h - params["bn_mean"]) * jax.lax.rsqrt(params["bn_var"] + BN_EPS) \
        * params["bn_gamma"] + params["bn_beta"]
    h = jnp.maximum(h, 0.0)
    return h @ params["w2"] + params["b2"]


def _init_params(key, C, H, W, hidden, num_classes):
    k0, k1, k2, k3, k4, k5 = jax.random.split(key, 6)
    return {
        # SoftmaxWeightedPool2d logits (module inits to zeros; small random values here so
        # the softmax path is actually exercised numerically).
        "pool_logits": jax.random.normal(k0, (1, C, H, W), jnp.float32) * 0.5,
        # Linear(C, hidden)
        "w1": jax.random.normal(k1, (C, hidden), jnp.float32) * (1.0 / np.sqrt(C)),
        "b1": jax.random.normal(k2, (hidden,), jnp.float32) * 0.01,
        # BatchNorm1d(hidden) — synthetic running stats to exercise the math
        "bn_gamma": jnp.ones((hidden,), jnp.float32),
        "bn_beta": jnp.zeros((hidden,), jnp.float32),
        "bn_mean": jax.random.normal(k3, (hidden,), jnp.float32) * 0.1,
        "bn_var": jnp.abs(jax.random.normal(k4, (hidden,), jnp.float32)) * 0.5 + 0.5,
        # Linear(hidden, num_classes)
        "w2": jax.random.normal(k5, (hidden, num_classes), jnp.float32) * (1.0 / np.sqrt(hidden)),
        "b2": jnp.zeros((num_classes,), jnp.float32),
    }


if __name__ == "__main__":
    # Small shapes consistent with the module (real model: B, 2048, 7, 7 -> 512 -> 12).
    B, C, H, W = 32, 256, 7, 7
    HIDDEN, NUM_CLASSES = 128, 12

    key = jax.random.PRNGKey(0)
    kx, kp = jax.random.split(key)
    x = jax.random.normal(kx, (B, C, H, W), jnp.float32)   # backbone features (NCHW)
    params = _init_params(kp, C, H, W, HIDDEN, NUM_CLASSES)

    fn = jax.jit(resnext_weighted_head)
    out = fn(x, params)
    jax.block_until_ready(out)

    ref = _reference(x, params)
    # bf16 weights / bf16 MXU operands with f32 accumulation -> ~1e-3-level drift expected.
    np.testing.assert_allclose(np.asarray(out), np.asarray(ref), rtol=3e-2, atol=3e-2)
    print("KERNEL_OK")
</pallas_src>

<mosaic_0001>
module attributes {stable_mosaic.version = 11 : i64} {
  func.func @_head_kernel(%arg0: i32, %arg1: i32, %arg2: memref<8x256x49xf32, #tpu.memory_space<vmem>>, %arg3: memref<256x49xf32, #tpu.memory_space<vmem>>, %arg4: memref<256x128xbf16, #tpu.memory_space<vmem>>, %arg5: memref<1x128xf32, #tpu.memory_space<vmem>>, %arg6: memref<128x128xbf16, #tpu.memory_space<vmem>>, %arg7: memref<1x128xf32, #tpu.memory_space<vmem>>, %arg8: memref<8x128xf32, #tpu.memory_space<vmem>>, %arg9: memref<8x128xf32, #tpu.memory_space<vmem>>) attributes {dimension_semantics = [#tpu.dimension_semantics<parallel>, #tpu.dimension_semantics<arbitrary>], iteration_bounds = array<i64: 4, 1>, scalar_prefetch = 0 : i64, scratch_operands = 1 : i64, tpu.core_type = #tpu.core_type<tc>, window_params = [{transform_indices = @transform_0, window_bounds = array<i64: 8, 256, 49>}, {pipeline_mode = #tpu.pipeline_mode<synchronous>, transform_indices = @transform_1, window_bounds = array<i64: 256, 49>}, {pipeline_mode = #tpu.pipeline_mode<synchronous>, transform_indices = @transform_2, window_bounds = array<i64: 256, 128>}, {pipeline_mode = #tpu.pipeline_mode<synchronous>, transform_indices = @transform_3, window_bounds = array<i64: 1, 128>}, {pipeline_mode = #tpu.pipeline_mode<synchronous>, transform_indices = @transform_4, window_bounds = array<i64: 128, 128>}, {pipeline_mode = #tpu.pipeline_mode<synchronous>, transform_indices = @transform_5, window_bounds = array<i64: 1, 128>}, {transform_indices = @transform_6, window_bounds = array<i64: 8, 128>}]} {
    %c0_i32 = arith.constant 0 : i32
    %0 = arith.cmpi eq, %arg1, %c0_i32 : i32
    %1 = arith.extui %0 : i1 to i32
    %c0_i32_0 = arith.constant 0 : i32
    %2 = arith.cmpi ne, %1, %c0_i32_0 : i32
    scf.if %2 {
      %cst_12 = arith.constant 0.000000e+00 : f32
      %22 = vector.broadcast %cst_12 : f32 to vector<8x128xf32>
      %c0_13 = arith.constant 0 : index
      %c0_14 = arith.constant 0 : index
      %23 = vector.load %arg9[%c0_13, %c0_14] : memref<8x128xf32, #tpu.memory_space<vmem>>, vector<8x128xf32>
      tpu.vector_store %arg9[%c0_13, %c0_14], %22 {strides = array<i32>} : memref<8x128xf32, #tpu.memory_space<vmem>>, vector<8x128xf32>,
    } else {
    }
    %c256_i32 = arith.constant 256 : i32
    %3 = arith.muli %arg1, %c256_i32 : i32
    %4 = tpu.assume_multiple %3, 256 : i32
    %5 = arith.index_cast %4 : i32 to index
    %c0 = arith.constant 0 : index
    %6 = vector.load %arg3[%5, %c0] : memref<256x49xf32, #tpu.memory_space<vmem>>, vector<256x49xf32>
    %c0_1 = arith.constant 0 : index
    %c0_2 = arith.constant 0 : index
    %c0_3 = arith.constant 0 : index
    %7 = vector.load %arg2[%c0_1, %c0_2, %c0_3] : memref<8x256x49xf32, #tpu.memory_space<vmem>>, vector<8x256x49xf32>
    %8 = vector.shape_cast %6 : vector<256x49xf32> to vector<1x256x49xf32>
    %9 = vector.broadcast %8 : vector<1x256x49xf32> to vector<8x256x49xf32>
    %10 = arith.mulf %7, %9 : vector<8x256x49xf32>
    %cst = arith.constant dense<0.000000e+00> : vector<8x256xf32>
    %11 = vector.multi_reduction <add>, %10, %cst [2] : vector<8x256x49xf32> to vector<8x256xf32>
    %12 = arith.index_cast %4 : i32 to index
    %c0_4 = arith.constant 0 : index
    %13 = vector.load %arg4[%12, %c0_4] : memref<256x128xbf16, #tpu.memory_space<vmem>>, vector<256x128xbf16>
    %c0_5 = arith.constant 0 : index
    %c0_6 = arith.constant 0 : index
    %14 = vector.load %arg9[%c0_5, %c0_6] : memref<8x128xf32, #tpu.memory_space<vmem>>, vector<8x128xf32>
    %15 = arith.truncf %11 : vector<8x256xf32> to vector<8x256xbf16>
    %cst_7 = arith.constant dense<0.000000e+00> : vector<8x128xf32>
    %16 = tpu.matmul %15, %13, %cst_7 {dimension_numbers = #tpu.dot_dimension_numbers<[1], [0], [0], [1], [0, 0, 1, 1], [], []>} : vector<8x256xbf16>, vector<256x128xbf16>, vector<8x128xf32> -> vector<8x128xf32>
    %17 = arith.addf %14, %16 : vector<8x128xf32>
    %c0_8 = arith.constant 0 : index
    %c0_9 = arith.constant 0 : index
    %18 = vector.load %arg9[%c0_8, %c0_9] : memref<8x128xf32, #tpu.memory_space<vmem>>, vector<8x128xf32>
    tpu.vector_store %arg9[%c0_8, %c0_9], %17 {strides = array<i32>} : memref<8x128xf32, #tpu.memory_space<vmem>>, vector<8x128xf32>,
    %c0_i32_10 = arith.constant 0 : i32
    %19 = arith.cmpi eq, %arg1, %c0_i32_10 : i32
    %20 = arith.extui %19 : i1 to i32
    %c0_i32_11 = arith.constant 0 : i32
    %21 = arith.cmpi ne, %20, %c0_i32_11 : i32
    scf.if %21 {
      %c0_12 = arith.constant 0 : index
      %c0_13 = arith.constant 0 : index
      %22 = vector.load %arg9[%c0_12, %c0_13] : memref<8x128xf32, #tpu.memory_space<vmem>>, vector<8x128xf32>
      %c0_14 = arith.constant 0 : index
      %c0_15 = arith.constant 0 : index
      %23 = vector.load %arg5[%c0_14, %c0_15] : memref<1x128xf32, #tpu.memory_space<vmem>>, vector<1x128xf32>
      %24 = vector.broadcast %23 : vector<1x128xf32> to vector<8x128xf32>
      %25 = arith.addf %22, %24 : vector<8x128xf32>
      %cst_16 = arith.constant 0.000000e+00 : f32
      %26 = vector.broadcast %cst_16 : f32 to vector<8x128xf32>
      %27 = arith.maximumf %25, %26 : vector<8x128xf32>
      %28 = arith.truncf %27 : vector<8x128xf32> to vector<8x128xbf16>
      %c0_17 = arith.constant 0 : index
      %c0_18 = arith.constant 0 : index
      %29 = vector.load %arg6[%c0_17, %c0_18] : memref<128x128xbf16, #tpu.memory_space<vmem>>, vector<128x128xbf16>
      %cst_19 = arith.constant dense<0.000000e+00> : vector<8x128xf32>
      %30 = tpu.matmul %28, %29, %cst_19 {dimension_numbers = #tpu.dot_dimension_numbers<[1], [0], [0], [1], [0, 0, 1, 1], [], []>} : vector<8x128xbf16>, vector<128x128xbf16>, vector<8x128xf32> -> vector<8x128xf32>
      %c0_20 = arith.constant 0 : index
      %c0_21 = arith.constant 0 : index
      %31 = vector.load %arg7[%c0_20, %c0_21] : memref<1x128xf32, #tpu.memory_space<vmem>>, vector<1x128xf32>
      %32 = vector.broadcast %31 : vector<1x128xf32> to vector<8x128xf32>
      %33 = arith.addf %30, %32 : vector<8x128xf32>
      %c0_22 = arith.constant 0 : index
      %c0_23 = arith.constant 0 : index
      %34 = vector.load %arg8[%c0_22, %c0_23] : memref<8x128xf32, #tpu.memory_space<vmem>>, vector<8x128xf32>
      tpu.vector_store %arg8[%c0_22, %c0_23], %33 {strides = array<i32>} : memref<8x128xf32, #tpu.memory_space<vmem>>, vector<8x128xf32>,
    } else {
    }
    return
  }
  func.func @transform_0(%arg0: i32, %arg1: i32) -> (i32, i32, i32) {
    %c0_i32 = arith.constant 0 : i32
    %c0_i32_0 = arith.constant 0 : i32
    return %arg0, %arg1, %c0_i32 : i32, i32, i32
  }
  func.func @transform_1(%arg0: i32, %arg1: i32) -> (i32, i32) {
    %c0_i32 = arith.constant 0 : i32
    %c0_i32_0 = arith.constant 0 : i32
    %c0_i32_1 = arith.constant 0 : i32
    return %c0_i32, %c0_i32_0 : i32, i32
  }
  func.func @transform_2(%arg0: i32, %arg1: i32) -> (i32, i32) {
    %c0_i32 = arith.constant 0 : i32
    %c0_i32_0 = arith.constant 0 : i32
    %c0_i32_1 = arith.constant 0 : i32
    return %c0_i32, %c0_i32_0 : i32, i32
  }
  func.func @transform_3(%arg0: i32, %arg1: i32) -> (i32, i32) {
    %c0_i32 = arith.constant 0 : i32
    %c0_i32_0 = arith.constant 0 : i32
    %c0_i32_1 = arith.constant 0 : i32
    return %c0_i32, %c0_i32_0 : i32, i32
  }
  func.func @transform_4(%arg0: i32, %arg1: i32) -> (i32, i32) {
    %c0_i32 = arith.constant 0 : i32
    %c0_i32_0 = arith.constant 0 : i32
    %c0_i32_1 = arith.constant 0 : i32
    return %c0_i32, %c0_i32_0 : i32, i32
  }
  func.func @transform_5(%arg0: i32, %arg1: i32) -> (i32, i32) {
    %c0_i32 = arith.constant 0 : i32
    %c0_i32_0 = arith.constant 0 : i32
    %c0_i32_1 = arith.constant 0 : i32
    return %c0_i32, %c0_i32_0 : i32, i32
  }
  func.func @transform_6(%arg0: i32, %arg1: i32) -> (i32, i32) {
    %c0_i32 = arith.constant 0 : i32
    %c0_i32_0 = arith.constant 0 : i32
    return %arg0, %c0_i32 : i32, i32
  }
}

</mosaic_0001>

<llo_original>
// kernel: resnext_weighted_head.1
$region0: #{resnext_weighted_head.1}
  #allocation0 [shape = 'u32[]', space=smem, size = 0x4, offset = 0x4, fixed_abs, tag = 'smem constant byte address 0x4 - core index']
  #allocation1 [shape = 'u32[144,128]{1,0:T(1,128)}', space=vmem, size = 0x12000, scoped, tag = 'internal scratch']
  #allocation2 [shape = 'f32[8,128]{1,0:T(8,128)}', space=vmem, size = 0x1000, scoped, tag = 'scratch operand']
  %s0 = inlined_call_operand.vmem [shape: f32[32,256,49], index: 0, kind: input, shape index: {}]
  %s1 = inlined_call_operand.vmem [shape: f32[256,49], index: 1, kind: input, shape index: {}]
  %s2 = inlined_call_operand.vmem [shape: bf16[256,128], index: 2, kind: input, shape index: {}]
  %s3 = inlined_call_operand.vmem [shape: f32[1,128], index: 3, kind: input, shape index: {}]
  %s4 = inlined_call_operand.vmem [shape: bf16[128,128], index: 4, kind: input, shape index: {}]
  %s5 = inlined_call_operand.vmem [shape: f32[1,128], index: 5, kind: input, shape index: {}]
  %s6 = inlined_call_operand.vmem [shape: f32[32,128], index: 6, kind: output, shape index: {}]
  %s7 = sld [smem:[#allocation0]]
  $region65: #{resnext_weighted_head.1} parent=0
    _
  %s9 = ssub.s32 1, %s7
  %s10 = scalar_select 0, %s9, %s7
  loop: start=0, step=1, limit=6
  $region2: #{resnext_weighted_head.1} parent=0 // loop_pre_header
    _
  $region3: #{resnext_weighted_head.1} parent=0 // loop_header
    %s12 = sphi 0, %s16
    %p13 = scmp.ge.s32.totalorder %s12, 6
    %s19 = sphi 0, %s31
    %s20 = sphi 0, %s27
    %s21 = sphi 0, %s19
    %s22 = sphi 0, %s20
    %s23 = sphi 0, %s21
    %s24 = sphi 0, %s22
    %s36 = sphi 0, %s38
    %s39 = sphi 0, %s36
    %s40 = sphi 0, %s39
    %s56 = sphi 0, %s40
    %s60 = sphi 0, %s60
    %s62 = sphi 0, %s60
    %s63 = sphi 0, %s62
    %s77 = sphi 0, %s63
    %s81 = sphi 0, %s81
    %s83 = sphi 0, %s81
    %s84 = sphi 0, %s83
    %s98 = sphi 0, %s84
    %s102 = sphi 0, %s102
    %s104 = sphi 0, %s102
    %s105 = sphi 0, %s104
    %s119 = sphi 0, %s105
    %s123 = sphi 0, %s123
    %s125 = sphi 0, %s123
    %s126 = sphi 0, %s125
    %s140 = sphi 0, %s126
    %s144 = sphi 0, %s144
    %s146 = sphi 0, %s144
    %s147 = sphi 0, %s146
    %s161 = sphi 0, %s147
    %s167 = sphi 0, %s169
    %s170 = sphi 0, %s167
    %s171 = sphi 0, %s170
    %s187 = sphi 0, %s171
  $region4: #{resnext_weighted_head.1} parent=0 // loop_header_branch
    %15 = sbr.rel (%p13) target = $region8
  $region5: #{resnext_weighted_head.1} parent=0 // loop_body
    %s17 = ssub.s32 %s12, 1
    %s18 = ssub.s32 %s12, 2
    %s25 = sadd.s32 1, %s20
    %p26 = scmp.ge.s32.totalorder %s25, 1
    %s27 = scalar_select %p26, 0, %s25
    %s28 = sadd.s32 1, %s19
    %s29 = scalar_select %p26, %s28, %s19
    %p30 = scmp.ge.s32.totalorder %s29, 4
    %s31 = scalar_select %p30, 0, %s29
    %s32 = ssub.s32 %s19, %s31
    %s33 = ssub.s32 %s20, %s27
    %s34 = sor.u32 %s32, %s33
    %p35 = scmp.eq.s32.totalorder %s34, 0
    %s37 = sadd.s32 %s36, 1
    %s38 = scalar_select %p35, %s36, %s37
    %p41 = pneg %p35
    %p42 = scmp.eq.s32.totalorder %s12, 3
    %p43 = por %p41, %p42
    %p44 = scmp.ne.s32.totalorder %s36, %s39
    %p45 = scmp.eq.s32.totalorder %s12, 0
    %p46 = por %p44, %p45
    %p47 = scmp.ne.s32.totalorder %s36, %s39
    %p48 = scmp.eq.s32.totalorder %s17, 3
    %p49 = por %p47, %p48
    %p50 = scmp.ne.s32.totalorder %s39, %s40
    %p51 = scmp.eq.s32.totalorder %s17, 0
    %p52 = por %p50, %p51
    %p53 = scmp.ne.s32.totalorder %s39, %s40
    %p54 = scmp.eq.s32.totalorder %s18, 3
    %p55 = por %p53, %p54
    %p57 = scmp.ne.s32.totalorder %s40, %s56
    %p58 = scmp.eq.s32.totalorder %s18, 0
    %p59 = por %p57, %p58
    %s61 = sadd.s32 %s60, 1
    %p64 = scmp.eq.s32.totalorder %s12, 3
    %p65 = scmp.ne.s32.totalorder %s60, %s62
    %p66 = scmp.eq.s32.totalorder %s12, 0
    %p67 = por %p65, %p66
    %p68 = scmp.ne.s32.totalorder %s60, %s62
    %p69 = scmp.eq.s32.totalorder %s17, 3
    %p70 = por %p68, %p69
    %p71 = scmp.ne.s32.totalorder %s62, %s63
    %p72 = scmp.eq.s32.totalorder %s17, 0
    %p73 = por %p71, %p72
    %p74 = scmp.ne.s32.totalorder %s62, %s63
    %p75 = scmp.eq.s32.totalorder %s18, 3
    %p76 = por %p74, %p75
    %p78 = scmp.ne.s32.totalorder %s63, %s77
    %p79 = scmp.eq.s32.totalorder %s18, 0
    %p80 = por %p78, %p79
    %s82 = sadd.s32 %s81, 1
    %p85 = scmp.eq.s32.totalorder %s12, 3
    %p86 = scmp.ne.s32.totalorder %s81, %s83
    %p87 = scmp.eq.s32.totalorder %s12, 0
    %p88 = por %p86, %p87
    %p89 = scmp.ne.s32.totalorder %s81, %s83
    %p90 = scmp.eq.s32.totalorder %s17, 3
    %p91 = por %p89, %p90
    %p92 = scmp.ne.s32.totalorder %s83, %s84
    %p93 = scmp.eq.s32.totalorder %s17, 0
    %p94 = por %p92, %p93
    %p95 = scmp.ne.s32.totalorder %s83, %s84
    %p96 = scmp.eq.s32.totalorder %s18, 3
    %p97 = por %p95, %p96
    %p99 = scmp.ne.s32.totalorder %s84, %s98
    %p100 = scmp.eq.s32.totalorder %s18, 0
    %p101 = por %p99, %p100
    %s103 = sadd.s32 %s102, 1
    %p106 = scmp.eq.s32.totalorder %s12, 3
    %p107 = scmp.ne.s32.totalorder %s102, %s104
    %p108 = scmp.eq.s32.totalorder %s12, 0
    %p109 = por %p107, %p108
    %p110 = scmp.ne.s32.totalorder %s102, %s104
    %p111 = scmp.eq.s32.totalorder %s17, 3
    %p112 = por %p110, %p111
    %p113 = scmp.ne.s32.totalorder %s104, %s105
    %p114 = scmp.eq.s32.totalorder %s17, 0
    %p115 = por %p113, %p114
    %p116 = scmp.ne.s32.totalorder %s104, %s105
    %p117 = scmp.eq.s32.totalorder %s18, 3
    %p118 = por %p116, %p117
    %p120 = scmp.ne.s32.totalorder %s105, %s119
    %p121 = scmp.eq.s32.totalorder %s18, 0
    %p122 = por %p120, %p121
    %s124 = sadd.s32 %s123, 1
    %p127 = scmp.eq.s32.totalorder %s12, 3
    %p128 = scmp.ne.s32.totalorder %s123, %s125
    %p129 = scmp.eq.s32.totalorder %s12, 0
    %p130 = por %p128, %p129
    %p131 = scmp.ne.s32.totalorder %s123, %s125
    %p132 = scmp.eq.s32.totalorder %s17, 3
    %p133 = por %p131, %p132
    %p134 = scmp.ne.s32.totalorder %s125, %s126
    %p135 = scmp.eq.s32.totalorder %s17, 0
    %p136 = por %p134, %p135
    %p137 = scmp.ne.s32.totalorder %s125, %s126
    %p138 = scmp.eq.s32.totalorder %s18, 3
    %p139 = por %p137, %p138
    %p141 = scmp.ne.s32.totalorder %s126, %s140
    %p142 = scmp.eq.s32.totalorder %s18, 0
    %p143 = por %p141, %p142
    %s145 = sadd.s32 %s144, 1
    %p148 = scmp.eq.s32.totalorder %s12, 3
    %p149 = scmp.ne.s32.totalorder %s144, %s146
    %p150 = scmp.eq.s32.totalorder %s12, 0
    %p151 = por %p149, %p150
    %p152 = scmp.ne.s32.totalorder %s144, %s146
    %p153 = scmp.eq.s32.totalorder %s17, 3
    %p154 = por %p152, %p153
    %p155 = scmp.ne.s32.totalorder %s146, %s147
    %p156 = scmp.eq.s32.totalorder %s17, 0
    %p157 = por %p155, %p156
    %p158 = scmp.ne.s32.totalorder %s146, %s147
    %p159 = scmp.eq.s32.totalorder %s18, 3
    %p160 = por %p158, %p159
    %p162 = scmp.ne.s32.totalorder %s147, %s161
    %p163 = scmp.eq.s32.totalorder %s18, 0
    %p164 = por %p162, %p163
    %s165 = ssub.s32 %s19, %s31
    %p166 = scmp.eq.s32.totalorder %s165, 0
    %s168 = sadd.s32 %s167, 1
    %s169 = scalar_select %p166, %s167, %s168
    %p172 = pneg %p166
    %p173 = scmp.eq.s32.totalorder %s12, 3
    %p174 = por %p172, %p173
    %p175 = scmp.ne.s32.totalorder %s167, %s170
    %p176 = scmp.eq.s32.totalorder %s12, 0
    %p177 = por %p175, %p176
    %p178 = scmp.ne.s32.totalorder %s167, %s170
    %p179 = scmp.eq.s32.totalorder %s17, 3
    %p180 = por %p178, %p179
    %p181 = scmp.ne.s32.totalorder %s170, %s171
    %p182 = scmp.eq.s32.totalorder %s17, 0
    %p183 = por %p181, %p182
    %p184 = scmp.ne.s32.totalorder %s170, %s171
    %p185 = scmp.eq.s32.totalorder %s18, 3
    %p186 = por %p184, %p185
    %p188 = scmp.ne.s32.totalorder %s171, %s187
    %p189 = scmp.eq.s32.totalorder %s18, 0
    %p190 = por %p188, %p189
    %p191 = scmp.le.s32.totalorder 1, %s12
    %p192 = scmp.lt.s32.totalorder %s12, 5
    %p193 = pnand %p191, %p192
    %p194 = pneg %p193
    // Predicated region
    $region9: #{resnext_weighted_head.1} parent=5 // pred_check
      _
    $region10: #{resnext_weighted_head.1} parent=5 // pred_check_branch
      %196 = sbr.rel (%p193) target = $region12
    $region11: #{resnext_weighted_head.1} parent=5 // pred_region
      %s197 = ssub.s32 %s12, 1
      // Predicated region
      $region13: #{resnext_weighted_head.1} parent=11 // pred_check
        %p198 = pneg %p73
      $region14: #{resnext_weighted_head.1} parent=11 // pred_check_branch
        %200 = sbr.rel (%p198) target = $region16
      $region15: #{resnext_weighted_head.1} parent=11 // pred_region
        _
      $region16: #{resnext_weighted_head.1} parent=11 // pred_fallthru
        _
      // Predicated region
      $region17: #{resnext_weighted_head.1} parent=11 // pred_check
        %p201 = pneg %p94
      $region18: #{resnext_weighted_head.1} parent=11 // pred_check_branch
        %203 = sbr.rel (%p201) target = $region20
      $region19: #{resnext_weighted_head.1} parent=11 // pred_region
        _
      $region20: #{resnext_weighted_head.1} parent=11 // pred_fallthru
        _
      // Predicated region
      $region21: #{resnext_weighted_head.1} parent=11 // pred_check
        %p204 = pneg %p115
      $region22: #{resnext_weighted_head.1} parent=11 // pred_check_branch
        %206 = sbr.rel (%p204) target = $region24
      $region23: #{resnext_weighted_head.1} parent=11 // pred_region
        _
      $region24: #{resnext_weighted_head.1} parent=11 // pred_fallthru
        _
      // Predicated region
      $region25: #{resnext_weighted_head.1} parent=11 // pred_check
        %p207 = pneg %p136
      $region26: #{resnext_weighted_head.1} parent=11 // pred_check_branch
        %209 = sbr.rel (%p207) target = $region28
      $region27: #{resnext_weighted_head.1} parent=11 // pred_region
        _
      $region28: #{resnext_weighted_head.1} parent=11 // pred_fallthru
        _
      // Predicated region
      $region29: #{resnext_weighted_head.1} parent=11 // pred_check
        %p210 = pneg %p157
      $region30: #{resnext_weighted_head.1} parent=11 // pred_check_branch
        %212 = sbr.rel (%p210) target = $region32
      $region31: #{resnext_weighted_head.1} parent=11 // pred_region
        _
      $region32: #{resnext_weighted_head.1} parent=11 // pred_fallthru
        _
    $region12: #{resnext_weighted_head.1} parent=5 // pred_fallthru
      _
    %p213 = scmp.lt.s32.totalorder %s12, 4
    // Predicated region
    $region33: #{resnext_weighted_head.1} parent=5 // pred_check
      %p214 = pneg %p213
    $region34: #{resnext_weighted_head.1} parent=5 // pred_check_branch
      %216 = sbr.rel (%p214) target = $region36
    $region35: #{resnext_weighted_head.1} parent=5 // pred_region
      // Predicated region
      $region37: #{resnext_weighted_head.1} parent=35 // pred_check
        %p217 = pneg %p46
      $region38: #{resnext_weighted_head.1} parent=35 // pred_check_branch
        %219 = sbr.rel (%p217) target = $region40
      $region39: #{resnext_weighted_head.1} parent=35 // pred_region
        %s220 = smul.u32 8, %s19
        %s221 = smul.u32 32, %s20
        %p222 = scmp.lt.s32.totalorder %s220, 31
        %s223 = scalar_select %p222, %s220, 31
        %p224 = scmp.lt.s32.totalorder %s221, 31
        %s225 = scalar_select %p224, %s221, 31
        %s226 = smul.addr %s223, 32
        %s227 = sadd.s32 %s225, %s226
        %s228 = smul.addr %s227, 8
        %s229 = scalar_lea.vmem %s0, %s228
        %s230 = smul.u32 8, %s19
        %s231 = smul.u32 32, %s20
      $region40: #{resnext_weighted_head.1} parent=35 // pred_fallthru
        _
    $region36: #{resnext_weighted_head.1} parent=5 // pred_fallthru
      _
    %p232 = scmp.le.s32.totalorder 1, %s12
    %p233 = scmp.lt.s32.totalorder %s12, 5
    %p234 = pnand %p232, %p233
    %p235 = pneg %p234
    // Predicated region
    $region41: #{resnext_weighted_head.1} parent=5 // pred_check
      _
    $region42: #{resnext_weighted_head.1} parent=5 // pred_check_branch
      %237 = sbr.rel (%p234) target = $region44
    $region43: #{resnext_weighted_head.1} parent=5 // pred_region
      %s238 = ssub.s32 %s12, 1
      %s239 = smul.u32 8, %s21
      %s240 = smul.u32 32, %s22
      %p241 = scmp.lt.s32.totalorder %s239, 31
      %s242 = scalar_select %p241, %s239, 31
      %p243 = scmp.lt.s32.totalorder %s240, 31
      %s244 = scalar_select %p243, %s240, 31
      %s245 = smul.addr %s242, 32
      %s246 = sadd.s32 %s244, %s245
      %s247 = smul.addr %s246, 8
      %s248 = scalar_lea.vmem %s0, %s247
      %p249 = pneg %p52
      %p250 = pneg %p49
      %p251 = pneg %p73
      %p252 = pneg %p70
      %p253 = pneg %p94
      %p254 = pneg %p91
      %p255 = pneg %p115
      %p256 = pneg %p112
      %p257 = pneg %p136
      %p258 = pneg %p133
      %p259 = pneg %p157
      %p260 = pneg %p154
      %p261 = pneg %p183
      %p262 = pneg %p180
      %p263 = scmp.lt.s32.totalorder %s21, 3
      %s264 = scalar_select %p263, %s21, 3
      %s265 = smul.addr %s264, 8
      %s266 = scalar_lea.vmem %s6, %s265
      %s267 = smul.u32 8, %s21
      %s268 = smul.u32 32, %s22
      %p269 = scmp.lt.s32.totalorder %s267, 31
      %s270 = scalar_select %p269, %s267, 31
      %p271 = scmp.lt.s32.totalorder %s268, 31
      %s272 = scalar_select %p271, %s268, 31
      %s273 = smul.addr %s270, 32
      %s274 = sadd.s32 %s272, %s273
      %s275 = smul.addr %s274, 8
      %s276 = scalar_lea.vmem %s0, %s275
      %s277 = smul.u32 8, %s21
      %s278 = smul.u32 32, %s22
      %p279 = scmp.lt.s32.totalorder %s21, 3
      %s280 = scalar_select %p279, %s21, 3
      %s281 = smul.addr %s280, 8
      %s282 = scalar_lea.vmem %s6, %s281
      %p284 = scmp.eq.s32.totalorder %s22, 0
      // Predicated region
      $region45: #{resnext_weighted_head.1} parent=43 // pred_check
        %p285 = pneg %p284
      $region46: #{resnext_weighted_head.1} parent=43 // pred_check_branch
        %287 = sbr.rel (%p285) target = $region48
      $region47: #{resnext_weighted_head.1} parent=43 // pred_region
        %288 = vst [vmem:[#allocation2] sm:$0xff] 0.0
      $region48: #{resnext_weighted_head.1} parent=43 // pred_fallthru
        _
      %s289 = smul.u32 %s22, 256
      %s290 = scalar_lea.vmem %s1, %s289
      %v291 = vld [vmem:[%s290] sm:$0xff]
      %v292 = vld [vmem:[%s290 + $0x8] sm:$0xff]
      %v293 = vld [vmem:[%s290 + $0x10] sm:$0xff]
      %v294 = vld [vmem:[%s290 + $0x18] sm:$0xff]
      %v295 = vld [vmem:[%s290 + $0x20] sm:$0xff]
      %v296 = vld [vmem:[%s290 + $0x28] sm:$0xff]
      %v297 = vld [vmem:[%s290 + $0x30] sm:$0xff]
      %v298 = vld [vmem:[%s290 + $0x38] sm:$0xff]
      %v299 = vld [vmem:[%s290 + $0x40] sm:$0xff]
      %v300 = vld [vmem:[%s290 + $0x48] sm:$0xff]
      %v301 = vld [vmem:[%s290 + $0x50] sm:$0xff]
      %v302 = vld [vmem:[%s290 + $0x58] sm:$0xff]
      %v303 = vld [vmem:[%s290 + $0x60] sm:$0xff]
      %v304 = vld [vmem:[%s290 + $0x68] sm:$0xff]
      %v305 = vld [vmem:[%s290 + $0x70] sm:$0xff]
      %v306 = vld [vmem:[%s290 + $0x78] sm:$0xff]
      %v307 = vld [vmem:[%s290 + $0x80] sm:$0xff]
      %v308 = vld [vmem:[%s290 + $0x88] sm:$0xff]
      %v309 = vld [vmem:[%s290 + $0x90] sm:$0xff]
      %v310 = vld [vmem:[%s290 + $0x98] sm:$0xff]
      %v311 = vld [vmem:[%s290 + $0xa0] sm:$0xff]
      %v312 = vld [vmem:[%s290 + $0xa8] sm:$0xff]
      %v313 = vld [vmem:[%s290 + $0xb0] sm:$0xff]
      %v314 = vld [vmem:[%s290 + $0xb8] sm:$0xff]
      %v315 = vld [vmem:[%s290 + $0xc0] sm:$0xff]
      %v316 = vld [vmem:[%s290 + $0xc8] sm:$0xff]
      %v317 = vld [vmem:[%s290 + $0xd0] sm:$0xff]
      %v318 = vld [vmem:[%s290 + $0xd8] sm:$0xff]
      %v319 = vld [vmem:[%s290 + $0xe0] sm:$0xff]
      %v320 = vld [vmem:[%s290 + $0xe8] sm:$0xff]
      %v321 = vld [vmem:[%s290 + $0xf0] sm:$0xff]
      %v322 = vld [vmem:[%s290 + $0xf8] sm:$0xff]
      %v323 = vld [vmem:[%s276] sm:$0xff]
      %v324 = vld [vmem:[%s276 + $0x8] sm:$0xff]
      %v325 = vld [vmem:[%s276 + $0x10] sm:$0xff]
      %v326 = vld [vmem:[%s276 + $0x18] sm:$0xff]
      %v327 = vld [vmem:[%s276 + $0x20] sm:$0xff]
      %v328 = vld [vmem:[%s276 + $0x28] sm:$0xff]
      %v329 = vld [vmem:[%s276 + $0x30] sm:$0xff]
      %v330 = vld [vmem:[%s276 + $0x38] sm:$0xff]
      %v331 = vld [vmem:[%s276 + $0x40] sm:$0xff]
      %v332 = vld [vmem:[%s276 + $0x48] sm:$0xff]
      %v333 = vld [vmem:[%s276 + $0x50] sm:$0xff]
      %v334 = vld [vmem:[%s276 + $0x58] sm:$0xff]
      %v335 = vld [vmem:[%s276 + $0x60] sm:$0xff]
      %v336 = vld [vmem:[%s276 + $0x68] sm:$0xff]
      %v337 = vld [vmem:[%s276 + $0x70] sm:$0xff]
      %v338 = vld [vmem:[%s276 + $0x78] sm:$0xff]
      %v339 = vld [vmem:[%s276 + $0x80] sm:$0xff]
      %v340 = vld [vmem:[%s276 + $0x88] sm:$0xff]
      %v341 = vld [vmem:[%s276 + $0x90] sm:$0xff]
      %v342 = vld [vmem:[%s276 + $0x98] sm:$0xff]
      %v343 = vld [vmem:[%s276 + $0xa0] sm:$0xff]
      %v344 = vld [vmem:[%s276 + $0xa8] sm:$0xff]
      %v345 = vld [vmem:[%s276 + $0xb0] sm:$0xff]
      %v346 = vld [vmem:[%s276 + $0xb8] sm:$0xff]
      %v347 = vld [vmem:[%s276 + $0xc0] sm:$0xff]
      %v348 = vld [vmem:[%s276 + $0xc8] sm:$0xff]
      %v349 = vld [vmem:[%s276 + $0xd0] sm:$0xff]
      %v350 = vld [vmem:[%s276 + $0xd8] sm:$0xff]
      %v351 = vld [vmem:[%s276 + $0xe0] sm:$0xff]
      %v352 = vld [vmem:[%s276 + $0xe8] sm:$0xff]
      %v353 = vld [vmem:[%s276 + $0xf0] sm:$0xff]
      %v354 = vld [vmem:[%s276 + $0xf8] sm:$0xff]
      %v355 = vld [vmem:[%s276 + $0x100] sm:$0xff]
      %v356 = vld [vmem:[%s276 + $0x108] sm:$0xff]
      %v357 = vld [vmem:[%s276 + $0x110] sm:$0xff]
      %v358 = vld [vmem:[%s276 + $0x118] sm:$0xff]
      %v359 = vld [vmem:[%s276 + $0x120] sm:$0xff]
      %v360 = vld [vmem:[%s276 + $0x128] sm:$0xff]
      %v361 = vld [vmem:[%s276 + $0x130] sm:$0xff]
      %v362 = vld [vmem:[%s276 + $0x138] sm:$0xff]
      %v363 = vld [vmem:[%s276 + $0x140] sm:$0xff]
      %v364 = vld [vmem:[%s276 + $0x148] sm:$0xff]
      %v365 = vld [vmem:[%s276 + $0x150] sm:$0xff]
      %v366 = vld [vmem:[%s276 + $0x158] sm:$0xff]
      %v367 = vld [vmem:[%s276 + $0x160] sm:$0xff]
      %v368 = vld [vmem:[%s276 + $0x168] sm:$0xff]
      %v369 = vld [vmem:[%s276 + $0x170] sm:$0xff]
      %v370 = vld [vmem:[%s276 + $0x178] sm:$0xff]
      %v371 = vld [vmem:[%s276 + $0x180] sm:$0xff]
      %v372 = vld [vmem:[%s276 + $0x188] sm:$0xff]
      %v373 = vld [vmem:[%s276 + $0x190] sm:$0xff]
      %v374 = vld [vmem:[%s276 + $0x198] sm:$0xff]
      %v375 = vld [vmem:[%s276 + $0x1a0] sm:$0xff]
      %v376 = vld [vmem:[%s276 + $0x1a8] sm:$0xff]
      %v377 = vld [vmem:[%s276 + $0x1b0] sm:$0xff]
      %v378 = vld [vmem:[%s276 + $0x1b8] sm:$0xff]
      %v379 = vld [vmem:[%s276 + $0x1c0] sm:$0xff]
      %v380 = vld [vmem:[%s276 + $0x1c8] sm:$0xff]
      %v381 = vld [vmem:[%s276 + $0x1d0] sm:$0xff]
      %v382 = vld [vmem:[%s276 + $0x1d8] sm:$0xff]
      %v383 = vld [vmem:[%s276 + $0x1e0] sm:$0xff]
      %v384 = vld [vmem:[%s276 + $0x1e8] sm:$0xff]
      %v385 = vld [vmem:[%s276 + $0x1f0] sm:$0xff]
      %v386 = vld [vmem:[%s276 + $0x1f8] sm:$0xff]
      %v387 = vld [vmem:[%s276 + $0x200] sm:$0xff]
      %v388 = vld [vmem:[%s276 + $0x208] sm:$0xff]
      %v389 = vld [vmem:[%s276 + $0x210] sm:$0xff]
      %v390 = vld [vmem:[%s276 + $0x218] sm:$0xff]
      %v391 = vld [vmem:[%s276 + $0x220] sm:$0xff]
      %v392 = vld [vmem:[%s276 + $0x228] sm:$0xff]
      %v393 = vld [vmem:[%s276 + $0x230] sm:$0xff]
      %v394 = vld [vmem:[%s276 + $0x238] sm:$0xff]
      %v395 = vld [vmem:[%s276 + $0x240] sm:$0xff]
      %v396 = vld [vmem:[%s276 + $0x248] sm:$0xff]
      %v397 = vld [vmem:[%s276 + $0x250] sm:$0xff]
      %v398 = vld [vmem:[%s276 + $0x258] sm:$0xff]
      %v399 = vld [vmem:[%s276 + $0x260] sm:$0xff]
      %v400 = vld [vmem:[%s276 + $0x268] sm:$0xff]
      %v401 = vld [vmem:[%s276 + $0x270] sm:$0xff]
      %v402 = vld [vmem:[%s276 + $0x278] sm:$0xff]
      %v403 = vld [vmem:[%s276 + $0x280] sm:$0xff]
      %v404 = vld [vmem:[%s276 + $0x288] sm:$0xff]
      %v405 = vld [vmem:[%s276 + $0x290] sm:$0xff]
      %v406 = vld [vmem:[%s276 + $0x298] sm:$0xff]
      %v407 = vld [vmem:[%s276 + $0x2a0] sm:$0xff]
      %v408 = vld [vmem:[%s276 + $0x2a8] sm:$0xff]
      %v409 = vld [vmem:[%s276 + $0x2b0] sm:$0xff]
      %v410 = vld [vmem:[%s276 + $0x2b8] sm:$0xff]
      %v411 = vld [vmem:[%s276 + $0x2c0] sm:$0xff]
      %v412 = vld [vmem:[%s276 + $0x2c8] sm:$0xff]
      %v413 = vld [vmem:[%s276 + $0x2d0] sm:$0xff]
      %v414 = vld [vmem:[%s276 + $0x2d8] sm:$0xff]
      %v415 = vld [vmem:[%s276 + $0x2e0] sm:$0xff]
      %v416 = vld [vmem:[%s276 + $0x2e8] sm:$0xff]
      %v417 = vld [vmem:[%s276 + $0x2f0] sm:$0xff]
      %v418 = vld [vmem:[%s276 + $0x2f8] sm:$0xff]
      %v419 = vld [vmem:[%s276 + $0x300] sm:$0xff]
      %v420 = vld [vmem:[%s276 + $0x308] sm:$0xff]
      %v421 = vld [vmem:[%s276 + $0x310] sm:$0xff]
      %v422 = vld [vmem:[%s276 + $0x318] sm:$0xff]
      %v423 = vld [vmem:[%s276 + $0x320] sm:$0xff]
      %v424 = vld [vmem:[%s276 + $0x328] sm:$0xff]
      %v425 = vld [vmem:[%s276 + $0x330] sm:$0xff]
      %v426 = vld [vmem:[%s276 + $0x338] sm:$0xff]
      %v427 = vld [vmem:[%s276 + $0x340] sm:$0xff]
      %v428 = vld [vmem:[%s276 + $0x348] sm:$0xff]
      %v429 = vld [vmem:[%s276 + $0x350] sm:$0xff]
      %v430 = vld [vmem:[%s276 + $0x358] sm:$0xff]
      %v431 = vld [vmem:[%s276 + $0x360] sm:$0xff]
      %v432 = vld [vmem:[%s276 + $0x368] sm:$0xff]
      %v433 = vld [vmem:[%s276 + $0x370] sm:$0xff]
      %v434 = vld [vmem:[%s276 + $0x378] sm:$0xff]
      %v435 = vld [vmem:[%s276 + $0x380] sm:$0xff]
      %v436 = vld [vmem:[%s276 + $0x388] sm:$0xff]
      %v437 = vld [vmem:[%s276 + $0x390] sm:$0xff]
      %v438 = vld [vmem:[%s276 + $0x398] sm:$0xff]
      %v439 = vld [vmem:[%s276 + $0x3a0] sm:$0xff]
      %v440 = vld [vmem:[%s276 + $0x3a8] sm:$0xff]
      %v441 = vld [vmem:[%s276 + $0x3b0] sm:$0xff]
      %v442 = vld [vmem:[%s276 + $0x3b8] sm:$0xff]
      %v443 = vld [vmem:[%s276 + $0x3c0] sm:$0xff]
      %v444 = vld [vmem:[%s276 + $0x3c8] sm:$0xff]
      %v445 = vld [vmem:[%s276 + $0x3d0] sm:$0xff]
      %v446 = vld [vmem:[%s276 + $0x3d8] sm:$0xff]
      %v447 = vld [vmem:[%s276 + $0x3e0] sm:$0xff]
      %v448 = vld [vmem:[%s276 + $0x3e8] sm:$0xff]
      %v449 = vld [vmem:[%s276 + $0x3f0] sm:$0xff]
      %v450 = vld [vmem:[%s276 + $0x3f8] sm:$0xff]
      %v451 = vld [vmem:[%s276 + $0x400] sm:$0xff]
      %v452 = vld [vmem:[%s276 + $0x408] sm:$0xff]
      %v453 = vld [vmem:[%s276 + $0x410] sm:$0xff]
      %v454 = vld [vmem:[%s276 + $0x418] sm:$0xff]
      %v455 = vld [vmem:[%s276 + $0x420] sm:$0xff]
      %v456 = vld [vmem:[%s276 + $0x428] sm:$0xff]
      %v457 = vld [vmem:[%s276 + $0x430] sm:$0xff]
      %v458 = vld [vmem:[%s276 + $0x438] sm:$0xff]
      %v459 = vld [vmem:[%s276 + $0x440] sm:$0xff]
      %v460 = vld [vmem:[%s276 + $0x448] sm:$0xff]
      %v461 = vld [vmem:[%s276 + $0x450] sm:$0xff]
      %v462 = vld [vmem:[%s276 + $0x458] sm:$0xff]
      %v463 = vld [vmem:[%s276 + $0x460] sm:$0xff]
      %v464 = vld [vmem:[%s276 + $0x468] sm:$0xff]
      %v465 = vld [vmem:[%s276 + $0x470] sm:$0xff]
      %v466 = vld [vmem:[%s276 + $0x478] sm:$0xff]
      %v467 = vld [vmem:[%s276 + $0x480] sm:$0xff]
      %v468 = vld [vmem:[%s276 + $0x488] sm:$0xff]
      %v469 = vld [vmem:[%s276 + $0x490] sm:$0xff]
      %v470 = vld [vmem:[%s276 + $0x498] sm:$0xff]
      %v471 = vld [vmem:[%s276 + $0x4a0] sm:$0xff]
      %v472 = vld [vmem:[%s276 + $0x4a8] sm:$0xff]
      %v473 = vld [vmem:[%s276 + $0x4b0] sm:$0xff]
      %v474 = vld [vmem:[%s276 + $0x4b8] sm:$0xff]
      %v475 = vld [vmem:[%s276 + $0x4c0] sm:$0xff]
      %v476 = vld [vmem:[%s276 + $0x4c8] sm:$0xff]
      %v477 = vld [vmem:[%s276 + $0x4d0] sm:$0xff]
      %v478 = vld [vmem:[%s276 + $0x4d8] sm:$0xff]
      %v479 = vld [vmem:[%s276 + $0x4e0] sm:$0xff]
      %v480 = vld [vmem:[%s276 + $0x4e8] sm:$0xff]
      %v481 = vld [vmem:[%s276 + $0x4f0] sm:$0xff]
      %v482 = vld [vmem:[%s276 + $0x4f8] sm:$0xff]
      %v483 = vld [vmem:[%s276 + $0x500] sm:$0xff]
      %v484 = vld [vmem:[%s276 + $0x508] sm:$0xff]
      %v485 = vld [vmem:[%s276 + $0x510] sm:$0xff]
      %v486 = vld [vmem:[%s276 + $0x518] sm:$0xff]
      %v487 = vld [vmem:[%s276 + $0x520] sm:$0xff]
      %v488 = vld [vmem:[%s276 + $0x528] sm:$0xff]
      %v489 = vld [vmem:[%s276 + $0x530] sm:$0xff]
      %v490 = vld [vmem:[%s276 + $0x538] sm:$0xff]
      %v491 = vld [vmem:[%s276 + $0x540] sm:$0xff]
      %v492 = vld [vmem:[%s276 + $0x548] sm:$0xff]
      %v493 = vld [vmem:[%s276 + $0x550] sm:$0xff]
      %v494 = vld [vmem:[%s276 + $0x558] sm:$0xff]
      %v495 = vld [vmem:[%s276 + $0x560] sm:$0xff]
      %v496 = vld [vmem:[%s276 + $0x568] sm:$0xff]
      %v497 = vld [vmem:[%s276 + $0x570] sm:$0xff]
      %v498 = vld [vmem:[%s276 + $0x578] sm:$0xff]
      %v499 = vld [vmem:[%s276 + $0x580] sm:$0xff]
      %v500 = vld [vmem:[%s276 + $0x588] sm:$0xff]
      %v501 = vld [vmem:[%s276 + $0x590] sm:$0xff]
      %v502 = vld [vmem:[%s276 + $0x598] sm:$0xff]
      %v503 = vld [vmem:[%s276 + $0x5a0] sm:$0xff]
      %v504 = vld [vmem:[%s276 + $0x5a8] sm:$0xff]
      %v505 = vld [vmem:[%s276 + $0x5b0] sm:$0xff]
      %v506 = vld [vmem:[%s276 + $0x5b8] sm:$0xff]
      %v507 = vld [vmem:[%s276 + $0x5c0] sm:$0xff]
      %v508 = vld [vmem:[%s276 + $0x5c8] sm:$0xff]
      %v509 = vld [vmem:[%s276 + $0x5d0] sm:$0xff]
      %v510 = vld [vmem:[%s276 + $0x5d8] sm:$0xff]
      %v511 = vld [vmem:[%s276 + $0x5e0] sm:$0xff]
      %v512 = vld [vmem:[%s276 + $0x5e8] sm:$0xff]
      %v513 = vld [vmem:[%s276 + $0x5f0] sm:$0xff]
      %v514 = vld [vmem:[%s276 + $0x5f8] sm:$0xff]
      %v515 = vld [vmem:[%s276 + $0x600] sm:$0xff]
      %v516 = vld [vmem:[%s276 + $0x608] sm:$0xff]
      %v517 = vld [vmem:[%s276 + $0x610] sm:$0xff]
      %v518 = vld [vmem:[%s276 + $0x618] sm:$0xff]
      %v519 = vld [vmem:[%s276 + $0x620] sm:$0xff]
      %v520 = vld [vmem:[%s276 + $0x628] sm:$0xff]
      %v521 = vld [vmem:[%s276 + $0x630] sm:$0xff]
      %v522 = vld [vmem:[%s276 + $0x638] sm:$0xff]
      %v523 = vld [vmem:[%s276 + $0x640] sm:$0xff]
      %v524 = vld [vmem:[%s276 + $0x648] sm:$0xff]
      %v525 = vld [vmem:[%s276 + $0x650] sm:$0xff]
      %v526 = vld [vmem:[%s276 + $0x658] sm:$0xff]
      %v527 = vld [vmem:[%s276 + $0x660] sm:$0xff]
      %v528 = vld [vmem:[%s276 + $0x668] sm:$0xff]
      %v529 = vld [vmem:[%s276 + $0x670] sm:$0xff]
      %v530 = vld [vmem:[%s276 + $0x678] sm:$0xff]
      %v531 = vld [vmem:[%s276 + $0x680] sm:$0xff]
      %v532 = vld [vmem:[%s276 + $0x688] sm:$0xff]
      %v533 = vld [vmem:[%s276 + $0x690] sm:$0xff]
      %v534 = vld [vmem:[%s276 + $0x698] sm:$0xff]
      %v535 = vld [vmem:[%s276 + $0x6a0] sm:$0xff]
      %v536 = vld [vmem:[%s276 + $0x6a8] sm:$0xff]
      %v537 = vld [vmem:[%s276 + $0x6b0] sm:$0xff]
      %v538 = vld [vmem:[%s276 + $0x6b8] sm:$0xff]
      %v539 = vld [vmem:[%s276 + $0x6c0] sm:$0xff]
      %v540 = vld [vmem:[%s276 + $0x6c8] sm:$0xff]
      %v541 = vld [vmem:[%s276 + $0x6d0] sm:$0xff]
      %v542 = vld [vmem:[%s276 + $0x6d8] sm:$0xff]
      %v543 = vld [vmem:[%s276 + $0x6e0] sm:$0xff]
      %v544 = vld [vmem:[%s276 + $0x6e8] sm:$0xff]
      %v545 = vld [vmem:[%s276 + $0x6f0] sm:$0xff]
      %v546 = vld [vmem:[%s276 + $0x6f8] sm:$0xff]
      %v547 = vld [vmem:[%s276 + $0x700] sm:$0xff]
      %v548 = vld [vmem:[%s276 + $0x708] sm:$0xff]
      %v549 = vld [vmem:[%s276 + $0x710] sm:$0xff]
      %v550 = vld [vmem:[%s276 + $0x718] sm:$0xff]
      %v551 = vld [vmem:[%s276 + $0x720] sm:$0xff]
      %v552 = vld [vmem:[%s276 + $0x728] sm:$0xff]
      %v553 = vld [vmem:[%s276 + $0x730] sm:$0xff]
      %v554 = vld [vmem:[%s276 + $0x738] sm:$0xff]
      %v555 = vld [vmem:[%s276 + $0x740] sm:$0xff]
      %v556 = vld [vmem:[%s276 + $0x748] sm:$0xff]
      %v557 = vld [vmem:[%s276 + $0x750] sm:$0xff]
      %v558 = vld [vmem:[%s276 + $0x758] sm:$0xff]
      %v559 = vld [vmem:[%s276 + $0x760] sm:$0xff]
      %v560 = vld [vmem:[%s276 + $0x768] sm:$0xff]
      %v561 = vld [vmem:[%s276 + $0x770] sm:$0xff]
      %v562 = vld [vmem:[%s276 + $0x778] sm:$0xff]
      %v563 = vld [vmem:[%s276 + $0x780] sm:$0xff]
      %v564 = vld [vmem:[%s276 + $0x788] sm:$0xff]
      %v565 = vld [vmem:[%s276 + $0x790] sm:$0xff]
      %v566 = vld [vmem:[%s276 + $0x798] sm:$0xff]
      %v567 = vld [vmem:[%s276 + $0x7a0] sm:$0xff]
      %v568 = vld [vmem:[%s276 + $0x7a8] sm:$0xff]
      %v569 = vld [vmem:[%s276 + $0x7b0] sm:$0xff]
      %v570 = vld [vmem:[%s276 + $0x7b8] sm:$0xff]
      %v571 = vld [vmem:[%s276 + $0x7c0] sm:$0xff]
      %v572 = vld [vmem:[%s276 + $0x7c8] sm:$0xff]
      %v573 = vld [vmem:[%s276 + $0x7d0] sm:$0xff]
      %v574 = vld [vmem:[%s276 + $0x7d8] sm:$0xff]
      %v575 = vld [vmem:[%s276 + $0x7e0] sm:$0xff]
      %v576 = vld [vmem:[%s276 + $0x7e8] sm:$0xff]
      %v577 = vld [vmem:[%s276 + $0x7f0] sm:$0xff]
      %v578 = vld [vmem:[%s276 + $0x7f8] sm:$0xff]
      %v579 = vmul.f32 %v323, %v291
      %v580 = vmul.f32 %v324, %v292
      %v581 = vmul.f32 %v325, %v293
      %v582 = vmul.f32 %v326, %v294
      %v583 = vmul.f32 %v327, %v295
      %v584 = vmul.f32 %v328, %v296
      %v585 = vmul.f32 %v329, %v297
      %v586 = vmul.f32 %v330, %v298
      %v587 = vmul.f32 %v331, %v299
      %v588 = vmul.f32 %v332, %v300
      %v589 = vmul.f32 %v333, %v301
      %v590 = vmul.f32 %v334, %v302
      %v591 = vmul.f32 %v335, %v303
      %v592 = vmul.f32 %v336, %v304
      %v593 = vmul.f32 %v337, %v305
      %v594 = vmul.f32 %v338, %v306
      %v595 = vmul.f32 %v339, %v307
      %v596 = vmul.f32 %v340, %v308
      %v597 = vmul.f32 %v341, %v309
      %v598 = vmul.f32 %v342, %v310
      %v599 = vmul.f32 %v343, %v311
      %v600 = vmul.f32 %v344, %v312
      %v601 = vmul.f32 %v345, %v313
      %v602 = vmul.f32 %v346, %v314
      %v603 = vmul.f32 %v347, %v315
      %v604 = vmul.f32 %v348, %v316
      %v605 = vmul.f32 %v349, %v317
      %v606 = vmul.f32 %v350, %v318
      %v607 = vmul.f32 %v351, %v319
      %v608 = vmul.f32 %v352, %v320
      %v609 = vmul.f32 %v353, %v321
      %v610 = vmul.f32 %v354, %v322
      %v611 = vmul.f32 %v355, %v291
      %v612 = vmul.f32 %v356, %v292
      %v613 = vmul.f32 %v357, %v293
      %v614 = vmul.f32 %v358, %v294
      %v615 = vmul.f32 %v359, %v295
      %v616 = vmul.f32 %v360, %v296
      %v617 = vmul.f32 %v361, %v297
      %v618 = vmul.f32 %v362, %v298
      %v619 = vmul.f32 %v363, %v299
      %v620 = vmul.f32 %v364, %v300
      %v621 = vmul.f32 %v365, %v301
      %v622 = vmul.f32 %v366, %v302
      %v623 = vmul.f32 %v367, %v303
      %v624 = vmul.f32 %v368, %v304
      %v625 = vmul.f32 %v369, %v305
      %v626 = vmul.f32 %v370, %v306
      %v627 = vmul.f32 %v371, %v307
      %v628 = vmul.f32 %v372, %v308
      %v629 = vmul.f32 %v373, %v309
      %v630 = vmul.f32 %v374, %v310
      %v631 = vmul.f32 %v375, %v311
      %v632 = vmul.f32 %v376, %v312
      %v633 = vmul.f32 %v377, %v313
      %v634 = vmul.f32 %v378, %v314
      %v635 = vmul.f32 %v379, %v315
      %v636 = vmul.f32 %v380, %v316
      %v637 = vmul.f32 %v381, %v317
      %v638 = vmul.f32 %v382, %v318
      %v639 = vmul.f32 %v383, %v319
      %v640 = vmul.f32 %v384, %v320
      %v641 = vmul.f32 %v385, %v321
      %v642 = vmul.f32 %v386, %v322
      %v643 = vmul.f32 %v387, %v291
      %v644 = vmul.f32 %v388, %v292
      %v645 = vmul.f32 %v389, %v293
      %v646 = vmul.f32 %v390, %v294
      %v647 = vmul.f32 %v391, %v295
      %v648 = vmul.f32 %v392, %v296
      %v649 = vmul.f32 %v393, %v297
      %v650 = vmul.f32 %v394, %v298
      %v651 = vmul.f32 %v395, %v299
      %v652 = vmul.f32 %v396, %v300
      %v653 = vmul.f32 %v397, %v301
      %v654 = vmul.f32 %v398, %v302
      %v655 = vmul.f32 %v399, %v303
      %v656 = vmul.f32 %v400, %v304
      %v657 = vmul.f32 %v401, %v305
      %v658 = vmul.f32 %v402, %v306
      %v659 = vmul.f32 %v403, %v307
      %v660 = vmul.f32 %v404, %v308
      %v661 = vmul.f32 %v405, %v309
      %v662 = vmul.f32 %v406, %v310
      %v663 = vmul.f32 %v407, %v311
      %v664 = vmul.f32 %v408, %v312
      %v665 = vmul.f32 %v409, %v313
      %v666 = vmul.f32 %v410, %v314
      %v667 = vmul.f32 %v411, %v315
      %v668 = vmul.f32 %v412, %v316
      %v669 = vmul.f32 %v413, %v317
      %v670 = vmul.f32 %v414, %v318
      %v671 = vmul.f32 %v415, %v319
      %v672 = vmul.f32 %v416, %v320
      %v673 = vmul.f32 %v417, %v321
      %v674 = vmul.f32 %v418, %v322
      %v675 = vmul.f32 %v419, %v291
      %v676 = vmul.f32 %v420, %v292
      %v677 = vmul.f32 %v421, %v293
      %v678 = vmul.f32 %v422, %v294
      %v679 = vmul.f32 %v423, %v295
      %v680 = vmul.f32 %v424, %v296
      %v681 = vmul.f32 %v425, %v297
      %v682 = vmul.f32 %v426, %v298
      %v683 = vmul.f32 %v427, %v299
      %v684 = vmul.f32 %v428, %v300
      %v685 = vmul.f32 %v429, %v301
      %v686 = vmul.f32 %v430, %v302
      %v687 = vmul.f32 %v431, %v303
      %v688 = vmul.f32 %v432, %v304
      %v689 = vmul.f32 %v433, %v305
      %v690 = vmul.f32 %v434, %v306
      %v691 = vmul.f32 %v435, %v307
      %v692 = vmul.f32 %v436, %v308
      %v693 = vmul.f32 %v437, %v309
      %v694 = vmul.f32 %v438, %v310
      %v695 = vmul.f32 %v439, %v311
      %v696 = vmul.f32 %v440, %v312
      %v697 = vmul.f32 %v441, %v313
      %v698 = vmul.f32 %v442, %v314
      %v699 = vmul.f32 %v443, %v315
      %v700 = vmul.f32 %v444, %v316
      %v701 = vmul.f32 %v445, %v317
      %v702 = vmul.f32 %v446, %v318
      %v703 = vmul.f32 %v447, %v319
      %v704 = vmul.f32 %v448, %v320
      %v705 = vmul.f32 %v449, %v321
      %v706 = vmul.f32 %v450, %v322
      %v707 = vmul.f32 %v451, %v291
      %v708 = vmul.f32 %v452, %v292
      %v709 = vmul.f32 %v453, %v293
      %v710 = vmul.f32 %v454, %v294
      %v711 = vmul.f32 %v455, %v295
      %v712 = vmul.f32 %v456, %v296
      %v713 = vmul.f32 %v457, %v297
      %v714 = vmul.f32 %v458, %v298
      %v715 = vmul.f32 %v459, %v299
      %v716 = vmul.f32 %v460, %v300
      %v717 = vmul.f32 %v461, %v301
      %v718 = vmul.f32 %v462, %v302
      %v719 = vmul.f32 %v463, %v303
      %v720 = vmul.f32 %v464, %v304
      %v721 = vmul.f32 %v465, %v305
      %v722 = vmul.f32 %v466, %v306
      %v723 = vmul.f32 %v467, %v307
      %v724 = vmul.f32 %v468, %v308
      %v725 = vmul.f32 %v469, %v309
      %v726 = vmul.f32 %v470, %v310
      %v727 = vmul.f32 %v471, %v311
      %v728 = vmul.f32 %v472, %v312
      %v729 = vmul.f32 %v473, %v313
      %v730 = vmul.f32 %v474, %v314
      %v731 = vmul.f32 %v475, %v315
      %v732 = vmul.f32 %v476, %v316
      %v733 = vmul.f32 %v477, %v317
      %v734 = vmul.f32 %v478, %v318
      %v735 = vmul.f32 %v479, %v319
      %v736 = vmul.f32 %v480, %v320
      %v737 = vmul.f32 %v481, %v321
      %v738 = vmul.f32 %v482, %v322
      %v739 = vmul.f32 %v483, %v291
      %v740 = vmul.f32 %v484, %v292
      %v741 = vmul.f32 %v485, %v293
      %v742 = vmul.f32 %v486, %v294
      %v743 = vmul.f32 %v487, %v295
      %v744 = vmul.f32 %v488, %v296
      %v745 = vmul.f32 %v489, %v297
      %v746 = vmul.f32 %v490, %v298
      %v747 = vmul.f32 %v491, %v299
      %v748 = vmul.f32 %v492, %v300
      %v749 = vmul.f32 %v493, %v301
      %v750 = vmul.f32 %v494, %v302
      %v751 = vmul.f32 %v495, %v303
      %v752 = vmul.f32 %v496, %v304
      %v753 = vmul.f32 %v497, %v305
      %v754 = vmul.f32 %v498, %v306
      %v755 = vmul.f32 %v499, %v307
      %v756 = vmul.f32 %v500, %v308
      %v757 = vmul.f32 %v501, %v309
      %v758 = vmul.f32 %v502, %v310
      %v759 = vmul.f32 %v503, %v311
      %v760 = vmul.f32 %v504, %v312
      %v761 = vmul.f32 %v505, %v313
      %v762 = vmul.f32 %v506, %v314
      %v763 = vmul.f32 %v507, %v315
      %v764 = vmul.f32 %v508, %v316
      %v765 = vmul.f32 %v509, %v317
      %v766 = vmul.f32 %v510, %v318
      %v767 = vmul.f32 %v511, %v319
      %v768 = vmul.f32 %v512, %v320
      %v769 = vmul.f32 %v513, %v321
      %v770 = vmul.f32 %v514, %v322
      %v771 = vmul.f32 %v515, %v291
      %v772 = vmul.f32 %v516, %v292
      %v773 = vmul.f32 %v517, %v293
      %v774 = vmul.f32 %v518, %v294
      %v775 = vmul.f32 %v519, %v295
      %v776 = vmul.f32 %v520, %v296
      %v777 = vmul.f32 %v521, %v297
      %v778 = vmul.f32 %v522, %v298
      %v779 = vmul.f32 %v523, %v299
      %v780 = vmul.f32 %v524, %v300
      %v781 = vmul.f32 %v525, %v301
      %v782 = vmul.f32 %v526, %v302
      %v783 = vmul.f32 %v527, %v303
      %v784 = vmul.f32 %v528, %v304
      %v785 = vmul.f32 %v529, %v305
      %v786 = vmul.f32 %v530, %v306
      %v787 = vmul.f32 %v531, %v307
      %v788 = vmul.f32 %v532, %v308
      %v789 = vmul.f32 %v533, %v309
      %v790 = vmul.f32 %v534, %v310
      %v791 = vmul.f32 %v535, %v311
      %v792 = vmul.f32 %v536, %v312
      %v793 = vmul.f32 %v537, %v313
      %v794 = vmul.f32 %v538, %v314
      %v795 = vmul.f32 %v539, %v315
      %v796 = vmul.f32 %v540, %v316
      %v797 = vmul.f32 %v541, %v317
      %v798 = vmul.f32 %v542, %v318
      %v799 = vmul.f32 %v543, %v319
      %v800 = vmul.f32 %v544, %v320
      %v801 = vmul.f32 %v545, %v321
      %v802 = vmul.f32 %v546, %v322
      %v803 = vmul.f32 %v547, %v291
      %v804 = vmul.f32 %v548, %v292
      %v805 = vmul.f32 %v549, %v293
      %v806 = vmul.f32 %v550, %v294
      %v807 = vmul.f32 %v551, %v295
      %v808 = vmul.f32 %v552, %v296
      %v809 = vmul.f32 %v553, %v297
      %v810 = vmul.f32 %v554, %v298
      %v811 = vmul.f32 %v555, %v299
      %v812 = vmul.f32 %v556, %v300
      %v813 = vmul.f32 %v557, %v301
      %v814 = vmul.f32 %v558, %v302
      %v815 = vmul.f32 %v559, %v303
      %v816 = vmul.f32 %v560, %v304
      %v817 = vmul.f32 %v561, %v305
      %v818 = vmul.f32 %v562, %v306
      %v819 = vmul.f32 %v563, %v307
      %v820 = vmul.f32 %v564, %v308
      %v821 = vmul.f32 %v565, %v309
      %v822 = vmul.f32 %v566, %v310
      %v823 = vmul.f32 %v567, %v311
      %v824 = vmul.f32 %v568, %v312
      %v825 = vmul.f32 %v569, %v313
      %v826 = vmul.f32 %v570, %v314
      %v827 = vmul.f32 %v571, %v315
      %v828 = vmul.f32 %v572, %v316
      %v829 = vmul.f32 %v573, %v317
      %v830 = vmul.f32 %v574, %v318
      %v831 = vmul.f32 %v575, %v319
      %v832 = vmul.f32 %v576, %v320
      %v833 = vmul.f32 %v577, %v321
      %v834 = vmul.f32 %v578, %v322
      %vm835 = vcmask 400384
      %v836 = vsel %vm835, %v579, 0.0
      %837 = vadd.xlane.f32.xlu0 %v836
      %v838 = vpop.xlane.xlu0 %837
      %v839 = vsel %vm835, %v580, 0.0
      %840 = vadd.xlane.f32.xlu0 %v839
      %v841 = vpop.xlane.xlu0 %840
      %v842 = vsel %vm835, %v581, 0.0
      %843 = vadd.xlane.f32.xlu0 %v842
      %v844 = vpop.xlane.xlu0 %843
      %v845 = vsel %vm835, %v582, 0.0
      %846 = vadd.xlane.f32.xlu0 %v845
      %v847 = vpop.xlane.xlu0 %846
      %v848 = vsel %vm835, %v583, 0.0
      %849 = vadd.xlane.f32.xlu0 %v848
      %v850 = vpop.xlane.xlu0 %849
      %v851 = vsel %vm835, %v584, 0.0
      %852 = vadd.xlane.f32.xlu0 %v851
      %v853 = vpop.xlane.xlu0 %852
      %v854 = vsel %vm835, %v585, 0.0
      %855 = vadd.xlane.f32.xlu0 %v854
      %v856 = vpop.xlane.xlu0 %855
      %v857 = vsel %vm835, %v586, 0.0
      %858 = vadd.xlane.f32.xlu0 %v857
      %v859 = vpop.xlane.xlu0 %858
      %v860 = vsel %vm835, %v587, 0.0
      %861 = vadd.xlane.f32.xlu0 %v860
      %v862 = vpop.xlane.xlu0 %861
      %v863 = vsel %vm835, %v588, 0.0
      %864 = vadd.xlane.f32.xlu0 %v863
      %v865 = vpop.xlane.xlu0 %864
      %v866 = vsel %vm835, %v589, 0.0
      %867 = vadd.xlane.f32.xlu0 %v866
      %v868 = vpop.xlane.xlu0 %867
      %v869 = vsel %vm835, %v590, 0.0
      %870 = vadd.xlane.f32.xlu0 %v869
      %v871 = vpop.xlane.xlu0 %870
      %v872 = vsel %vm835, %v591, 0.0
      %873 = vadd.xlane.f32.xlu0 %v872
      %v874 = vpop.xlane.xlu0 %873
      %v875 = vsel %vm835, %v592, 0.0
      %876 = vadd.xlane.f32.xlu0 %v875
      %v877 = vpop.xlane.xlu0 %876
      %v878 = vsel %vm835, %v593, 0.0
      %879 = vadd.xlane.f32.xlu0 %v878
      %v880 = vpop.xlane.xlu0 %879
      %v881 = vsel %vm835, %v594, 0.0
      %882 = vadd.xlane.f32.xlu0 %v881
      %v883 = vpop.xlane.xlu0 %882
      %v884 = vsel %vm835, %v595, 0.0
      %885 = vadd.xlane.f32.xlu0 %v884
      %v886 = vpop.xlane.xlu0 %885
      %v887 = vsel %vm835, %v596, 0.0
      %888 = vadd.xlane.f32.xlu0 %v887
      %v889 = vpop.xlane.xlu0 %888
      %v890 = vsel %vm835, %v597, 0.0
      %891 = vadd.xlane.f32.xlu0 %v890
      %v892 = vpop.xlane.xlu0 %891
      %v893 = vsel %vm835, %v598, 0.0
      %894 = vadd.xlane.f32.xlu0 %v893
      %v895 = vpop.xlane.xlu0 %894
      %v896 = vsel %vm835, %v599, 0.0
      %897 = vadd.xlane.f32.xlu0 %v896
      %v898 = vpop.xlane.xlu0 %897
      %v899 = vsel %vm835, %v600, 0.0
      %900 = vadd.xlane.f32.xlu0 %v899
      %v901 = vpop.xlane.xlu0 %900
      %v902 = vsel %vm835, %v601, 0.0
      %903 = vadd.xlane.f32.xlu0 %v902
      %v904 = vpop.xlane.xlu0 %903
      %v905 = vsel %vm835, %v602, 0.0
      %906 = vadd.xlane.f32.xlu0 %v905
      %v907 = vpop.xlane.xlu0 %906
      %v908 = vsel %vm835, %v603, 0.0
      %909 = vadd.xlane.f32.xlu0 %v908
      %v910 = vpop.xlane.xlu0 %909
      %v911 = vsel %vm835, %v604, 0.0
      %912 = vadd.xlane.f32.xlu0 %v911
      %v913 = vpop.xlane.xlu0 %912
      %v914 = vsel %vm835, %v605, 0.0
      %915 = vadd.xlane.f32.xlu0 %v914
      %v916 = vpop.xlane.xlu0 %915
      %v917 = vsel %vm835, %v606, 0.0
      %918 = vadd.xlane.f32.xlu0 %v917
      %v919 = vpop.xlane.xlu0 %918
      %v920 = vsel %vm835, %v607, 0.0
      %921 = vadd.xlane.f32.xlu0 %v920
      %v922 = vpop.xlane.xlu0 %921
      %v923 = vsel %vm835, %v608, 0.0
      %924 = vadd.xlane.f32.xlu0 %v923
      %v925 = vpop.xlane.xlu0 %924
      %v926 = vsel %vm835, %v609, 0.0
      %927 = vadd.xlane.f32.xlu0 %v926
      %v928 = vpop.xlane.xlu0 %927
      %v929 = vsel %vm835, %v610, 0.0
      %930 = vadd.xlane.f32.xlu0 %v929
      %v931 = vpop.xlane.xlu0 %930
      %v932 = vsel %vm835, %v611, 0.0
      %933 = vadd.xlane.f32.xlu0 %v932
      %v934 = vpop.xlane.xlu0 %933
      %v935 = vsel %vm835, %v612, 0.0
      %936 = vadd.xlane.f32.xlu0 %v935
      %v937 = vpop.xlane.xlu0 %936
      %v938 = vsel %vm835, %v613, 0.0
      %939 = vadd.xlane.f32.xlu0 %v938
      %v940 = vpop.xlane.xlu0 %939
      %v941 = vsel %vm835, %v614, 0.0
      %942 = vadd.xlane.f32.xlu0 %v941
      %v943 = vpop.xlane.xlu0 %942
      %v944 = vsel %vm835, %v615, 0.0
      %945 = vadd.xlane.f32.xlu0 %v944
      %v946 = vpop.xlane.xlu0 %945
      %v947 = vsel %vm835, %v616, 0.0
      %948 = vadd.xlane.f32.xlu0 %v947
      %v949 = vpop.xlane.xlu0 %948
      %v950 = vsel %vm835, %v617, 0.0
      %951 = vadd.xlane.f32.xlu0 %v950
      %v952 = vpop.xlane.xlu0 %951
      %v953 = vsel %vm835, %v618, 0.0
      %954 = vadd.xlane.f32.xlu0 %v953
      %v955 = vpop.xlane.xlu0 %954
      %v956 = vsel %vm835, %v619, 0.0
      %957 = vadd.xlane.f32.xlu0 %v956
      %v958 = vpop.xlane.xlu0 %957
      %v959 = vsel %vm835, %v620, 0.0
      %960 = vadd.xlane.f32.xlu0 %v959
      %v961 = vpop.xlane.xlu0 %960
      %v962 = vsel %vm835, %v621, 0.0
      %963 = vadd.xlane.f32.xlu0 %v962
      %v964 = vpop.xlane.xlu0 %963
      %v965 = vsel %vm835, %v622, 0.0
      %966 = vadd.xlane.f32.xlu0 %v965
      %v967 = vpop.xlane.xlu0 %966
      %v968 = vsel %vm835, %v623, 0.0
      %969 = vadd.xlane.f32.xlu0 %v968
      %v970 = vpop.xlane.xlu0 %969
      %v971 = vsel %vm835, %v624, 0.0
      %972 = vadd.xlane.f32.xlu0 %v971
      %v973 = vpop.xlane.xlu0 %972
      %v974 = vsel %vm835, %v625, 0.0
      %975 = vadd.xlane.f32.xlu0 %v974
      %v976 = vpop.xlane.xlu0 %975
      %v977 = vsel %vm835, %v626, 0.0
      %978 = vadd.xlane.f32.xlu0 %v977
      %v979 = vpop.xlane.xlu0 %978
      %v980 = vsel %vm835, %v627, 0.0
      %981 = vadd.xlane.f32.xlu0 %v980
      %v982 = vpop.xlane.xlu0 %981
      %v983 = vsel %vm835, %v628, 0.0
      %984 = vadd.xlane.f32.xlu0 %v983
      %v985 = vpop.xlane.xlu0 %984
      %v986 = vsel %vm835, %v629, 0.0
      %987 = vadd.xlane.f32.xlu0 %v986
      %v988 = vpop.xlane.xlu0 %987
      %v989 = vsel %vm835, %v630, 0.0
      %990 = vadd.xlane.f32.xlu0 %v989
      %v991 = vpop.xlane.xlu0 %990
      %v992 = vsel %vm835, %v631, 0.0
      %993 = vadd.xlane.f32.xlu0 %v992
      %v994 = vpop.xlane.xlu0 %993
      %v995 = vsel %vm835, %v632, 0.0
      %996 = vadd.xlane.f32.xlu0 %v995
      %v997 = vpop.xlane.xlu0 %996
      %v998 = vsel %vm835, %v633, 0.0
      %999 = vadd.xlane.f32.xlu0 %v998
      %v1000 = vpop.xlane.xlu0 %999
      %v1001 = vsel %vm835, %v634, 0.0
      %1002 = vadd.xlane.f32.xlu0 %v1001
      %v1003 = vpop.xlane.xlu0 %1002
      %v1004 = vsel %vm835, %v635, 0.0
      %1005 = vadd.xlane.f32.xlu0 %v1004
      %v1006 = vpop.xlane.xlu0 %1005
      %v1007 = vsel %vm835, %v636, 0.0
      %1008 = vadd.xlane.f32.xlu0 %v1007
      %v1009 = vpop.xlane.xlu0 %1008
      %v1010 = vsel %vm835, %v637, 0.0
      %1011 = vadd.xlane.f32.xlu0 %v1010
      %v1012 = vpop.xlane.xlu0 %1011
      %v1013 = vsel %vm835, %v638, 0.0
      %1014 = vadd.xlane.f32.xlu0 %v1013
      %v1015 = vpop.xlane.xlu0 %1014
      %v1016 = vsel %vm835, %v639, 0.0
      %1017 = vadd.xlane.f32.xlu0 %v1016
      %v1018 = vpop.xlane.xlu0 %1017
      %v1019 = vsel %vm835, %v640, 0.0
      %1020 = vadd.xlane.f32.xlu0 %v1019
      %v1021 = vpop.xlane.xlu0 %1020
      %v1022 = vsel %vm835, %v641, 0.0
      %1023 = vadd.xlane.f32.xlu0 %v1022
      %v1024 = vpop.xlane.xlu0 %1023
      %v1025 = vsel %vm835, %v642, 0.0
      %1026 = vadd.xlane.f32.xlu0 %v1025
      %v1027 = vpop.xlane.xlu0 %1026
      %v1028 = vsel %vm835, %v643, 0.0
      %1029 = vadd.xlane.f32.xlu0 %v1028
      %v1030 = vpop.xlane.xlu0 %1029
      %v1031 = vsel %vm835, %v644, 0.0
      %1032 = vadd.xlane.f32.xlu0 %v1031
      %v1033 = vpop.xlane.xlu0 %1032
      %v1034 = vsel %vm835, %v645, 0.0
      %1035 = vadd.xlane.f32.xlu0 %v1034
      %v1036 = vpop.xlane.xlu0 %1035
      %v1037 = vsel %vm835, %v646, 0.0
      %1038 = vadd.xlane.f32.xlu0 %v1037
      %v1039 = vpop.xlane.xlu0 %1038
      %v1040 = vsel %vm835, %v647, 0.0
      %1041 = vadd.xlane.f32.xlu0 %v1040
      %v1042 = vpop.xlane.xlu0 %1041
      %v1043 = vsel %vm835, %v648, 0.0
      %1044 = vadd.xlane.f32.xlu0 %v1043
      %v1045 = vpop.xlane.xlu0 %1044
      %v1046 = vsel %vm835, %v649, 0.0
      %1047 = vadd.xlane.f32.xlu0 %v1046
      %v1048 = vpop.xlane.xlu0 %1047
      %v1049 = vsel %vm835, %v650, 0.0
      %1050 = vadd.xlane.f32.xlu0 %v1049
      %v1051 = vpop.xlane.xlu0 %1050
      %v1052 = vsel %vm835, %v651, 0.0
      %1053 = vadd.xlane.f32.xlu0 %v1052
      %v1054 = vpop.xlane.xlu0 %1053
      %v1055 = vsel %vm835, %v652, 0.0
      %1056 = vadd.xlane.f32.xlu0 %v1055
      %v1057 = vpop.xlane.xlu0 %1056
      %v1058 = vsel %vm835, %v653, 0.0
      %1059 = vadd.xlane.f32.xlu0 %v1058
      %v1060 = vpop.xlane.xlu0 %1059
      %v1061 = vsel %vm835, %v654, 0.0
      %1062 = vadd.xlane.f32.xlu0 %v1061
      %v1063 = vpop.xlane.xlu0 %1062
      %v1064 = vsel %vm835, %v655, 0.0
      %1065 = vadd.xlane.f32.xlu0 %v1064
      %v1066 = vpop.xlane.xlu0 %1065
      %v1067 = vsel %vm835, %v656, 0.0
      %1068 = vadd.xlane.f32.xlu0 %v1067
      %v1069 = vpop.xlane.xlu0 %1068
      %v1070 = vsel %vm835, %v657, 0.0
      %1071 = vadd.xlane.f32.xlu0 %v1070
      %v1072 = vpop.xlane.xlu0 %1071
      %v1073 = vsel %vm835, %v658, 0.0
      %1074 = vadd.xlane.f32.xlu0 %v1073
      %v1075 = vpop.xlane.xlu0 %1074
      %v1076 = vsel %vm835, %v659, 0.0
      %1077 = vadd.xlane.f32.xlu0 %v1076
      %v1078 = vpop.xlane.xlu0 %1077
      %v1079 = vsel %vm835, %v660, 0.0
      %1080 = vadd.xlane.f32.xlu0 %v1079
      %v1081 = vpop.xlane.xlu0 %1080
      %v1082 = vsel %vm835, %v661, 0.0
      %1083 = vadd.xlane.f32.xlu0 %v1082
      %v1084 = vpop.xlane.xlu0 %1083
      %v1085 = vsel %vm835, %v662, 0.0
      %1086 = vadd.xlane.f32.xlu0 %v1085
      %v1087 = vpop.xlane.xlu0 %1086
      %v1088 = vsel %vm835, %v663, 0.0
      %1089 = vadd.xlane.f32.xlu0 %v1088
      %v1090 = vpop.xlane.xlu0 %1089
      %v1091 = vsel %vm835, %v664, 0.0
      %1092 = vadd.xlane.f32.xlu0 %v1091
      %v1093 = vpop.xlane.xlu0 %1092
      %v1094 = vsel %vm835, %v665, 0.0
      %1095 = vadd.xlane.f32.xlu0 %v1094
      %v1096 = vpop.xlane.xlu0 %1095
      %v1097 = vsel %vm835, %v666, 0.0
      %1098 = vadd.xlane.f32.xlu0 %v1097
      %v1099 = vpop.xlane.xlu0 %1098
      %v1100 = vsel %vm835, %v667, 0.0
      %1101 = vadd.xlane.f32.xlu0 %v1100
      %v1102 = vpop.xlane.xlu0 %1101
      %v1103 = vsel %vm835, %v668, 0.0
      %1104 = vadd.xlane.f32.xlu0 %v1103
      %v1105 = vpop.xlane.xlu0 %1104
      %v1106 = vsel %vm835, %v669, 0.0
      %1107 = vadd.xlane.f32.xlu0 %v1106
      %v1108 = vpop.xlane.xlu0 %1107
      %v1109 = vsel %vm835, %v670, 0.0
      %1110 = vadd.xlane.f32.xlu0 %v1109
      %v1111 = vpop.xlane.xlu0 %1110
      %v1112 = vsel %vm835, %v671, 0.0
      %1113 = vadd.xlane.f32.xlu0 %v1112
      %v1114 = vpop.xlane.xlu0 %1113
      %v1115 = vsel %vm835, %v672, 0.0
      %1116 = vadd.xlane.f32.xlu0 %v1115
      %v1117 = vpop.xlane.xlu0 %1116
      %v1118 = vsel %vm835, %v673, 0.0
      %1119 = vadd.xlane.f32.xlu0 %v1118
      %v1120 = vpop.xlane.xlu0 %1119
      %v1121 = vsel %vm835, %v674, 0.0
      %1122 = vadd.xlane.f32.xlu0 %v1121
      %v1123 = vpop.xlane.xlu0 %1122
      %v1124 = vsel %vm835, %v675, 0.0
      %1125 = vadd.xlane.f32.xlu0 %v1124
      %v1126 = vpop.xlane.xlu0 %1125
      %v1127 = vsel %vm835, %v676, 0.0
      %1128 = vadd.xlane.f32.xlu0 %v1127
      %v1129 = vpop.xlane.xlu0 %1128
      %v1130 = vsel %vm835, %v677, 0.0
      %1131 = vadd.xlane.f32.xlu0 %v1130
      %v1132 = vpop.xlane.xlu0 %1131
      %v1133 = vsel %vm835, %v678, 0.0
      %1134 = vadd.xlane.f32.xlu0 %v1133
      %v1135 = vpop.xlane.xlu0 %1134
      %v1136 = vsel %vm835, %v679, 0.0
      %1137 = vadd.xlane.f32.xlu0 %v1136
      %v1138 = vpop.xlane.xlu0 %1137
      %v1139 = vsel %vm835, %v680, 0.0
      %1140 = vadd.xlane.f32.xlu0 %v1139
      %v1141 = vpop.xlane.xlu0 %1140
      %v1142 = vsel %vm835, %v681, 0.0
      %1143 = vadd.xlane.f32.xlu0 %v1142
      %v1144 = vpop.xlane.xlu0 %1143
      %v1145 = vsel %vm835, %v682, 0.0
      %1146 = vadd.xlane.f32.xlu0 %v1145
      %v1147 = vpop.xlane.xlu0 %1146
      %v1148 = vsel %vm835, %v683, 0.0
      %1149 = vadd.xlane.f32.xlu0 %v1148
      %v1150 = vpop.xlane.xlu0 %1149
      %v1151 = vsel %vm835, %v684, 0.0
      %1152 = vadd.xlane.f32.xlu0 %v1151
      %v1153 = vpop.xlane.xlu0 %1152
      %v1154 = vsel %vm835, %v685, 0.0
      %1155 = vadd.xlane.f32.xlu0 %v1154
      %v1156 = vpop.xlane.xlu0 %1155
      %v1157 = vsel %vm835, %v686, 0.0
      %1158 = vadd.xlane.f32.xlu0 %v1157
      %v1159 = vpop.xlane.xlu0 %1158
      %v1160 = vsel %vm835, %v687, 0.0
      %1161 = vadd.xlane.f32.xlu0 %v1160
      %v1162 = vpop.xlane.xlu0 %1161
      %v1163 = vsel %vm835, %v688, 0.0
      %1164 = vadd.xlane.f32.xlu0 %v1163
      %v1165 = vpop.xlane.xlu0 %1164
      %v1166 = vsel %vm835, %v689, 0.0
      %1167 = vadd.xlane.f32.xlu0 %v1166
      %v1168 = vpop.xlane.xlu0 %1167
      %v1169 = vsel %vm835, %v690, 0.0
      %1170 = vadd.xlane.f32.xlu0 %v1169
      %v1171 = vpop.xlane.xlu0 %1170
      %v1172 = vsel %vm835, %v691, 0.0
      %1173 = vadd.xlane.f32.xlu0 %v1172
      %v1174 = vpop.xlane.xlu0 %1173
      %v1175 = vsel %vm835, %v692, 0.0
      %1176 = vadd.xlane.f32.xlu0 %v1175
      %v1177 = vpop.xlane.xlu0 %1176
      %v1178 = vsel %vm835, %v693, 0.0
      %1179 = vadd.xlane.f32.xlu0 %v1178
      %v1180 = vpop.xlane.xlu0 %1179
      %v1181 = vsel %vm835, %v694, 0.0
      %1182 = vadd.xlane.f32.xlu0 %v1181
      %v1183 = vpop.xlane.xlu0 %1182
      %v1184 = vsel %vm835, %v695, 0.0
      %1185 = vadd.xlane.f32.xlu0 %v1184
      %v1186 = vpop.xlane.xlu0 %1185
      %v1187 = vsel %vm835, %v696, 0.0
      %1188 = vadd.xlane.f32.xlu0 %v1187
      %v1189 = vpop.xlane.xlu0 %1188
      %v1190 = vsel %vm835, %v697, 0.0
      %1191 = vadd.xlane.f32.xlu0 %v1190
      %v1192 = vpop.xlane.xlu0 %1191
      %v1193 = vsel %vm835, %v698, 0.0
      %1194 = vadd.xlane.f32.xlu0 %v1193
      %v1195 = vpop.xlane.xlu0 %1194
      %v1196 = vsel %vm835, %v699, 0.0
      %1197 = vadd.xlane.f32.xlu0 %v1196
      %v1198 = vpop.xlane.xlu0 %1197
      %v1199 = vsel %vm835, %v700, 0.0
      %1200 = vadd.xlane.f32.xlu0 %v1199
      %v1201 = vpop.xlane.xlu0 %1200
      %v1202 = vsel %vm835, %v701, 0.0
      %1203 = vadd.xlane.f32.xlu0 %v1202
      %v1204 = vpop.xlane.xlu0 %1203
      %v1205 = vsel %vm835, %v702, 0.0
      %1206 = vadd.xlane.f32.xlu0 %v1205
      %v1207 = vpop.xlane.xlu0 %1206
      %v1208 = vsel %vm835, %v703, 0.0
      %1209 = vadd.xlane.f32.xlu0 %v1208
      %v1210 = vpop.xlane.xlu0 %1209
      %v1211 = vsel %vm835, %v704, 0.0
      %1212 = vadd.xlane.f32.xlu0 %v1211
      %v1213 = vpop.xlane.xlu0 %1212
      %v1214 = vsel %vm835, %v705, 0.0
      %1215 = vadd.xlane.f32.xlu0 %v1214
      %v1216 = vpop.xlane.xlu0 %1215
      %v1217 = vsel %vm835, %v706, 0.0
      %1218 = vadd.xlane.f32.xlu0 %v1217
      %v1219 = vpop.xlane.xlu0 %1218
      %v1220 = vsel %vm835, %v707, 0.0
      %1221 = vadd.xlane.f32.xlu0 %v1220
      %v1222 = vpop.xlane.xlu0 %1221
      %v1223 = vsel %vm835, %v708, 0.0
      %1224 = vadd.xlane.f32.xlu0 %v1223
      %v1225 = vpop.xlane.xlu0 %1224
      %v1226 = vsel %vm835, %v709, 0.0
      %1227 = vadd.xlane.f32.xlu0 %v1226
      %v1228 = vpop.xlane.xlu0 %1227
      %v1229 = vsel %vm835, %v710, 0.0
      %1230 = vadd.xlane.f32.xlu0 %v1229
      %v1231 = vpop.xlane.xlu0 %1230
      %v1232 = vsel %vm835, %v711, 0.0
      %1233 = vadd.xlane.f32.xlu0 %v1232
      %v1234 = vpop.xlane.xlu0 %1233
      %v1235 = vsel %vm835, %v712, 0.0
      %1236 = vadd.xlane.f32.xlu0 %v1235
      %v1237 = vpop.xlane.xlu0 %1236
      %v1238 = vsel %vm835, %v713, 0.0
      %1239 = vadd.xlane.f32.xlu0 %v1238
      %v1240 = vpop.xlane.xlu0 %1239
      %v1241 = vsel %vm835, %v714, 0.0
      %1242 = vadd.xlane.f32.xlu0 %v1241
      %v1243 = vpop.xlane.xlu0 %1242
      %v1244 = vsel %vm835, %v715, 0.0
      %1245 = vadd.xlane.f32.xlu0 %v1244
      %v1246 = vpop.xlane.xlu0 %1245
      %v1247 = vsel %vm835, %v716, 0.0
      %1248 = vadd.xlane.f32.xlu0 %v1247
      %v1249 = vpop.xlane.xlu0 %1248
      %v1250 = vsel %vm835, %v717, 0.0
      %1251 = vadd.xlane.f32.xlu0 %v1250
      %v1252 = vpop.xlane.xlu0 %1251
      %v1253 = vsel %vm835, %v718, 0.0
      %1254 = vadd.xlane.f32.xlu0 %v1253
      %v1255 = vpop.xlane.xlu0 %1254
      %v1256 = vsel %vm835, %v719, 0.0
      %1257 = vadd.xlane.f32.xlu0 %v1256
      %v1258 = vpop.xlane.xlu0 %1257
      %v1259 = vsel %vm835, %v720, 0.0
      %1260 = vadd.xlane.f32.xlu0 %v1259
      %v1261 = vpop.xlane.xlu0 %1260
      %v1262 = vsel %vm835, %v721, 0.0
      %1263 = vadd.xlane.f32.xlu0 %v1262
      %v1264 = vpop.xlane.xlu0 %1263
      %v1265 = vsel %vm835, %v722, 0.0
      %1266 = vadd.xlane.f32.xlu0 %v1265
      %v1267 = vpop.xlane.xlu0 %1266
      %v1268 = vsel %vm835, %v723, 0.0
      %1269 = vadd.xlane.f32.xlu0 %v1268
      %v1270 = vpop.xlane.xlu0 %1269
      %v1271 = vsel %vm835, %v724, 0.0
      %1272 = vadd.xlane.f32.xlu0 %v1271
      %v1273 = vpop.xlane.xlu0 %1272
      %v1274 = vsel %vm835, %v725, 0.0
      %1275 = vadd.xlane.f32.xlu0 %v1274
      %v1276 = vpop.xlane.xlu0 %1275
      %v1277 = vsel %vm835, %v726, 0.0
      %1278 = vadd.xlane.f32.xlu0 %v1277
      %v1279 = vpop.xlane.xlu0 %1278
      %v1280 = vsel %vm835, %v727, 0.0
      %1281 = vadd.xlane.f32.xlu0 %v1280
      %v1282 = vpop.xlane.xlu0 %1281
      %v1283 = vsel %vm835, %v728, 0.0
      %1284 = vadd.xlane.f32.xlu0 %v1283
      %v1285 = vpop.xlane.xlu0 %1284
      %v1286 = vsel %vm835, %v729, 0.0
      %1287 = vadd.xlane.f32.xlu0 %v1286
      %v1288 = vpop.xlane.xlu0 %1287
      %v1289 = vsel %vm835, %v730, 0.0
      %1290 = vadd.xlane.f32.xlu0 %v1289
      %v1291 = vpop.xlane.xlu0 %1290
      %v1292 = vsel %vm835, %v731, 0.0
      %1293 = vadd.xlane.f32.xlu0 %v1292
      %v1294 = vpop.xlane.xlu0 %1293
      %v1295 = vsel %vm835, %v732, 0.0
      %1296 = vadd.xlane.f32.xlu0 %v1295
      %v1297 = vpop.xlane.xlu0 %1296
      %v1298 = vsel %vm835, %v733, 0.0
      %1299 = vadd.xlane.f32.xlu0 %v1298
      %v1300 = vpop.xlane.xlu0 %1299
      %v1301 = vsel %vm835, %v734, 0.0
      %1302 = vadd.xlane.f32.xlu0 %v1301
      %v1303 = vpop.xlane.xlu0 %1302
      %v1304 = vsel %vm835, %v735, 0.0
      %1305 = vadd.xlane.f32.xlu0 %v1304
      %v1306 = vpop.xlane.xlu0 %1305
      %v1307 = vsel %vm835, %v736, 0.0
      %1308 = vadd.xlane.f32.xlu0 %v1307
      %v1309 = vpop.xlane.xlu0 %1308
      %v1310 = vsel %vm835, %v737, 0.0
      %1311 = vadd.xlane.f32.xlu0 %v1310
      %v1312 = vpop.xlane.xlu0 %1311
      %v1313 = vsel %vm835, %v738, 0.0
      %1314 = vadd.xlane.f32.xlu0 %v1313
      %v1315 = vpop.xlane.xlu0 %1314
      %v1316 = vsel %vm835, %v739, 0.0
      %1317 = vadd.xlane.f32.xlu0 %v1316
      %v1318 = vpop.xlane.xlu0 %1317
      %v1319 = vsel %vm835, %v740, 0.0
      %1320 = vadd.xlane.f32.xlu0 %v1319
      %v1321 = vpop.xlane.xlu0 %1320
      %v1322 = vsel %vm835, %v741, 0.0
      %1323 = vadd.xlane.f32.xlu0 %v1322
      %v1324 = vpop.xlane.xlu0 %1323
      %v1325 = vsel %vm835, %v742, 0.0
      %1326 = vadd.xlane.f32.xlu0 %v1325
      %v1327 = vpop.xlane.xlu0 %1326
      %v1328 = vsel %vm835, %v743, 0.0
      %1329 = vadd.xlane.f32.xlu0 %v1328
      %v1330 = vpop.xlane.xlu0 %1329
      %v1331 = vsel %vm835, %v744, 0.0
      %1332 = vadd.xlane.f32.xlu0 %v1331
      %v1333 = vpop.xlane.xlu0 %1332
      %v1334 = vsel %vm835, %v745, 0.0
      %1335 = vadd.xlane.f32.xlu0 %v1334
      %v1336 = vpop.xlane.xlu0 %1335
      %v1337 = vsel %vm835, %v746, 0.0
      %1338 = vadd.xlane.f32.xlu0 %v1337
      %v1339 = vpop.xlane.xlu0 %1338
      %v1340 = vsel %vm835, %v747, 0.0
      %1341 = vadd.xlane.f32.xlu0 %v1340
      %v1342 = vpop.xlane.xlu0 %1341
      %v1343 = vsel %vm835, %v748, 0.0
      %1344 = vadd.xlane.f32.xlu0 %v1343
      %v1345 = vpop.xlane.xlu0 %1344
      %v1346 = vsel %vm835, %v749, 0.0
      %1347 = vadd.xlane.f32.xlu0 %v1346
      %v1348 = vpop.xlane.xlu0 %1347
      %v1349 = vsel %vm835, %v750, 0.0
      %1350 = vadd.xlane.f32.xlu0 %v1349
      %v1351 = vpop.xlane.xlu0 %1350
      %v1352 = vsel %vm835, %v751, 0.0
      %1353 = vadd.xlane.f32.xlu0 %v1352
      %v1354 = vpop.xlane.xlu0 %1353
      %v1355 = vsel %vm835, %v752, 0.0
      %1356 = vadd.xlane.f32.xlu0 %v1355
      %v1357 = vpop.xlane.xlu0 %1356
      %v1358 = vsel %vm835, %v753, 0.0
      %1359 = vadd.xlane.f32.xlu0 %v1358
      %v1360 = vpop.xlane.xlu0 %1359
      %v1361 = vsel %vm835, %v754, 0.0
      %1362 = vadd.xlane.f32.xlu0 %v1361
      %v1363 = vpop.xlane.xlu0 %1362
      %v1364 = vsel %vm835, %v755, 0.0
      %1365 = vadd.xlane.f32.xlu0 %v1364
      %v1366 = vpop.xlane.xlu0 %1365
      %v1367 = vsel %vm835, %v756, 0.0
      %1368 = vadd.xlane.f32.xlu0 %v1367
      %v1369 = vpop.xlane.xlu0 %1368
      %v1370 = vsel %vm835, %v757, 0.0
      %1371 = vadd.xlane.f32.xlu0 %v1370
      %v1372 = vpop.xlane.xlu0 %1371
      %v1373 = vsel %vm835, %v758, 0.0
      %1374 = vadd.xlane.f32.xlu0 %v1373
      %v1375 = vpop.xlane.xlu0 %1374
      %v1376 = vsel %vm835, %v759, 0.0
      %1377 = vadd.xlane.f32.xlu0 %v1376
      %v1378 = vpop.xlane.xlu0 %1377
      %v1379 = vsel %vm835, %v760, 0.0
      %1380 = vadd.xlane.f32.xlu0 %v1379
      %v1381 = vpop.xlane.xlu0 %1380
      %v1382 = vsel %vm835, %v761, 0.0
      %1383 = vadd.xlane.f32.xlu0 %v1382
      %v1384 = vpop.xlane.xlu0 %1383
      %v1385 = vsel %vm835, %v762, 0.0
      %1386 = vadd.xlane.f32.xlu0 %v1385
      %v1387 = vpop.xlane.xlu0 %1386
      %v1388 = vsel %vm835, %v763, 0.0
      %1389 = vadd.xlane.f32.xlu0 %v1388
      %v1390 = vpop.xlane.xlu0 %1389
      %v1391 = vsel %vm835, %v764, 0.0
      %1392 = vadd.xlane.f32.xlu0 %v1391
      %v1393 = vpop.xlane.xlu0 %1392
      %v1394 = vsel %vm835, %v765, 0.0
      %1395 = vadd.xlane.f32.xlu0 %v1394
      %v1396 = vpop.xlane.xlu0 %1395
      %v1397 = vsel %vm835, %v766, 0.0
      %1398 = vadd.xlane.f32.xlu0 %v1397
      %v1399 = vpop.xlane.xlu0 %1398
      %v1400 = vsel %vm835, %v767, 0.0
      %1401 = vadd.xlane.f32.xlu0 %v1400
      %v1402 = vpop.xlane.xlu0 %1401
      %v1403 = vsel %vm835, %v768, 0.0
      %1404 = vadd.xlane.f32.xlu0 %v1403
      %v1405 = vpop.xlane.xlu0 %1404
      %v1406 = vsel %vm835, %v769, 0.0
      %1407 = vadd.xlane.f32.xlu0 %v1406
      %v1408 = vpop.xlane.xlu0 %1407
      %v1409 = vsel %vm835, %v770, 0.0
      %1410 = vadd.xlane.f32.xlu0 %v1409
      %v1411 = vpop.xlane.xlu0 %1410
      %v1412 = vsel %vm835, %v771, 0.0
      %1413 = vadd.xlane.f32.xlu0 %v1412
      %v1414 = vpop.xlane.xlu0 %1413
      %v1415 = vsel %vm835, %v772, 0.0
      %1416 = vadd.xlane.f32.xlu0 %v1415
      %v1417 = vpop.xlane.xlu0 %1416
      %v1418 = vsel %vm835, %v773, 0.0
      %1419 = vadd.xlane.f32.xlu0 %v1418
      %v1420 = vpop.xlane.xlu0 %1419
      %v1421 = vsel %vm835, %v774, 0.0
      %1422 = vadd.xlane.f32.xlu0 %v1421
      %v1423 = vpop.xlane.xlu0 %1422
      %v1424 = vsel %vm835, %v775, 0.0
      %1425 = vadd.xlane.f32.xlu0 %v1424
      %v1426 = vpop.xlane.xlu0 %1425
      %v1427 = vsel %vm835, %v776, 0.0
      %1428 = vadd.xlane.f32.xlu0 %v1427
      %v1429 = vpop.xlane.xlu0 %1428
      %v1430 = vsel %vm835, %v777, 0.0
      %1431 = vadd.xlane.f32.xlu0 %v1430
      %v1432 = vpop.xlane.xlu0 %1431
      %v1433 = vsel %vm835, %v778, 0.0
      %1434 = vadd.xlane.f32.xlu0 %v1433
      %v1435 = vpop.xlane.xlu0 %1434
      %v1436 = vsel %vm835, %v779, 0.0
      %1437 = vadd.xlane.f32.xlu0 %v1436
      %v1438 = vpop.xlane.xlu0 %1437
      %v1439 = vsel %vm835, %v780, 0.0
      %1440 = vadd.xlane.f32.xlu0 %v1439
      %v1441 = vpop.xlane.xlu0 %1440
      %v1442 = vsel %vm835, %v781, 0.0
      %1443 = vadd.xlane.f32.xlu0 %v1442
      %v1444 = vpop.xlane.xlu0 %1443
      %v1445 = vsel %vm835, %v782, 0.0
      %1446 = vadd.xlane.f32.xlu0 %v1445
      %v1447 = vpop.xlane.xlu0 %1446
      %v1448 = vsel %vm835, %v783, 0.0
      %1449 = vadd.xlane.f32.xlu0 %v1448
      %v1450 = vpop.xlane.xlu0 %1449
      %v1451 = vsel %vm835, %v784, 0.0
      %1452 = vadd.xlane.f32.xlu0 %v1451
      %v1453 = vpop.xlane.xlu0 %1452
      %v1454 = vsel %vm835, %v785, 0.0
      %1455 = vadd.xlane.f32.xlu0 %v1454
      %v1456 = vpop.xlane.xlu0 %1455
      %v1457 = vsel %vm835, %v786, 0.0
      %1458 = vadd.xlane.f32.xlu0 %v1457
      %v1459 = vpop.xlane.xlu0 %1458
      %v1460 = vsel %vm835, %v787, 0.0
      %1461 = vadd.xlane.f32.xlu0 %v1460
      %v1462 = vpop.xlane.xlu0 %1461
      %v1463 = vsel %vm835, %v788, 0.0
      %1464 = vadd.xlane.f32.xlu0 %v1463
      %v1465 = vpop.xlane.xlu0 %1464
      %v1466 = vsel %vm835, %v789, 0.0
      %1467 = vadd.xlane.f32.xlu0 %v1466
      %v1468 = vpop.xlane.xlu0 %1467
      %v1469 = vsel %vm835, %v790, 0.0
      %1470 = vadd.xlane.f32.xlu0 %v1469
      %v1471 = vpop.xlane.xlu0 %1470
      %v1472 = vsel %vm835, %v791, 0.0
      %1473 = vadd.xlane.f32.xlu0 %v1472
      %v1474 = vpop.xlane.xlu0 %1473
      %v1475 = vsel %vm835, %v792, 0.0
      %1476 = vadd.xlane.f32.xlu0 %v1475
      %v1477 = vpop.xlane.xlu0 %1476
      %v1478 = vsel %vm835, %v793, 0.0
      %1479 = vadd.xlane.f32.xlu0 %v1478
      %v1480 = vpop.xlane.xlu0 %1479
      %v1481 = vsel %vm835, %v794, 0.0
      %1482 = vadd.xlane.f32.xlu0 %v1481
      %v1483 = vpop.xlane.xlu0 %1482
      %v1484 = vsel %vm835, %v795, 0.0
      %1485 = vadd.xlane.f32.xlu0 %v1484
      %v1486 = vpop.xlane.xlu0 %1485
      %v1487 = vsel %vm835, %v796, 0.0
      %1488 = vadd.xlane.f32.xlu0 %v1487
      %v1489 = vpop.xlane.xlu0 %1488
      %v1490 = vsel %vm835, %v797, 0.0
      %1491 = vadd.xlane.f32.xlu0 %v1490
      %v1492 = vpop.xlane.xlu0 %1491
      %v1493 = vsel %vm835, %v798, 0.0
      %1494 = vadd.xlane.f32.xlu0 %v1493
      %v1495 = vpop.xlane.xlu0 %1494
      %v1496 = vsel %vm835, %v799, 0.0
      %1497 = vadd.xlane.f32.xlu0 %v1496
      %v1498 = vpop.xlane.xlu0 %1497
      %v1499 = vsel %vm835, %v800, 0.0
      %1500 = vadd.xlane.f32.xlu0 %v1499
      %v1501 = vpop.xlane.xlu0 %1500
      %v1502 = vsel %vm835, %v801, 0.0
      %1503 = vadd.xlane.f32.xlu0 %v1502
      %v1504 = vpop.xlane.xlu0 %1503
      %v1505 = vsel %vm835, %v802, 0.0
      %1506 = vadd.xlane.f32.xlu0 %v1505
      %v1507 = vpop.xlane.xlu0 %1506
      %v1508 = vsel %vm835, %v803, 0.0
      %1509 = vadd.xlane.f32.xlu0 %v1508
      %v1510 = vpop.xlane.xlu0 %1509
      %v1511 = vsel %vm835, %v804, 0.0
      %1512 = vadd.xlane.f32.xlu0 %v1511
      %v1513 = vpop.xlane.xlu0 %1512
      %v1514 = vsel %vm835, %v805, 0.0
      %1515 = vadd.xlane.f32.xlu0 %v1514
      %v1516 = vpop.xlane.xlu0 %1515
      %v1517 = vsel %vm835, %v806, 0.0
      %1518 = vadd.xlane.f32.xlu0 %v1517
      %v1519 = vpop.xlane.xlu0 %1518
      %v1520 = vsel %vm835, %v807, 0.0
      %1521 = vadd.xlane.f32.xlu0 %v1520
      %v1522 = vpop.xlane.xlu0 %1521
      %v1523 = vsel %vm835, %v808, 0.0
      %1524 = vadd.xlane.f32.xlu0 %v1523
      %v1525 = vpop.xlane.xlu0 %1524
      %v1526 = vsel %vm835, %v809, 0.0
      %1527 = vadd.xlane.f32.xlu0 %v1526
      %v1528 = vpop.xlane.xlu0 %1527
      %v1529 = vsel %vm835, %v810, 0.0
      %1530 = vadd.xlane.f32.xlu0 %v1529
      %v1531 = vpop.xlane.xlu0 %1530
      %v1532 = vsel %vm835, %v811, 0.0
      %1533 = vadd.xlane.f32.xlu0 %v1532
      %v1534 = vpop.xlane.xlu0 %1533
      %v1535 = vsel %vm835, %v812, 0.0
      %1536 = vadd.xlane.f32.xlu0 %v1535
      %v1537 = vpop.xlane.xlu0 %1536
      %v1538 = vsel %vm835, %v813, 0.0
      %1539 = vadd.xlane.f32.xlu0 %v1538
      %v1540 = vpop.xlane.xlu0 %1539
      %v1541 = vsel %vm835, %v814, 0.0
      %1542 = vadd.xlane.f32.xlu0 %v1541
      %v1543 = vpop.xlane.xlu0 %1542
      %v1544 = vsel %vm835, %v815, 0.0
      %1545 = vadd.xlane.f32.xlu0 %v1544
      %v1546 = vpop.xlane.xlu0 %1545
      %v1547 = vsel %vm835, %v816, 0.0
      %1548 = vadd.xlane.f32.xlu0 %v1547
      %v1549 = vpop.xlane.xlu0 %1548
      %v1550 = vsel %vm835, %v817, 0.0
      %1551 = vadd.xlane.f32.xlu0 %v1550
      %v1552 = vpop.xlane.xlu0 %1551
      %v1553 = vsel %vm835, %v818, 0.0
      %1554 = vadd.xlane.f32.xlu0 %v1553
      %v1555 = vpop.xlane.xlu0 %1554
      %v1556 = vsel %vm835, %v819, 0.0
      %1557 = vadd.xlane.f32.xlu0 %v1556
      %v1558 = vpop.xlane.xlu0 %1557
      %v1559 = vsel %vm835, %v820, 0.0
      %1560 = vadd.xlane.f32.xlu0 %v1559
      %v1561 = vpop.xlane.xlu0 %1560
      %v1562 = vsel %vm835, %v821, 0.0
      %1563 = vadd.xlane.f32.xlu0 %v1562
      %v1564 = vpop.xlane.xlu0 %1563
      %v1565 = vsel %vm835, %v822, 0.0
      %1566 = vadd.xlane.f32.xlu0 %v1565
      %v1567 = vpop.xlane.xlu0 %1566
      %v1568 = vsel %vm835, %v823, 0.0
      %1569 = vadd.xlane.f32.xlu0 %v1568
      %v1570 = vpop.xlane.xlu0 %1569
      %v1571 = vsel %vm835, %v824, 0.0
      %1572 = vadd.xlane.f32.xlu0 %v1571
      %v1573 = vpop.xlane.xlu0 %1572
      %v1574 = vsel %vm835, %v825, 0.0
      %1575 = vadd.xlane.f32.xlu0 %v1574
      %v1576 = vpop.xlane.xlu0 %1575
      %v1577 = vsel %vm835, %v826, 0.0
      %1578 = vadd.xlane.f32.xlu0 %v1577
      %v1579 = vpop.xlane.xlu0 %1578
      %v1580 = vsel %vm835, %v827, 0.0
      %1581 = vadd.xlane.f32.xlu0 %v1580
      %v1582 = vpop.xlane.xlu0 %1581
      %v1583 = vsel %vm835, %v828, 0.0
      %1584 = vadd.xlane.f32.xlu0 %v1583
      %v1585 = vpop.xlane.xlu0 %1584
      %v1586 = vsel %vm835, %v829, 0.0
      %1587 = vadd.xlane.f32.xlu0 %v1586
      %v1588 = vpop.xlane.xlu0 %1587
      %v1589 = vsel %vm835, %v830, 0.0
      %1590 = vadd.xlane.f32.xlu0 %v1589
      %v1591 = vpop.xlane.xlu0 %1590
      %v1592 = vsel %vm835, %v831, 0.0
      %1593 = vadd.xlane.f32.xlu0 %v1592
      %v1594 = vpop.xlane.xlu0 %1593
      %v1595 = vsel %vm835, %v832, 0.0
      %1596 = vadd.xlane.f32.xlu0 %v1595
      %v1597 = vpop.xlane.xlu0 %1596
      %v1598 = vsel %vm835, %v833, 0.0
      %1599 = vadd.xlane.f32.xlu0 %v1598
      %v1600 = vpop.xlane.xlu0 %1599
      %v1601 = vsel %vm835, %v834, 0.0
      %1602 = vadd.xlane.f32.xlu0 %v1601
      %v1603 = vpop.xlane.xlu0 %1602
      %s1604 = sshra.s32 %s289, 3
      %s1605 = sand.u32 %s289, 7
      %s1606 = smul.addr %s1604, 4
      %s1607 = scalar_lea.vmem %s2, %s1606
      %v1608 = vld [vmem:[%s1607] sm:$0xf]
      %v1609 = vld [vmem:[%s1607 + $0x4] sm:$0xf]
      %v1610 = vld [vmem:[%s1607 + $0x8] sm:$0xf]
      %v1611 = vld [vmem:[%s1607 + $0xc] sm:$0xf]
      %v1612 = vld [vmem:[%s1607 + $0x10] sm:$0xf]
      %v1613 = vld [vmem:[%s1607 + $0x14] sm:$0xf]
      %v1614 = vld [vmem:[%s1607 + $0x18] sm:$0xf]
      %v1615 = vld [vmem:[%s1607 + $0x1c] sm:$0xf]
      %v1616 = vld [vmem:[%s1607 + $0x20] sm:$0xf]
      %v1617 = vld [vmem:[%s1607 + $0x24] sm:$0xf]
      %v1618 = vld [vmem:[%s1607 + $0x28] sm:$0xf]
      %v1619 = vld [vmem:[%s1607 + $0x2c] sm:$0xf]
      %v1620 = vld [vmem:[%s1607 + $0x30] sm:$0xf]
      %v1621 = vld [vmem:[%s1607 + $0x34] sm:$0xf]
      %v1622 = vld [vmem:[%s1607 + $0x38] sm:$0xf]
      %v1623 = vld [vmem:[%s1607 + $0x3c] sm:$0xf]
      %v1624 = vld [vmem:[%s1607 + $0x40] sm:$0xf]
      %v1625 = vld [vmem:[%s1607 + $0x44] sm:$0xf]
      %v1626 = vld [vmem:[%s1607 + $0x48] sm:$0xf]
      %v1627 = vld [vmem:[%s1607 + $0x4c] sm:$0xf]
      %v1628 = vld [vmem:[%s1607 + $0x50] sm:$0xf]
      %v1629 = vld [vmem:[%s1607 + $0x54] sm:$0xf]
      %v1630 = vld [vmem:[%s1607 + $0x58] sm:$0xf]
      %v1631 = vld [vmem:[%s1607 + $0x5c] sm:$0xf]
      %v1632 = vld [vmem:[%s1607 + $0x60] sm:$0xf]
      %v1633 = vld [vmem:[%s1607 + $0x64] sm:$0xf]
      %v1634 = vld [vmem:[%s1607 + $0x68] sm:$0xf]
      %v1635 = vld [vmem:[%s1607 + $0x6c] sm:$0xf]
      %v1636 = vld [vmem:[%s1607 + $0x70] sm:$0xf]
      %v1637 = vld [vmem:[%s1607 + $0x74] sm:$0xf]
      %v1638 = vld [vmem:[%s1607 + $0x78] sm:$0xf]
      %v1639 = vld [vmem:[%s1607 + $0x7c] sm:$0xf]
      %v1640 = vld [vmem:[#allocation2] sm:$0xff]
      %v1641 = vpack.c.bf16 %v841, %v838
      %v1642 = vpack.c.bf16 %v847, %v844
      %v1643 = vpack.c.bf16 %v853, %v850
      %v1644 = vpack.c.bf16 %v859, %v856
      %v1645 = vpack.c.bf16 %v865, %v862
      %v1646 = vpack.c.bf16 %v871, %v868
      %v1647 = vpack.c.bf16 %v877, %v874
      %v1648 = vpack.c.bf16 %v883, %v880
      %v1649 = vpack.c.bf16 %v889, %v886
      %v1650 = vpack.c.bf16 %v895, %v892
      %v1651 = vpack.c.bf16 %v901, %v898
      %v1652 = vpack.c.bf16 %v907, %v904
      %v1653 = vpack.c.bf16 %v913, %v910
      %v1654 = vpack.c.bf16 %v919, %v916
      %v1655 = vpack.c.bf16 %v925, %v922
      %v1656 = vpack.c.bf16 %v931, %v928
      %v1657 = vpack.c.bf16 %v937, %v934
      %v1658 = vpack.c.bf16 %v943, %v940
      %v1659 = vpack.c.bf16 %v949, %v946
      %v1660 = vpack.c.bf16 %v955, %v952
      %v1661 = vpack.c.bf16 %v961, %v958
      %v1662 = vpack.c.bf16 %v967, %v964
      %v1663 = vpack.c.bf16 %v973, %v970
      %v1664 = vpack.c.bf16 %v979, %v976
      %v1665 = vpack.c.bf16 %v985, %v982
      %v1666 = vpack.c.bf16 %v991, %v988
      %v1667 = vpack.c.bf16 %v997, %v994
      %v1668 = vpack.c.bf16 %v1003, %v1000
      %v1669 = vpack.c.bf16 %v1009, %v1006
      %v1670 = vpack.c.bf16 %v1015, %v1012
      %v1671 = vpack.c.bf16 %v1021, %v1018
      %v1672 = vpack.c.bf16 %v1027, %v1024
      %v1673 = vpack.c.bf16 %v1033, %v1030
      %v1674 = vpack.c.bf16 %v1039, %v1036
      %v1675 = vpack.c.bf16 %v1045, %v1042
      %v1676 = vpack.c.bf16 %v1051, %v1048
      %v1677 = vpack.c.bf16 %v1057, %v1054
      %v1678 = vpack.c.bf16 %v1063, %v1060
      %v1679 = vpack.c.bf16 %v1069, %v1066
      %v1680 = vpack.c.bf16 %v1075, %v1072
      %v1681 = vpack.c.bf16 %v1081, %v1078
      %v1682 = vpack.c.bf16 %v1087, %v1084
      %v1683 = vpack.c.bf16 %v1093, %v1090
      %v1684 = vpack.c.bf16 %v1099, %v1096
      %v1685 = vpack.c.bf16 %v1105, %v1102
      %v1686 = vpack.c.bf16 %v1111, %v1108
      %v1687 = vpack.c.bf16 %v1117, %v1114
      %v1688 = vpack.c.bf16 %v1123, %v1120
      %v1689 = vpack.c.bf16 %v1129, %v1126
      %v1690 = vpack.c.bf16 %v1135, %v1132
      %v1691 = vpack.c.bf16 %v1141, %v1138
      %v1692 = vpack.c.bf16 %v1147, %v1144
      %v1693 = vpack.c.bf16 %v1153, %v1150
      %v1694 = vpack.c.bf16 %v1159, %v1156
      %v1695 = vpack.c.bf16 %v1165, %v1162
      %v1696 = vpack.c.bf16 %v1171, %v1168
      %v1697 = vpack.c.bf16 %v1177, %v1174
      %v1698 = vpack.c.bf16 %v1183, %v1180
      %v1699 = vpack.c.bf16 %v1189, %v1186
      %v1700 = vpack.c.bf16 %v1195, %v1192
      %v1701 = vpack.c.bf16 %v1201, %v1198
      %v1702 = vpack.c.bf16 %v1207, %v1204
      %v1703 = vpack.c.bf16 %v1213, %v1210
      %v1704 = vpack.c.bf16 %v1219, %v1216
      %v1705 = vpack.c.bf16 %v1225, %v1222
      %v1706 = vpack.c.bf16 %v1231, %v1228
      %v1707 = vpack.c.bf16 %v1237, %v1234
      %v1708 = vpack.c.bf16 %v1243, %v1240
      %v1709 = vpack.c.bf16 %v1249, %v1246
      %v1710 = vpack.c.bf16 %v1255, %v1252
      %v1711 = vpack.c.bf16 %v1261, %v1258
      %v1712 = vpack.c.bf16 %v1267, %v1264
      %v1713 = vpack.c.bf16 %v1273, %v1270
      %v1714 = vpack.c.bf16 %v1279, %v1276
      %v1715 = vpack.c.bf16 %v1285, %v1282
      %v1716 = vpack.c.bf16 %v1291, %v1288
      %v1717 = vpack.c.bf16 %v1297, %v1294
      %v1718 = vpack.c.bf16 %v1303, %v1300
      %v1719 = vpack.c.bf16 %v1309, %v1306
      %v1720 = vpack.c.bf16 %v1315, %v1312
      %v1721 = vpack.c.bf16 %v1321, %v1318
      %v1722 = vpack.c.bf16 %v1327, %v1324
      %v1723 = vpack.c.bf16 %v1333, %v1330
      %v1724 = vpack.c.bf16 %v1339, %v1336
      %v1725 = vpack.c.bf16 %v1345, %v1342
      %v1726 = vpack.c.bf16 %v1351, %v1348
      %v1727 = vpack.c.bf16 %v1357, %v1354
      %v1728 = vpack.c.bf16 %v1363, %v1360
      %v1729 = vpack.c.bf16 %v1369, %v1366
      %v1730 = vpack.c.bf16 %v1375, %v1372
      %v1731 = vpack.c.bf16 %v1381, %v1378
      %v1732 = vpack.c.bf16 %v1387, %v1384
      %v1733 = vpack.c.bf16 %v1393, %v1390
      %v1734 = vpack.c.bf16 %v1399, %v1396
      %v1735 = vpack.c.bf16 %v1405, %v1402
      %v1736 = vpack.c.bf16 %v1411, %v1408
      %v1737 = vpack.c.bf16 %v1417, %v1414
      %v1738 = vpack.c.bf16 %v1423, %v1420
      %v1739 = vpack.c.bf16 %v1429, %v1426
      %v1740 = vpack.c.bf16 %v1435, %v1432
      %v1741 = vpack.c.bf16 %v1441, %v1438
      %v1742 = vpack.c.bf16 %v1447, %v1444
      %v1743 = vpack.c.bf16 %v1453, %v1450
      %v1744 = vpack.c.bf16 %v1459, %v1456
      %v1745 = vpack.c.bf16 %v1465, %v1462
      %v1746 = vpack.c.bf16 %v1471, %v1468
      %v1747 = vpack.c.bf16 %v1477, %v1474
      %v1748 = vpack.c.bf16 %v1483, %v1480
      %v1749 = vpack.c.bf16 %v1489, %v1486
      %v1750 = vpack.c.bf16 %v1495, %v1492
      %v1751 = vpack.c.bf16 %v1501, %v1498
      %v1752 = vpack.c.bf16 %v1507, %v1504
      %v1753 = vpack.c.bf16 %v1513, %v1510
      %v1754 = vpack.c.bf16 %v1519, %v1516
      %v1755 = vpack.c.bf16 %v1525, %v1522
      %v1756 = vpack.c.bf16 %v1531, %v1528
      %v1757 = vpack.c.bf16 %v1537, %v1534
      %v1758 = vpack.c.bf16 %v1543, %v1540
      %v1759 = vpack.c.bf16 %v1549, %v1546
      %v1760 = vpack.c.bf16 %v1555, %v1552
      %v1761 = vpack.c.bf16 %v1561, %v1558
      %v1762 = vpack.c.bf16 %v1567, %v1564
      %v1763 = vpack.c.bf16 %v1573, %v1570
      %v1764 = vpack.c.bf16 %v1579, %v1576
      %v1765 = vpack.c.bf16 %v1585, %v1582
      %v1766 = vpack.c.bf16 %v1591, %v1588
      %v1767 = vpack.c.bf16 %v1597, %v1594
      %v1768 = vpack.c.bf16 %v1603, %v1600
      %v1897 = vunpack.c.l.b16 %v1641
      %v1898 = vunpack.c.h.b16 %v1641
      %v1899 = vunpack.c.l.b16 %v1642
      %v1900 = vunpack.c.h.b16 %v1642
      %v1901 = vunpack.c.l.b16 %v1643
      %v1902 = vunpack.c.h.b16 %v1643
      %v1903 = vunpack.c.l.b16 %v1644
      %v1904 = vunpack.c.h.b16 %v1644
      %v1905 = vunpack.c.l.b16 %v1645
      %v1906 = vunpack.c.h.b16 %v1645
      %v1907 = vunpack.c.l.b16 %v1646
      %v1908 = vunpack.c.h.b16 %v1646
      %v1909 = vunpack.c.l.b16 %v1647
      %v1910 = vunpack.c.h.b16 %v1647
      %v1911 = vunpack.c.l.b16 %v1648
      %v1912 = vunpack.c.h.b16 %v1648
      %v1913 = vunpack.c.l.b16 %v1649
      %v1914 = vunpack.c.h.b16 %v1649
      %v1915 = vunpack.c.l.b16 %v1650
      %v1916 = vunpack.c.h.b16 %v1650
      %v1917 = vunpack.c.l.b16 %v1651
      %v1918 = vunpack.c.h.b16 %v1651
      %v1919 = vunpack.c.l.b16 %v1652
      %v1920 = vunpack.c.h.b16 %v1652
      %v1921 = vunpack.c.l.b16 %v1653
      %v1922 = vunpack.c.h.b16 %v1653
      %v1923 = vunpack.c.l.b16 %v1654
      %v1924 = vunpack.c.h.b16 %v1654
      %v1925 = vunpack.c.l.b16 %v1655
      %v1926 = vunpack.c.h.b16 %v1655
      %v1927 = vunpack.c.l.b16 %v1656
      %v1928 = vunpack.c.h.b16 %v1656
      %v1929 = vunpack.c.l.b16 %v1657
      %v1930 = vunpack.c.h.b16 %v1657
      %v1931 = vunpack.c.l.b16 %v1658
      %v1932 = vunpack.c.h.b16 %v1658
      %v1933 = vunpack.c.l.b16 %v1659
      %v1934 = vunpack.c.h.b16 %v1659
      %v1935 = vunpack.c.l.b16 %v1660
      %v1936 = vunpack.c.h.b16 %v1660
      %v1937 = vunpack.c.l.b16 %v1661
      %v1938 = vunpack.c.h.b16 %v1661
      %v1939 = vunpack.c.l.b16 %v1662
      %v1940 = vunpack.c.h.b16 %v1662
      %v1941 = vunpack.c.l.b16 %v1663
      %v1942 = vunpack.c.h.b16 %v1663
      %v1943 = vunpack.c.l.b16 %v1664
      %v1944 = vunpack.c.h.b16 %v1664
      %v1945 = vunpack.c.l.b16 %v1665
      %v1946 = vunpack.c.h.b16 %v1665
      %v1947 = vunpack.c.l.b16 %v1666
      %v1948 = vunpack.c.h.b16 %v1666
      %v1949 = vunpack.c.l.b16 %v1667
      %v1950 = vunpack.c.h.b16 %v1667
      %v1951 = vunpack.c.l.b16 %v1668
      %v1952 = vunpack.c.h.b16 %v1668
      %v1953 = vunpack.c.l.b16 %v1669
      %v1954 = vunpack.c.h.b16 %v1669
      %v1955 = vunpack.c.l.b16 %v1670
      %v1956 = vunpack.c.h.b16 %v1670
      %v1957 = vunpack.c.l.b16 %v1671
      %v1958 = vunpack.c.h.b16 %v1671
      %v1959 = vunpack.c.l.b16 %v1672
      %v1960 = vunpack.c.h.b16 %v1672
      %v1961 = vunpack.c.l.b16 %v1673
      %v1962 = vunpack.c.h.b16 %v1673
      %v1963 = vunpack.c.l.b16 %v1674
      %v1964 = vunpack.c.h.b16 %v1674
      %v1965 = vunpack.c.l.b16 %v1675
      %v1966 = vunpack.c.h.b16 %v1675
      %v1967 = vunpack.c.l.b16 %v1676
      %v1968 = vunpack.c.h.b16 %v1676
      %v1969 = vunpack.c.l.b16 %v1677
      %v1970 = vunpack.c.h.b16 %v1677
      %v1971 = vunpack.c.l.b16 %v1678
      %v1972 = vunpack.c.h.b16 %v1678
      %v1973 = vunpack.c.l.b16 %v1679
      %v1974 = vunpack.c.h.b16 %v1679
      %v1975 = vunpack.c.l.b16 %v1680
      %v1976 = vunpack.c.h.b16 %v1680
      %v1977 = vunpack.c.l.b16 %v1681
      %v1978 = vunpack.c.h.b16 %v1681
      %v1979 = vunpack.c.l.b16 %v1682
      %v1980 = vunpack.c.h.b16 %v1682
      %v1981 = vunpack.c.l.b16 %v1683
      %v1982 = vunpack.c.h.b16 %v1683
      %v1983 = vunpack.c.l.b16 %v1684
      %v1984 = vunpack.c.h.b16 %v1684
      %v1985 = vunpack.c.l.b16 %v1685
      %v1986 = vunpack.c.h.b16 %v1685
      %v1987 = vunpack.c.l.b16 %v1686
      %v1988 = vunpack.c.h.b16 %v1686
      %v1989 = vunpack.c.l.b16 %v1687
      %v1990 = vunpack.c.h.b16 %v1687
      %v1991 = vunpack.c.l.b16 %v1688
      %v1992 = vunpack.c.h.b16 %v1688
      %v1993 = vunpack.c.l.b16 %v1689
      %v1994 = vunpack.c.h.b16 %v1689
      %v1995 = vunpack.c.l.b16 %v1690
      %v1996 = vunpack.c.h.b16 %v1690
      %v1997 = vunpack.c.l.b16 %v1691
      %v1998 = vunpack.c.h.b16 %v1691
      %v1999 = vunpack.c.l.b16 %v1692
      %v2000 = vunpack.c.h.b16 %v1692
      %v2001 = vunpack.c.l.b16 %v1693
      %v2002 = vunpack.c.h.b16 %v1693
      %v2003 = vunpack.c.l.b16 %v1694
      %v2004 = vunpack.c.h.b16 %v1694
      %v2005 = vunpack.c.l.b16 %v1695
      %v2006 = vunpack.c.h.b16 %v1695
      %v2007 = vunpack.c.l.b16 %v1696
      %v2008 = vunpack.c.h.b16 %v1696
      %v2009 = vunpack.c.l.b16 %v1697
      %v2010 = vunpack.c.h.b16 %v1697
      %v2011 = vunpack.c.l.b16 %v1698
      %v2012 = vunpack.c.h.b16 %v1698
      %v2013 = vunpack.c.l.b16 %v1699
      %v2014 = vunpack.c.h.b16 %v1699
      %v2015 = vunpack.c.l.b16 %v1700
      %v2016 = vunpack.c.h.b16 %v1700
      %v2017 = vunpack.c.l.b16 %v1701
      %v2018 = vunpack.c.h.b16 %v1701
      %v2019 = vunpack.c.l.b16 %v1702
      %v2020 = vunpack.c.h.b16 %v1702
      %v2021 = vunpack.c.l.b16 %v1703
      %v2022 = vunpack.c.h.b16 %v1703
      %v2023 = vunpack.c.l.b16 %v1704
      %v2024 = vunpack.c.h.b16 %v1704
      %v2025 = vunpack.c.l.b16 %v1705
      %v2026 = vunpack.c.h.b16 %v1705
      %v2027 = vunpack.c.l.b16 %v1706
      %v2028 = vunpack.c.h.b16 %v1706
      %v2029 = vunpack.c.l.b16 %v1707
      %v2030 = vunpack.c.h.b16 %v1707
      %v2031 = vunpack.c.l.b16 %v1708
      %v2032 = vunpack.c.h.b16 %v1708
      %v2033 = vunpack.c.l.b16 %v1709
      %v2034 = vunpack.c.h.b16 %v1709
      %v2035 = vunpack.c.l.b16 %v1710
      %v2036 = vunpack.c.h.b16 %v1710
      %v2037 = vunpack.c.l.b16 %v1711
      %v2038 = vunpack.c.h.b16 %v1711
      %v2039 = vunpack.c.l.b16 %v1712
      %v2040 = vunpack.c.h.b16 %v1712
      %v2041 = vunpack.c.l.b16 %v1713
      %v2042 = vunpack.c.h.b16 %v1713
      %v2043 = vunpack.c.l.b16 %v1714
      %v2044 = vunpack.c.h.b16 %v1714
      %v2045 = vunpack.c.l.b16 %v1715
      %v2046 = vunpack.c.h.b16 %v1715
      %v2047 = vunpack.c.l.b16 %v1716
      %v2048 = vunpack.c.h.b16 %v1716
      %v2049 = vunpack.c.l.b16 %v1717
      %v2050 = vunpack.c.h.b16 %v1717
      %v2051 = vunpack.c.l.b16 %v1718
      %v2052 = vunpack.c.h.b16 %v1718
      %v2053 = vunpack.c.l.b16 %v1719
      %v2054 = vunpack.c.h.b16 %v1719
      %v2055 = vunpack.c.l.b16 %v1720
      %v2056 = vunpack.c.h.b16 %v1720
      %v2057 = vunpack.c.l.b16 %v1721
      %v2058 = vunpack.c.h.b16 %v1721
      %v2059 = vunpack.c.l.b16 %v1722
      %v2060 = vunpack.c.h.b16 %v1722
      %v2061 = vunpack.c.l.b16 %v1723
      %v2062 = vunpack.c.h.b16 %v1723
      %v2063 = vunpack.c.l.b16 %v1724
      %v2064 = vunpack.c.h.b16 %v1724
      %v2065 = vunpack.c.l.b16 %v1725
      %v2066 = vunpack.c.h.b16 %v1725
      %v2067 = vunpack.c.l.b16 %v1726
      %v2068 = vunpack.c.h.b16 %v1726
      %v2069 = vunpack.c.l.b16 %v1727
      %v2070 = vunpack.c.h.b16 %v1727
      %v2071 = vunpack.c.l.b16 %v1728
      %v2072 = vunpack.c.h.b16 %v1728
      %v2073 = vunpack.c.l.b16 %v1729
      %v2074 = vunpack.c.h.b16 %v1729
      %v2075 = vunpack.c.l.b16 %v1730
      %v2076 = vunpack.c.h.b16 %v1730
      %v2077 = vunpack.c.l.b16 %v1731
      %v2078 = vunpack.c.h.b16 %v1731
      %v2079 = vunpack.c.l.b16 %v1732
      %v2080 = vunpack.c.h.b16 %v1732
      %v2081 = vunpack.c.l.b16 %v1733
      %v2082 = vunpack.c.h.b16 %v1733
      %v2083 = vunpack.c.l.b16 %v1734
      %v2084 = vunpack.c.h.b16 %v1734
      %v2085 = vunpack.c.l.b16 %v1735
      %v2086 = vunpack.c.h.b16 %v1735
      %v2087 = vunpack.c.l.b16 %v1736
      %v2088 = vunpack.c.h.b16 %v1736
      %v2089 = vunpack.c.l.b16 %v1737
      %v2090 = vunpack.c.h.b16 %v1737
      %v2091 = vunpack.c.l.b16 %v1738
      %v2092 = vunpack.c.h.b16 %v1738
      %v2093 = vunpack.c.l.b16 %v1739
      %v2094 = vunpack.c.h.b16 %v1739
      %v2095 = vunpack.c.l.b16 %v1740
      %v2096 = vunpack.c.h.b16 %v1740
      %v2097 = vunpack.c.l.b16 %v1741
      %v2098 = vunpack.c.h.b16 %v1741
      %v2099 = vunpack.c.l.b16 %v1742
      %v2100 = vunpack.c.h.b16 %v1742
      %v2101 = vunpack.c.l.b16 %v1743
      %v2102 = vunpack.c.h.b16 %v1743
      %v2103 = vunpack.c.l.b16 %v1744
      %v2104 = vunpack.c.h.b16 %v1744
      %v2105 = vunpack.c.l.b16 %v1745
      %v2106 = vunpack.c.h.b16 %v1745
      %v2107 = vunpack.c.l.b16 %v1746
      %v2108 = vunpack.c.h.b16 %v1746
      %v2109 = vunpack.c.l.b16 %v1747
      %v2110 = vunpack.c.h.b16 %v1747
      %v2111 = vunpack.c.l.b16 %v1748
      %v2112 = vunpack.c.h.b16 %v1748
      %v2113 = vunpack.c.l.b16 %v1749
      %v2114 = vunpack.c.h.b16 %v1749
      %v2115 = vunpack.c.l.b16 %v1750
      %v2116 = vunpack.c.h.b16 %v1750
      %v2117 = vunpack.c.l.b16 %v1751
      %v2118 = vunpack.c.h.b16 %v1751
      %v2119 = vunpack.c.l.b16 %v1752
      %v2120 = vunpack.c.h.b16 %v1752
      %v2121 = vunpack.c.l.b16 %v1753
      %v2122 = vunpack.c.h.b16 %v1753
      %v2123 = vunpack.c.l.b16 %v1754
      %v2124 = vunpack.c.h.b16 %v1754
      %v2125 = vunpack.c.l.b16 %v1755
      %v2126 = vunpack.c.h.b16 %v1755
      %v2127 = vunpack.c.l.b16 %v1756
      %v2128 = vunpack.c.h.b16 %v1756
      %v2129 = vunpack.c.l.b16 %v1757
      %v2130 = vunpack.c.h.b16 %v1757
      %v2131 = vunpack.c.l.b16 %v1758
      %v2132 = vunpack.c.h.b16 %v1758
      %v2133 = vunpack.c.l.b16 %v1759
      %v2134 = vunpack.c.h.b16 %v1759
      %v2135 = vunpack.c.l.b16 %v1760
      %v2136 = vunpack.c.h.b16 %v1760
      %v2137 = vunpack.c.l.b16 %v1761
      %v2138 = vunpack.c.h.b16 %v1761
      %v2139 = vunpack.c.l.b16 %v1762
      %v2140 = vunpack.c.h.b16 %v1762
      %v2141 = vunpack.c.l.b16 %v1763
      %v2142 = vunpack.c.h.b16 %v1763
      %v2143 = vunpack.c.l.b16 %v1764
      %v2144 = vunpack.c.h.b16 %v1764
      %v2145 = vunpack.c.l.b16 %v1765
      %v2146 = vunpack.c.h.b16 %v1765
      %v2147 = vunpack.c.l.b16 %v1766
      %v2148 = vunpack.c.h.b16 %v1766
      %v2149 = vunpack.c.l.b16 %v1767
      %v2150 = vunpack.c.h.b16 %v1767
      %v2151 = vunpack.c.l.b16 %v1768
      %v2152 = vunpack.c.h.b16 %v1768
      %v2153 = vlaneseq
      %v2154 = vand.u32 %v2153, 127
      %v2155 = vlaneseq
      %v2156 = vshrl.u32 %v2155, 7
      %v2157 = vsub.s32 %v2154, %v2156
      %v2158 = vrot.slane %v1897, %v2157
      %v2159 = vadd.s32 %v2154, 4294967288
      %v2160 = vlaneseq
      %v2161 = vshrl.u32 %v2160, 7
      %v2162 = vsub.s32 %v2159, %v2161
      %v2163 = vrot.slane %v1898, %v2162
      %vm2164 = vcmask 130112
      %v2165 = vsel %vm2164, %v2163, %v2158
      %v2166 = vadd.s32 %v2154, 4294967280
      %v2167 = vlaneseq
      %v2168 = vshrl.u32 %v2167, 7
      %v2169 = vsub.s32 %v2166, %v2168
      %v2170 = vrot.slane %v1899, %v2169
      %vm2171 = vcmask 195712
      %v2172 = vsel %vm2171, %v2170, %v2165
      %v2173 = vadd.s32 %v2154, 4294967272
      %v2174 = vlaneseq
      %v2175 = vshrl.u32 %v2174, 7
      %v2176 = vsub.s32 %v2173, %v2175
      %v2177 = vrot.slane %v1900, %v2176
      %vm2178 = vcmask 261312
      %v2179 = vsel %vm2178, %v2177, %v2172
      %v2180 = vadd.s32 %v2154, 4294967264
      %v2181 = vlaneseq
      %v2182 = vshrl.u32 %v2181, 7
      %v2183 = vsub.s32 %v2180, %v2182
      %v2184 = vrot.slane %v1901, %v2183
      %vm2185 = vcmask 326912
      %v2186 = vsel %vm2185, %v2184, %v2179
      %v2187 = vadd.s32 %v2154, 4294967256
      %v2188 = vlaneseq
      %v2189 = vshrl.u32 %v2188, 7
      %v2190 = vsub.s32 %v2187, %v2189
      %v2191 = vrot.slane %v1902, %v2190
      %vm2192 = vcmask 392512
      %v2193 = vsel %vm2192, %v2191, %v2186
      %v2194 = vadd.s32 %v2154, 4294967248
      %v2195 = vlaneseq
      %v2196 = vshrl.u32 %v2195, 7
      %v2197 = vsub.s32 %v2194, %v2196
      %v2198 = vrot.slane %v1903, %v2197
      %vm2199 = vcmask 458112
      %v2200 = vsel %vm2199, %v2198, %v2193
      %v2201 = vadd.s32 %v2154, 4294967240
      %v2202 = vlaneseq
      %v2203 = vshrl.u32 %v2202, 7
      %v2204 = vsub.s32 %v2201, %v2203
      %v2205 = vrot.slane %v1904, %v2204
      %vm2206 = vcmask 523712
      %v2207 = vsel %vm2206, %v2205, %v2200
      %v2208 = vadd.s32 %v2154, 4294967232
      %v2209 = vlaneseq
      %v2210 = vshrl.u32 %v2209, 7
      %v2211 = vsub.s32 %v2208, %v2210
      %v2212 = vrot.slane %v1905, %v2211
      %vm2213 = vcmask 589312
      %v2214 = vsel %vm2213, %v2212, %v2207
      %v2215 = vadd.s32 %v2154, 4294967224
      %v2216 = vlaneseq
      %v2217 = vshrl.u32 %v2216, 7
      %v2218 = vsub.s32 %v2215, %v2217
      %v2219 = vrot.slane %v1906, %v2218
      %vm2220 = vcmask 654912
      %v2221 = vsel %vm2220, %v2219, %v2214
      %v2222 = vadd.s32 %v2154, 4294967216
      %v2223 = vlaneseq
      %v2224 = vshrl.u32 %v2223, 7
      %v2225 = vsub.s32 %v2222, %v2224
      %v2226 = vrot.slane %v1907, %v2225
      %vm2227 = vcmask 720512
      %v2228 = vsel %vm2227, %v2226, %v2221
      %v2229 = vadd.s32 %v2154, 4294967208
      %v2230 = vlaneseq
      %v2231 = vshrl.u32 %v2230, 7
      %v2232 = vsub.s32 %v2229, %v2231
      %v2233 = vrot.slane %v1908, %v2232
      %vm2234 = vcmask 786112
      %v2235 = vsel %vm2234, %v2233, %v2228
      %v2236 = vadd.s32 %v2154, 4294967200
      %v2237 = vlaneseq
      %v2238 = vshrl.u32 %v2237, 7
      %v2239 = vsub.s32 %v2236, %v2238
      %v2240 = vrot.slane %v1909, %v2239
      %vm2241 = vcmask 851712
      %v2242 = vsel %vm2241, %v2240, %v2235
      %v2243 = vadd.s32 %v2154, 4294967192
      %v2244 = vlaneseq
      %v2245 = vshrl.u32 %v2244, 7
      %v2246 = vsub.s32 %v2243, %v2245
      %v2247 = vrot.slane %v1910, %v2246
      %vm2248 = vcmask 917312
      %v2249 = vsel %vm2248, %v2247, %v2242
      %v2250 = vadd.s32 %v2154, 4294967184
      %v2251 = vlaneseq
      %v2252 = vshrl.u32 %v2251, 7
      %v2253 = vsub.s32 %v2250, %v2252
      %v2254 = vrot.slane %v1911, %v2253
      %vm2255 = vcmask 982912
      %v2256 = vsel %vm2255, %v2254, %v2249
      %v2257 = vadd.s32 %v2154, 4294967176
      %v2258 = vlaneseq
      %v2259 = vshrl.u32 %v2258, 7
      %v2260 = vsub.s32 %v2257, %v2259
      %v2261 = vrot.slane %v1912, %v2260
      %vm2262 = vcmask 1048512
      %v2263 = vsel %vm2262, %v2261, %v2256
      %v2264 = vlaneseq
      %v2265 = vshrl.u32 %v2264, 7
      %v2266 = vsub.s32 %v2154, %v2265
      %v2267 = vrot.slane %v1913, %v2266
      %v2268 = vlaneseq
      %v2269 = vshrl.u32 %v2268, 7
      %v2270 = vsub.s32 %v2159, %v2269
      %v2271 = vrot.slane %v1914, %v2270
      %v2272 = vsel %vm2164, %v2271, %v2267
      %v2273 = vlaneseq
      %v2274 = vshrl.u32 %v2273, 7
      %v2275 = vsub.s32 %v2166, %v2274
      %v2276 = vrot.slane %v1915, %v2275
      %v2277 = vsel %vm2171, %v2276, %v2272
      %v2278 = vlaneseq
      %v2279 = vshrl.u32 %v2278, 7
      %v2280 = vsub.s32 %v2173, %v2279
      %v2281 = vrot.slane %v1916, %v2280
      %v2282 = vsel %vm2178, %v2281, %v2277
      %v2283 = vlaneseq
      %v2284 = vshrl.u32 %v2283, 7
      %v2285 = vsub.s32 %v2180, %v2284
      %v2286 = vrot.slane %v1917, %v2285
      %v2287 = vsel %vm2185, %v2286, %v2282
      %v2288 = vlaneseq
      %v2289 = vshrl.u32 %v2288, 7
      %v2290 = vsub.s32 %v2187, %v2289
      %v2291 = vrot.slane %v1918, %v2290
      %v2292 = vsel %vm2192, %v2291, %v2287
      %v2293 = vlaneseq
      %v2294 = vshrl.u32 %v2293, 7
      %v2295 = vsub.s32 %v2194, %v2294
      %v2296 = vrot.slane %v1919, %v2295
      %v2297 = vsel %vm2199, %v2296, %v2292
      %v2298 = vlaneseq
      %v2299 = vshrl.u32 %v2298, 7
      %v2300 = vsub.s32 %v2201, %v2299
      %v2301 = vrot.slane %v1920, %v2300
      %v2302 = vsel %vm2206, %v2301, %v2297
      %v2303 = vlaneseq
      %v2304 = vshrl.u32 %v2303, 7
      %v2305 = vsub.s32 %v2208, %v2304
      %v2306 = vrot.slane %v1921, %v2305
      %v2307 = vsel %vm2213, %v2306, %v2302
      %v2308 = vlaneseq
      %v2309 = vshrl.u32 %v2308, 7
      %v2310 = vsub.s32 %v2215, %v2309
      %v2311 = vrot.slane %v1922, %v2310
      %v2312 = vsel %vm2220, %v2311, %v2307
      %v2313 = vlaneseq
      %v2314 = vshrl.u32 %v2313, 7
      %v2315 = vsub.s32 %v2222, %v2314
      %v2316 = vrot.slane %v1923, %v2315
      %v2317 = vsel %vm2227, %v2316, %v2312
      %v2318 = vlaneseq
      %v2319 = vshrl.u32 %v2318, 7
      %v2320 = vsub.s32 %v2229, %v2319
      %v2321 = vrot.slane %v1924, %v2320
      %v2322 = vsel %vm2234, %v2321, %v2317
      %v2323 = vlaneseq
      %v2324 = vshrl.u32 %v2323, 7
      %v2325 = vsub.s32 %v2236, %v2324
      %v2326 = vrot.slane %v1925, %v2325
      %v2327 = vsel %vm2241, %v2326, %v2322
      %v2328 = vlaneseq
      %v2329 = vshrl.u32 %v2328, 7
      %v2330 = vsub.s32 %v2243, %v2329
      %v2331 = vrot.slane %v1926, %v2330
      %v2332 = vsel %vm2248, %v2331, %v2327
      %v2333 = vlaneseq
      %v2334 = vshrl.u32 %v2333, 7
      %v2335 = vsub.s32 %v2250, %v2334
      %v2336 = vrot.slane %v1927, %v2335
      %v2337 = vsel %vm2255, %v2336, %v2332
      %v2338 = vlaneseq
      %v2339 = vshrl.u32 %v2338, 7
      %v2340 = vsub.s32 %v2257, %v2339
      %v2341 = vrot.slane %v1928, %v2340
      %v2342 = vsel %vm2262, %v2341, %v2337
      %v2343 = vlaneseq
      %v2344 = vshrl.u32 %v2343, 7
      %v2345 = vsub.s32 %v2154, %v2344
      %v2346 = vrot.slane %v1929, %v2345
      %v2347 = vlaneseq
      %v2348 = vshrl.u32 %v2347, 7
      %v2349 = vsub.s32 %v2159, %v2348
      %v2350 = vrot.slane %v1930, %v2349
      %v2351 = vsel %vm2164, %v2350, %v2346
      %v2352 = vlaneseq
      %v2353 = vshrl.u32 %v2352, 7
      %v2354 = vsub.s32 %v2166, %v2353
      %v2355 = vrot.slane %v1931, %v2354
      %v2356 = vsel %vm2171, %v2355, %v2351
      %v2357 = vlaneseq
      %v2358 = vshrl.u32 %v2357, 7
      %v2359 = vsub.s32 %v2173, %v2358
      %v2360 = vrot.slane %v1932, %v2359
      %v2361 = vsel %vm2178, %v2360, %v2356
      %v2362 = vlaneseq
      %v2363 = vshrl.u32 %v2362, 7
      %v2364 = vsub.s32 %v2180, %v2363
      %v2365 = vrot.slane %v1933, %v2364
      %v2366 = vsel %vm2185, %v2365, %v2361
      %v2367 = vlaneseq
      %v2368 = vshrl.u32 %v2367, 7
      %v2369 = vsub.s32 %v2187, %v2368
      %v2370 = vrot.slane %v1934, %v2369
      %v2371 = vsel %vm2192, %v2370, %v2366
      %v2372 = vlaneseq
      %v2373 = vshrl.u32 %v2372, 7
      %v2374 = vsub.s32 %v2194, %v2373
      %v2375 = vrot.slane %v1935, %v2374
      %v2376 = vsel %vm2199, %v2375, %v2371
      %v2377 = vlaneseq
      %v2378 = vshrl.u32 %v2377, 7
      %v2379 = vsub.s32 %v2201, %v2378
      %v2380 = vrot.slane %v1936, %v2379
      %v2381 = vsel %vm2206, %v2380, %v2376
      %v2382 = vlaneseq
      %v2383 = vshrl.u32 %v2382, 7
      %v2384 = vsub.s32 %v2208, %v2383
      %v2385 = vrot.slane %v1937, %v2384
      %v2386 = vsel %vm2213, %v2385, %v2381
      %v2387 = vlaneseq
      %v2388 = vshrl.u32 %v2387, 7
      %v2389 = vsub.s32 %v2215, %v2388
      %v2390 = vrot.slane %v1938, %v2389
      %v2391 = vsel %vm2220, %v2390, %v2386
      %v2392 = vlaneseq
      %v2393 = vshrl.u32 %v2392, 7
      %v2394 = vsub.s32 %v2222, %v2393
      %v2395 = vrot.slane %v1939, %v2394
      %v2396 = vsel %vm2227, %v2395, %v2391
      %v2397 = vlaneseq
      %v2398 = vshrl.u32 %v2397, 7
      %v2399 = vsub.s32 %v2229, %v2398
      %v2400 = vrot.slane %v1940, %v2399
      %v2401 = vsel %vm2234, %v2400, %v2396
      %v2402 = vlaneseq
      %v2403 = vshrl.u32 %v2402, 7
      %v2404 = vsub.s32 %v2236, %v2403
      %v2405 = vrot.slane %v1941, %v2404
      %v2406 = vsel %vm2241, %v2405, %v2401
      %v2407 = vlaneseq
      %v2408 = vshrl.u32 %v2407, 7
      %v2409 = vsub.s32 %v2243, %v2408
      %v2410 = vrot.slane %v1942, %v2409
      %v2411 = vsel %vm2248, %v2410, %v2406
      %v2412 = vlaneseq
      %v2413 = vshrl.u32 %v2412, 7
      %v2414 = vsub.s32 %v2250, %v2413
      %v2415 = vrot.slane %v1943, %v2414
      %v2416 = vsel %vm2255, %v2415, %v2411
      %v2417 = vlaneseq
      %v2418 = vshrl.u32 %v2417, 7
      %v2419 = vsub.s32 %v2257, %v2418
      %v2420 = vrot.slane %v1944, %v2419
      %v2421 = vsel %vm2262, %v2420, %v2416
      %v2422 = vlaneseq
      %v2423 = vshrl.u32 %v2422, 7
      %v2424 = vsub.s32 %v2154, %v2423
      %v2425 = vrot.slane %v1945, %v2424
      %v2426 = vlaneseq
      %v2427 = vshrl.u32 %v2426, 7
      %v2428 = vsub.s32 %v2159, %v2427
      %v2429 = vrot.slane %v1946, %v2428
      %v2430 = vsel %vm2164, %v2429, %v2425
      %v2431 = vlaneseq
      %v2432 = vshrl.u32 %v2431, 7
      %v2433 = vsub.s32 %v2166, %v2432
      %v2434 = vrot.slane %v1947, %v2433
      %v2435 = vsel %vm2171, %v2434, %v2430
      %v2436 = vlaneseq
      %v2437 = vshrl.u32 %v2436, 7
      %v2438 = vsub.s32 %v2173, %v2437
      %v2439 = vrot.slane %v1948, %v2438
      %v2440 = vsel %vm2178, %v2439, %v2435
      %v2441 = vlaneseq
      %v2442 = vshrl.u32 %v2441, 7
      %v2443 = vsub.s32 %v2180, %v2442
      %v2444 = vrot.slane %v1949, %v2443
      %v2445 = vsel %vm2185, %v2444, %v2440
      %v2446 = vlaneseq
      %v2447 = vshrl.u32 %v2446, 7
      %v2448 = vsub.s32 %v2187, %v2447
      %v2449 = vrot.slane %v1950, %v2448
      %v2450 = vsel %vm2192, %v2449, %v2445
      %v2451 = vlaneseq
      %v2452 = vshrl.u32 %v2451, 7
      %v2453 = vsub.s32 %v2194, %v2452
      %v2454 = vrot.slane %v1951, %v2453
      %v2455 = vsel %vm2199, %v2454, %v2450
      %v2456 = vlaneseq
      %v2457 = vshrl.u32 %v2456, 7
      %v2458 = vsub.s32 %v2201, %v2457
      %v2459 = vrot.slane %v1952, %v2458
      %v2460 = vsel %vm2206, %v2459, %v2455
      %v2461 = vlaneseq
      %v2462 = vshrl.u32 %v2461, 7
      %v2463 = vsub.s32 %v2208, %v2462
      %v2464 = vrot.slane %v1953, %v2463
      %v2465 = vsel %vm2213, %v2464, %v2460
      %v2466 = vlaneseq
      %v2467 = vshrl.u32 %v2466, 7
      %v2468 = vsub.s32 %v2215, %v2467
      %v2469 = vrot.slane %v1954, %v2468
      %v2470 = vsel %vm2220, %v2469, %v2465
      %v2471 = vlaneseq
      %v2472 = vshrl.u32 %v2471, 7
      %v2473 = vsub.s32 %v2222, %v2472
      %v2474 = vrot.slane %v1955, %v2473
      %v2475 = vsel %vm2227, %v2474, %v2470
      %v2476 = vlaneseq
      %v2477 = vshrl.u32 %v2476, 7
      %v2478 = vsub.s32 %v2229, %v2477
      %v2479 = vrot.slane %v1956, %v2478
      %v2480 = vsel %vm2234, %v2479, %v2475
      %v2481 = vlaneseq
      %v2482 = vshrl.u32 %v2481, 7
      %v2483 = vsub.s32 %v2236, %v2482
      %v2484 = vrot.slane %v1957, %v2483
      %v2485 = vsel %vm2241, %v2484, %v2480
      %v2486 = vlaneseq
      %v2487 = vshrl.u32 %v2486, 7
      %v2488 = vsub.s32 %v2243, %v2487
      %v2489 = vrot.slane %v1958, %v2488
      %v2490 = vsel %vm2248, %v2489, %v2485
      %v2491 = vlaneseq
      %v2492 = vshrl.u32 %v2491, 7
      %v2493 = vsub.s32 %v2250, %v2492
      %v2494 = vrot.slane %v1959, %v2493
      %v2495 = vsel %vm2255, %v2494, %v2490
      %v2496 = vlaneseq
      %v2497 = vshrl.u32 %v2496, 7
      %v2498 = vsub.s32 %v2257, %v2497
      %v2499 = vrot.slane %v1960, %v2498
      %v2500 = vsel %vm2262, %v2499, %v2495
      %v2501 = vlaneseq
      %v2502 = vshrl.u32 %v2501, 7
      %v2503 = vsub.s32 %v2154, %v2502
      %v2504 = vrot.slane %v1961, %v2503
      %v2505 = vlaneseq
      %v2506 = vshrl.u32 %v2505, 7
      %v2507 = vsub.s32 %v2159, %v2506
      %v2508 = vrot.slane %v1962, %v2507
      %v2509 = vsel %vm2164, %v2508, %v2504
      %v2510 = vlaneseq
      %v2511 = vshrl.u32 %v2510, 7
      %v2512 = vsub.s32 %v2166, %v2511
      %v2513 = vrot.slane %v1963, %v2512
      %v2514 = vsel %vm2171, %v2513, %v2509
      %v2515 = vlaneseq
      %v2516 = vshrl.u32 %v2515, 7
      %v2517 = vsub.s32 %v2173, %v2516
      %v2518 = vrot.slane %v1964, %v2517
      %v2519 = vsel %vm2178, %v2518, %v2514
      %v2520 = vlaneseq
      %v2521 = vshrl.u32 %v2520, 7
      %v2522 = vsub.s32 %v2180, %v2521
      %v2523 = vrot.slane %v1965, %v2522
      %v2524 = vsel %vm2185, %v2523, %v2519
      %v2525 = vlaneseq
      %v2526 = vshrl.u32 %v2525, 7
      %v2527 = vsub.s32 %v2187, %v2526
      %v2528 = vrot.slane %v1966, %v2527
      %v2529 = vsel %vm2192, %v2528, %v2524
      %v2530 = vlaneseq
      %v2531 = vshrl.u32 %v2530, 7
      %v2532 = vsub.s32 %v2194, %v2531
      %v2533 = vrot.slane %v1967, %v2532
      %v2534 = vsel %vm2199, %v2533, %v2529
      %v2535 = vlaneseq
      %v2536 = vshrl.u32 %v2535, 7
      %v2537 = vsub.s32 %v2201, %v2536
      %v2538 = vrot.slane %v1968, %v2537
      %v2539 = vsel %vm2206, %v2538, %v2534
      %v2540 = vlaneseq
      %v2541 = vshrl.u32 %v2540, 7
      %v2542 = vsub.s32 %v2208, %v2541
      %v2543 = vrot.slane %v1969, %v2542
      %v2544 = vsel %vm2213, %v2543, %v2539
      %v2545 = vlaneseq
      %v2546 = vshrl.u32 %v2545, 7
      %v2547 = vsub.s32 %v2215, %v2546
      %v2548 = vrot.slane %v1970, %v2547
      %v2549 = vsel %vm2220, %v2548, %v2544
      %v2550 = vlaneseq
      %v2551 = vshrl.u32 %v2550, 7
      %v2552 = vsub.s32 %v2222, %v2551
      %v2553 = vrot.slane %v1971, %v2552
      %v2554 = vsel %vm2227, %v2553, %v2549
      %v2555 = vlaneseq
      %v2556 = vshrl.u32 %v2555, 7
      %v2557 = vsub.s32 %v2229, %v2556
      %v2558 = vrot.slane %v1972, %v2557
      %v2559 = vsel %vm2234, %v2558, %v2554
      %v2560 = vlaneseq
      %v2561 = vshrl.u32 %v2560, 7
      %v2562 = vsub.s32 %v2236, %v2561
      %v2563 = vrot.slane %v1973, %v2562
      %v2564 = vsel %vm2241, %v2563, %v2559
      %v2565 = vlaneseq
      %v2566 = vshrl.u32 %v2565, 7
      %v2567 = vsub.s32 %v2243, %v2566
      %v2568 = vrot.slane %v1974, %v2567
      %v2569 = vsel %vm2248, %v2568, %v2564
      %v2570 = vlaneseq
      %v2571 = vshrl.u32 %v2570, 7
      %v2572 = vsub.s32 %v2250, %v2571
      %v2573 = vrot.slane %v1975, %v2572
      %v2574 = vsel %vm2255, %v2573, %v2569
      %v2575 = vlaneseq
      %v2576 = vshrl.u32 %v2575, 7
      %v2577 = vsub.s32 %v2257, %v2576
      %v2578 = vrot.slane %v1976, %v2577
      %v2579 = vsel %vm2262, %v2578, %v2574
      %v2580 = vlaneseq
      %v2581 = vshrl.u32 %v2580, 7
      %v2582 = vsub.s32 %v2154, %v2581
      %v2583 = vrot.slane %v1977, %v2582
      %v2584 = vlaneseq
      %v2585 = vshrl.u32 %v2584, 7
      %v2586 = vsub.s32 %v2159, %v2585
      %v2587 = vrot.slane %v1978, %v2586
      %v2588 = vsel %vm2164, %v2587, %v2583
      %v2589 = vlaneseq
      %v2590 = vshrl.u32 %v2589, 7
      %v2591 = vsub.s32 %v2166, %v2590
      %v2592 = vrot.slane %v1979, %v2591
      %v2593 = vsel %vm2171, %v2592, %v2588
      %v2594 = vlaneseq
      %v2595 = vshrl.u32 %v2594, 7
      %v2596 = vsub.s32 %v2173, %v2595
      %v2597 = vrot.slane %v1980, %v2596
      %v2598 = vsel %vm2178, %v2597, %v2593
      %v2599 = vlaneseq
      %v2600 = vshrl.u32 %v2599, 7
      %v2601 = vsub.s32 %v2180, %v2600
      %v2602 = vrot.slane %v1981, %v2601
      %v2603 = vsel %vm2185, %v2602, %v2598
      %v2604 = vlaneseq
      %v2605 = vshrl.u32 %v2604, 7
      %v2606 = vsub.s32 %v2187, %v2605
      %v2607 = vrot.slane %v1982, %v2606
      %v2608 = vsel %vm2192, %v2607, %v2603
      %v2609 = vlaneseq
      %v2610 = vshrl.u32 %v2609, 7
      %v2611 = vsub.s32 %v2194, %v2610
      %v2612 = vrot.slane %v1983, %v2611
      %v2613 = vsel %vm2199, %v2612, %v2608
      %v2614 = vlaneseq
      %v2615 = vshrl.u32 %v2614, 7
      %v2616 = vsub.s32 %v2201, %v2615
      %v2617 = vrot.slane %v1984, %v2616
      %v2618 = vsel %vm2206, %v2617, %v2613
      %v2619 = vlaneseq
      %v2620 = vshrl.u32 %v2619, 7
      %v2621 = vsub.s32 %v2208, %v2620
      %v2622 = vrot.slane %v1985, %v2621
      %v2623 = vsel %vm2213, %v2622, %v2618
      %v2624 = vlaneseq
      %v2625 = vshrl.u32 %v2624, 7
      %v2626 = vsub.s32 %v2215, %v2625
      %v2627 = vrot.slane %v1986, %v2626
      %v2628 = vsel %vm2220, %v2627, %v2623
      %v2629 = vlaneseq
      %v2630 = vshrl.u32 %v2629, 7
      %v2631 = vsub.s32 %v2222, %v2630
      %v2632 = vrot.slane %v1987, %v2631
      %v2633 = vsel %vm2227, %v2632, %v2628
      %v2634 = vlaneseq
      %v2635 = vshrl.u32 %v2634, 7
      %v2636 = vsub.s32 %v2229, %v2635
      %v2637 = vrot.slane %v1988, %v2636
      %v2638 = vsel %vm2234, %v2637, %v2633
      %v2639 = vlaneseq
      %v2640 = vshrl.u32 %v2639, 7
      %v2641 = vsub.s32 %v2236, %v2640
      %v2642 = vrot.slane %v1989, %v2641
      %v2643 = vsel %vm2241, %v2642, %v2638
      %v2644 = vlaneseq
      %v2645 = vshrl.u32 %v2644, 7
      %v2646 = vsub.s32 %v2243, %v2645
      %v2647 = vrot.slane %v1990, %v2646
      %v2648 = vsel %vm2248, %v2647, %v2643
      %v2649 = vlaneseq
      %v2650 = vshrl.u32 %v2649, 7
      %v2651 = vsub.s32 %v2250, %v2650
      %v2652 = vrot.slane %v1991, %v2651
      %v2653 = vsel %vm2255, %v2652, %v2648
      %v2654 = vlaneseq
      %v2655 = vshrl.u32 %v2654, 7
      %v2656 = vsub.s32 %v2257, %v2655
      %v2657 = vrot.slane %v1992, %v2656
      %v2658 = vsel %vm2262, %v2657, %v2653
      %v2659 = vlaneseq
      %v2660 = vshrl.u32 %v2659, 7
      %v2661 = vsub.s32 %v2154, %v2660
      %v2662 = vrot.slane %v1993, %v2661
      %v2663 = vlaneseq
      %v2664 = vshrl.u32 %v2663, 7
      %v2665 = vsub.s32 %v2159, %v2664
      %v2666 = vrot.slane %v1994, %v2665
      %v2667 = vsel %vm2164, %v2666, %v2662
      %v2668 = vlaneseq
      %v2669 = vshrl.u32 %v2668, 7
      %v2670 = vsub.s32 %v2166, %v2669
      %v2671 = vrot.slane %v1995, %v2670
      %v2672 = vsel %vm2171, %v2671, %v2667
      %v2673 = vlaneseq
      %v2674 = vshrl.u32 %v2673, 7
      %v2675 = vsub.s32 %v2173, %v2674
      %v2676 = vrot.slane %v1996, %v2675
      %v2677 = vsel %vm2178, %v2676, %v2672
      %v2678 = vlaneseq
      %v2679 = vshrl.u32 %v2678, 7
      %v2680 = vsub.s32 %v2180, %v2679
      %v2681 = vrot.slane %v1997, %v2680
      %v2682 = vsel %vm2185, %v2681, %v2677
      %v2683 = vlaneseq
      %v2684 = vshrl.u32 %v2683, 7
      %v2685 = vsub.s32 %v2187, %v2684
      %v2686 = vrot.slane %v1998, %v2685
      %v2687 = vsel %vm2192, %v2686, %v2682
      %v2688 = vlaneseq
      %v2689 = vshrl.u32 %v2688, 7
      %v2690 = vsub.s32 %v2194, %v2689
      %v2691 = vrot.slane %v1999, %v2690
      %v2692 = vsel %vm2199, %v2691, %v2687
      %v2693 = vlaneseq
      %v2694 = vshrl.u32 %v2693, 7
      %v2695 = vsub.s32 %v2201, %v2694
      %v2696 = vrot.slane %v2000, %v2695
      %v2697 = vsel %vm2206, %v2696, %v2692
      %v2698 = vlaneseq
      %v2699 = vshrl.u32 %v2698, 7
      %v2700 = vsub.s32 %v2208, %v2699
      %v2701 = vrot.slane %v2001, %v2700
      %v2702 = vsel %vm2213, %v2701, %v2697
      %v2703 = vlaneseq
      %v2704 = vshrl.u32 %v2703, 7
      %v2705 = vsub.s32 %v2215, %v2704
      %v2706 = vrot.slane %v2002, %v2705
      %v2707 = vsel %vm2220, %v2706, %v2702
      %v2708 = vlaneseq
      %v2709 = vshrl.u32 %v2708, 7
      %v2710 = vsub.s32 %v2222, %v2709
      %v2711 = vrot.slane %v2003, %v2710
      %v2712 = vsel %vm2227, %v2711, %v2707
      %v2713 = vlaneseq
      %v2714 = vshrl.u32 %v2713, 7
      %v2715 = vsub.s32 %v2229, %v2714
      %v2716 = vrot.slane %v2004, %v2715
      %v2717 = vsel %vm2234, %v2716, %v2712
      %v2718 = vlaneseq
      %v2719 = vshrl.u32 %v2718, 7
      %v2720 = vsub.s32 %v2236, %v2719
      %v2721 = vrot.slane %v2005, %v2720
      %v2722 = vsel %vm2241, %v2721, %v2717
      %v2723 = vlaneseq
      %v2724 = vshrl.u32 %v2723, 7
      %v2725 = vsub.s32 %v2243, %v2724
      %v2726 = vrot.slane %v2006, %v2725
      %v2727 = vsel %vm2248, %v2726, %v2722
      %v2728 = vlaneseq
      %v2729 = vshrl.u32 %v2728, 7
      %v2730 = vsub.s32 %v2250, %v2729
      %v2731 = vrot.slane %v2007, %v2730
      %v2732 = vsel %vm2255, %v2731, %v2727
      %v2733 = vlaneseq
      %v2734 = vshrl.u32 %v2733, 7
      %v2735 = vsub.s32 %v2257, %v2734
      %v2736 = vrot.slane %v2008, %v2735
      %v2737 = vsel %vm2262, %v2736, %v2732
      %v2738 = vlaneseq
      %v2739 = vshrl.u32 %v2738, 7
      %v2740 = vsub.s32 %v2154, %v2739
      %v2741 = vrot.slane %v2009, %v2740
      %v2742 = vlaneseq
      %v2743 = vshrl.u32 %v2742, 7
      %v2744 = vsub.s32 %v2159, %v2743
      %v2745 = vrot.slane %v2010, %v2744
      %v2746 = vsel %vm2164, %v2745, %v2741
      %v2747 = vlaneseq
      %v2748 = vshrl.u32 %v2747, 7
      %v2749 = vsub.s32 %v2166, %v2748
      %v2750 = vrot.slane %v2011, %v2749
      %v2751 = vsel %vm2171, %v2750, %v2746
      %v2752 = vlaneseq
      %v2753 = vshrl.u32 %v2752, 7
      %v2754 = vsub.s32 %v2173, %v2753
      %v2755 = vrot.slane %v2012, %v2754
      %v2756 = vsel %vm2178, %v2755, %v2751
      %v2757 = vlaneseq
      %v2758 = vshrl.u32 %v2757, 7
      %v2759 = vsub.s32 %v2180, %v2758
      %v2760 = vrot.slane %v2013, %v2759
      %v2761 = vsel %vm2185, %v2760, %v2756
      %v2762 = vlaneseq
      %v2763 = vshrl.u32 %v2762, 7
      %v2764 = vsub.s32 %v2187, %v2763
      %v2765 = vrot.slane %v2014, %v2764
      %v2766 = vsel %vm2192, %v2765, %v2761
      %v2767 = vlaneseq
      %v2768 = vshrl.u32 %v2767, 7
      %v2769 = vsub.s32 %v2194, %v2768
      %v2770 = vrot.slane %v2015, %v2769
      %v2771 = vsel %vm2199, %v2770, %v2766
      %v2772 = vlaneseq
      %v2773 = vshrl.u32 %v2772, 7
      %v2774 = vsub.s32 %v2201, %v2773
      %v2775 = vrot.slane %v2016, %v2774
      %v2776 = vsel %vm2206, %v2775, %v2771
      %v2777 = vlaneseq
      %v2778 = vshrl.u32 %v2777, 7
      %v2779 = vsub.s32 %v2208, %v2778
      %v2780 = vrot.slane %v2017, %v2779
      %v2781 = vsel %vm2213, %v2780, %v2776
      %v2782 = vlaneseq
      %v2783 = vshrl.u32 %v2782, 7
      %v2784 = vsub.s32 %v2215, %v2783
      %v2785 = vrot.slane %v2018, %v2784
      %v2786 = vsel %vm2220, %v2785, %v2781
      %v2787 = vlaneseq
      %v2788 = vshrl.u32 %v2787, 7
      %v2789 = vsub.s32 %v2222, %v2788
      %v2790 = vrot.slane %v2019, %v2789
      %v2791 = vsel %vm2227, %v2790, %v2786
      %v2792 = vlaneseq
      %v2793 = vshrl.u32 %v2792, 7
      %v2794 = vsub.s32 %v2229, %v2793
      %v2795 = vrot.slane %v2020, %v2794
      %v2796 = vsel %vm2234, %v2795, %v2791
      %v2797 = vlaneseq
      %v2798 = vshrl.u32 %v2797, 7
      %v2799 = vsub.s32 %v2236, %v2798
      %v2800 = vrot.slane %v2021, %v2799
      %v2801 = vsel %vm2241, %v2800, %v2796
      %v2802 = vlaneseq
      %v2803 = vshrl.u32 %v2802, 7
      %v2804 = vsub.s32 %v2243, %v2803
      %v2805 = vrot.slane %v2022, %v2804
      %v2806 = vsel %vm2248, %v2805, %v2801
      %v2807 = vlaneseq
      %v2808 = vshrl.u32 %v2807, 7
      %v2809 = vsub.s32 %v2250, %v2808
      %v2810 = vrot.slane %v2023, %v2809
      %v2811 = vsel %vm2255, %v2810, %v2806
      %v2812 = vlaneseq
      %v2813 = vshrl.u32 %v2812, 7
      %v2814 = vsub.s32 %v2257, %v2813
      %v2815 = vrot.slane %v2024, %v2814
      %v2816 = vsel %vm2262, %v2815, %v2811
      %v2817 = vlaneseq
      %v2818 = vshrl.u32 %v2817, 7
      %v2819 = vsub.s32 %v2154, %v2818
      %v2820 = vrot.slane %v2025, %v2819
      %v2821 = vlaneseq
      %v2822 = vshrl.u32 %v2821, 7
      %v2823 = vsub.s32 %v2159, %v2822
      %v2824 = vrot.slane %v2026, %v2823
      %v2825 = vsel %vm2164, %v2824, %v2820
      %v2826 = vlaneseq
      %v2827 = vshrl.u32 %v2826, 7
      %v2828 = vsub.s32 %v2166, %v2827
      %v2829 = vrot.slane %v2027, %v2828
      %v2830 = vsel %vm2171, %v2829, %v2825
      %v2831 = vlaneseq
      %v2832 = vshrl.u32 %v2831, 7
      %v2833 = vsub.s32 %v2173, %v2832
      %v2834 = vrot.slane %v2028, %v2833
      %v2835 = vsel %vm2178, %v2834, %v2830
      %v2836 = vlaneseq
      %v2837 = vshrl.u32 %v2836, 7
      %v2838 = vsub.s32 %v2180, %v2837
      %v2839 = vrot.slane %v2029, %v2838
      %v2840 = vsel %vm2185, %v2839, %v2835
      %v2841 = vlaneseq
      %v2842 = vshrl.u32 %v2841, 7
      %v2843 = vsub.s32 %v2187, %v2842
      %v2844 = vrot.slane %v2030, %v2843
      %v2845 = vsel %vm2192, %v2844, %v2840
      %v2846 = vlaneseq
      %v2847 = vshrl.u32 %v2846, 7
      %v2848 = vsub.s32 %v2194, %v2847
      %v2849 = vrot.slane %v2031, %v2848
      %v2850 = vsel %vm2199, %v2849, %v2845
      %v2851 = vlaneseq
      %v2852 = vshrl.u32 %v2851, 7
      %v2853 = vsub.s32 %v2201, %v2852
      %v2854 = vrot.slane %v2032, %v2853
      %v2855 = vsel %vm2206, %v2854, %v2850
      %v2856 = vlaneseq
      %v2857 = vshrl.u32 %v2856, 7
      %v2858 = vsub.s32 %v2208, %v2857
      %v2859 = vrot.slane %v2033, %v2858
      %v2860 = vsel %vm2213, %v2859, %v2855
      %v2861 = vlaneseq
      %v2862 = vshrl.u32 %v2861, 7
      %v2863 = vsub.s32 %v2215, %v2862
      %v2864 = vrot.slane %v2034, %v2863
      %v2865 = vsel %vm2220, %v2864, %v2860
      %v2866 = vlaneseq
      %v2867 = vshrl.u32 %v2866, 7
      %v2868 = vsub.s32 %v2222, %v2867
      %v2869 = vrot.slane %v2035, %v2868
      %v2870 = vsel %vm2227, %v2869, %v2865
      %v2871 = vlaneseq
      %v2872 = vshrl.u32 %v2871, 7
      %v2873 = vsub.s32 %v2229, %v2872
      %v2874 = vrot.slane %v2036, %v2873
      %v2875 = vsel %vm2234, %v2874, %v2870
      %v2876 = vlaneseq
      %v2877 = vshrl.u32 %v2876, 7
      %v2878 = vsub.s32 %v2236, %v2877
      %v2879 = vrot.slane %v2037, %v2878
      %v2880 = vsel %vm2241, %v2879, %v2875
      %v2881 = vlaneseq
      %v2882 = vshrl.u32 %v2881, 7
      %v2883 = vsub.s32 %v2243, %v2882
      %v2884 = vrot.slane %v2038, %v2883
      %v2885 = vsel %vm2248, %v2884, %v2880
      %v2886 = vlaneseq
      %v2887 = vshrl.u32 %v2886, 7
      %v2888 = vsub.s32 %v2250, %v2887
      %v2889 = vrot.slane %v2039, %v2888
      %v2890 = vsel %vm2255, %v2889, %v2885
      %v2891 = vlaneseq
      %v2892 = vshrl.u32 %v2891, 7
      %v2893 = vsub.s32 %v2257, %v2892
      %v2894 = vrot.slane %v2040, %v2893
      %v2895 = vsel %vm2262, %v2894, %v2890
      %v2896 = vlaneseq
      %v2897 = vshrl.u32 %v2896, 7
      %v2898 = vsub.s32 %v2154, %v2897
      %v2899 = vrot.slane %v2041, %v2898
      %v2900 = vlaneseq
      %v2901 = vshrl.u32 %v2900, 7
      %v2902 = vsub.s32 %v2159, %v2901
      %v2903 = vrot.slane %v2042, %v2902
      %v2904 = vsel %vm2164, %v2903, %v2899
      %v2905 = vlaneseq
      %v2906 = vshrl.u32 %v2905, 7
      %v2907 = vsub.s32 %v2166, %v2906
      %v2908 = vrot.slane %v2043, %v2907
      %v2909 = vsel %vm2171, %v2908, %v2904
      %v2910 = vlaneseq
      %v2911 = vshrl.u32 %v2910, 7
      %v2912 = vsub.s32 %v2173, %v2911
      %v2913 = vrot.slane %v2044, %v2912
      %v2914 = vsel %vm2178, %v2913, %v2909
      %v2915 = vlaneseq
      %v2916 = vshrl.u32 %v2915, 7
      %v2917 = vsub.s32 %v2180, %v2916
      %v2918 = vrot.slane %v2045, %v2917
      %v2919 = vsel %vm2185, %v2918, %v2914
      %v2920 = vlaneseq
      %v2921 = vshrl.u32 %v2920, 7
      %v2922 = vsub.s32 %v2187, %v2921
      %v2923 = vrot.slane %v2046, %v2922
      %v2924 = vsel %vm2192, %v2923, %v2919
      %v2925 = vlaneseq
      %v2926 = vshrl.u32 %v2925, 7
      %v2927 = vsub.s32 %v2194, %v2926
      %v2928 = vrot.slane %v2047, %v2927
      %v2929 = vsel %vm2199, %v2928, %v2924
      %v2930 = vlaneseq
      %v2931 = vshrl.u32 %v2930, 7
      %v2932 = vsub.s32 %v2201, %v2931
      %v2933 = vrot.slane %v2048, %v2932
      %v2934 = vsel %vm2206, %v2933, %v2929
      %v2935 = vlaneseq
      %v2936 = vshrl.u32 %v2935, 7
      %v2937 = vsub.s32 %v2208, %v2936
      %v2938 = vrot.slane %v2049, %v2937
      %v2939 = vsel %vm2213, %v2938, %v2934
      %v2940 = vlaneseq
      %v2941 = vshrl.u32 %v2940, 7
      %v2942 = vsub.s32 %v2215, %v2941
      %v2943 = vrot.slane %v2050, %v2942
      %v2944 = vsel %vm2220, %v2943, %v2939
      %v2945 = vlaneseq
      %v2946 = vshrl.u32 %v2945, 7
      %v2947 = vsub.s32 %v2222, %v2946
      %v2948 = vrot.slane %v2051, %v2947
      %v2949 = vsel %vm2227, %v2948, %v2944
      %v2950 = vlaneseq
      %v2951 = vshrl.u32 %v2950, 7
      %v2952 = vsub.s32 %v2229, %v2951
      %v2953 = vrot.slane %v2052, %v2952
      %v2954 = vsel %vm2234, %v2953, %v2949
      %v2955 = vlaneseq
      %v2956 = vshrl.u32 %v2955, 7
      %v2957 = vsub.s32 %v2236, %v2956
      %v2958 = vrot.slane %v2053, %v2957
      %v2959 = vsel %vm2241, %v2958, %v2954
      %v2960 = vlaneseq
      %v2961 = vshrl.u32 %v2960, 7
      %v2962 = vsub.s32 %v2243, %v2961
      %v2963 = vrot.slane %v2054, %v2962
      %v2964 = vsel %vm2248, %v2963, %v2959
      %v2965 = vlaneseq
      %v2966 = vshrl.u32 %v2965, 7
      %v2967 = vsub.s32 %v2250, %v2966
      %v2968 = vrot.slane %v2055, %v2967
      %v2969 = vsel %vm2255, %v2968, %v2964
      %v2970 = vlaneseq
      %v2971 = vshrl.u32 %v2970, 7
      %v2972 = vsub.s32 %v2257, %v2971
      %v2973 = vrot.slane %v2056, %v2972
      %v2974 = vsel %vm2262, %v2973, %v2969
      %v2975 = vlaneseq
      %v2976 = vshrl.u32 %v2975, 7
      %v2977 = vsub.s32 %v2154, %v2976
      %v2978 = vrot.slane %v2057, %v2977
      %v2979 = vlaneseq
      %v2980 = vshrl.u32 %v2979, 7
      %v2981 = vsub.s32 %v2159, %v2980
      %v2982 = vrot.slane %v2058, %v2981
      %v2983 = vsel %vm2164, %v2982, %v2978
      %v2984 = vlaneseq
      %v2985 = vshrl.u32 %v2984, 7
      %v2986 = vsub.s32 %v2166, %v2985
      %v2987 = vrot.slane %v2059, %v2986
      %v2988 = vsel %vm2171, %v2987, %v2983
      %v2989 = vlaneseq
      %v2990 = vshrl.u32 %v2989, 7
      %v2991 = vsub.s32 %v2173, %v2990
      %v2992 = vrot.slane %v2060, %v2991
      %v2993 = vsel %vm2178, %v2992, %v2988
      %v2994 = vlaneseq
      %v2995 = vshrl.u32 %v2994, 7
      %v2996 = vsub.s32 %v2180, %v2995
      %v2997 = vrot.slane %v2061, %v2996
      %v2998 = vsel %vm2185, %v2997, %v2993
      %v2999 = vlaneseq
      %v3000 = vshrl.u32 %v2999, 7
      %v3001 = vsub.s32 %v2187, %v3000
      %v3002 = vrot.slane %v2062, %v3001
      %v3003 = vsel %vm2192, %v3002, %v2998
      %v3004 = vlaneseq
      %v3005 = vshrl.u32 %v3004, 7
      %v3006 = vsub.s32 %v2194, %v3005
      %v3007 = vrot.slane %v2063, %v3006
      %v3008 = vsel %vm2199, %v3007, %v3003
      %v3009 = vlaneseq
      %v3010 = vshrl.u32 %v3009, 7
      %v3011 = vsub.s32 %v2201, %v3010
      %v3012 = vrot.slane %v2064, %v3011
      %v3013 = vsel %vm2206, %v3012, %v3008
      %v3014 = vlaneseq
      %v3015 = vshrl.u32 %v3014, 7
      %v3016 = vsub.s32 %v2208, %v3015
      %v3017 = vrot.slane %v2065, %v3016
      %v3018 = vsel %vm2213, %v3017, %v3013
      %v3019 = vlaneseq
      %v3020 = vshrl.u32 %v3019, 7
      %v3021 = vsub.s32 %v2215, %v3020
      %v3022 = vrot.slane %v2066, %v3021
      %v3023 = vsel %vm2220, %v3022, %v3018
      %v3024 = vlaneseq
      %v3025 = vshrl.u32 %v3024, 7
      %v3026 = vsub.s32 %v2222, %v3025
      %v3027 = vrot.slane %v2067, %v3026
      %v3028 = vsel %vm2227, %v3027, %v3023
      %v3029 = vlaneseq
      %v3030 = vshrl.u32 %v3029, 7
      %v3031 = vsub.s32 %v2229, %v3030
      %v3032 = vrot.slane %v2068, %v3031
      %v3033 = vsel %vm2234, %v3032, %v3028
      %v3034 = vlaneseq
      %v3035 = vshrl.u32 %v3034, 7
      %v3036 = vsub.s32 %v2236, %v3035
      %v3037 = vrot.slane %v2069, %v3036
      %v3038 = vsel %vm2241, %v3037, %v3033
      %v3039 = vlaneseq
      %v3040 = vshrl.u32 %v3039, 7
      %v3041 = vsub.s32 %v2243, %v3040
      %v3042 = vrot.slane %v2070, %v3041
      %v3043 = vsel %vm2248, %v3042, %v3038
      %v3044 = vlaneseq
      %v3045 = vshrl.u32 %v3044, 7
      %v3046 = vsub.s32 %v2250, %v3045
      %v3047 = vrot.slane %v2071, %v3046
      %v3048 = vsel %vm2255, %v3047, %v3043
      %v3049 = vlaneseq
      %v3050 = vshrl.u32 %v3049, 7
      %v3051 = vsub.s32 %v2257, %v3050
      %v3052 = vrot.slane %v2072, %v3051
      %v3053 = vsel %vm2262, %v3052, %v3048
      %v3054 = vlaneseq
      %v3055 = vshrl.u32 %v3054, 7
      %v3056 = vsub.s32 %v2154, %v3055
      %v3057 = vrot.slane %v2073, %v3056
      %v3058 = vlaneseq
      %v3059 = vshrl.u32 %v3058, 7
      %v3060 = vsub.s32 %v2159, %v3059
      %v3061 = vrot.slane %v2074, %v3060
      %v3062 = vsel %vm2164, %v3061, %v3057
      %v3063 = vlaneseq
      %v3064 = vshrl.u32 %v3063, 7
      %v3065 = vsub.s32 %v2166, %v3064
      %v3066 = vrot.slane %v2075, %v3065
      %v3067 = vsel %vm2171, %v3066, %v3062
      %v3068 = vlaneseq
      %v3069 = vshrl.u32 %v3068, 7
      %v3070 = vsub.s32 %v2173, %v3069
      %v3071 = vrot.slane %v2076, %v3070
      %v3072 = vsel %vm2178, %v3071, %v3067
      %v3073 = vlaneseq
      %v3074 = vshrl.u32 %v3073, 7
      %v3075 = vsub.s32 %v2180, %v3074
      %v3076 = vrot.slane %v2077, %v3075
      %v3077 = vsel %vm2185, %v3076, %v3072
      %v3078 = vlaneseq
      %v3079 = vshrl.u32 %v3078, 7
      %v3080 = vsub.s32 %v2187, %v3079
      %v3081 = vrot.slane %v2078, %v3080
      %v3082 = vsel %vm2192, %v3081, %v3077
      %v3083 = vlaneseq
      %v3084 = vshrl.u32 %v3083, 7
      %v3085 = vsub.s32 %v2194, %v3084
      %v3086 = vrot.slane %v2079, %v3085
      %v3087 = vsel %vm2199, %v3086, %v3082
      %v3088 = vlaneseq
      %v3089 = vshrl.u32 %v3088, 7
      %v3090 = vsub.s32 %v2201, %v3089
      %v3091 = vrot.slane %v2080, %v3090
      %v3092 = vsel %vm2206, %v3091, %v3087
      %v3093 = vlaneseq
      %v3094 = vshrl.u32 %v3093, 7
      %v3095 = vsub.s32 %v2208, %v3094
      %v3096 = vrot.slane %v2081, %v3095
      %v3097 = vsel %vm2213, %v3096, %v3092
      %v3098 = vlaneseq
      %v3099 = vshrl.u32 %v3098, 7
      %v3100 = vsub.s32 %v2215, %v3099
      %v3101 = vrot.slane %v2082, %v3100
      %v3102 = vsel %vm2220, %v3101, %v3097
      %v3103 = vlaneseq
      %v3104 = vshrl.u32 %v3103, 7
      %v3105 = vsub.s32 %v2222, %v3104
      %v3106 = vrot.slane %v2083, %v3105
      %v3107 = vsel %vm2227, %v3106, %v3102
      %v3108 = vlaneseq
      %v3109 = vshrl.u32 %v3108, 7
      %v3110 = vsub.s32 %v2229, %v3109
      %v3111 = vrot.slane %v2084, %v3110
      %v3112 = vsel %vm2234, %v3111, %v3107
      %v3113 = vlaneseq
      %v3114 = vshrl.u32 %v3113, 7
      %v3115 = vsub.s32 %v2236, %v3114
      %v3116 = vrot.slane %v2085, %v3115
      %v3117 = vsel %vm2241, %v3116, %v3112
      %v3118 = vlaneseq
      %v3119 = vshrl.u32 %v3118, 7
      %v3120 = vsub.s32 %v2243, %v3119
      %v3121 = vrot.slane %v2086, %v3120
      %v3122 = vsel %vm2248, %v3121, %v3117
      %v3123 = vlaneseq
      %v3124 = vshrl.u32 %v3123, 7
      %v3125 = vsub.s32 %v2250, %v3124
      %v3126 = vrot.slane %v2087, %v3125
      %v3127 = vsel %vm2255, %v3126, %v3122
      %v3128 = vlaneseq
      %v3129 = vshrl.u32 %v3128, 7
      %v3130 = vsub.s32 %v2257, %v3129
      %v3131 = vrot.slane %v2088, %v3130
      %v3132 = vsel %vm2262, %v3131, %v3127
      %v3133 = vlaneseq
      %v3134 = vshrl.u32 %v3133, 7
      %v3135 = vsub.s32 %v2154, %v3134
      %v3136 = vrot.slane %v2089, %v3135
      %v3137 = vlaneseq
      %v3138 = vshrl.u32 %v3137, 7
      %v3139 = vsub.s32 %v2159, %v3138
      %v3140 = vrot.slane %v2090, %v3139
      %v3141 = vsel %vm2164, %v3140, %v3136
      %v3142 = vlaneseq
      %v3143 = vshrl.u32 %v3142, 7
      %v3144 = vsub.s32 %v2166, %v3143
      %v3145 = vrot.slane %v2091, %v3144
      %v3146 = vsel %vm2171, %v3145, %v3141
      %v3147 = vlaneseq
      %v3148 = vshrl.u32 %v3147, 7
      %v3149 = vsub.s32 %v2173, %v3148
      %v3150 = vrot.slane %v2092, %v3149
      %v3151 = vsel %vm2178, %v3150, %v3146
      %v3152 = vlaneseq
      %v3153 = vshrl.u32 %v3152, 7
      %v3154 = vsub.s32 %v2180, %v3153
      %v3155 = vrot.slane %v2093, %v3154
      %v3156 = vsel %vm2185, %v3155, %v3151
      %v3157 = vlaneseq
      %v3158 = vshrl.u32 %v3157, 7
      %v3159 = vsub.s32 %v2187, %v3158
      %v3160 = vrot.slane %v2094, %v3159
      %v3161 = vsel %vm2192, %v3160, %v3156
      %v3162 = vlaneseq
      %v3163 = vshrl.u32 %v3162, 7
      %v3164 = vsub.s32 %v2194, %v3163
      %v3165 = vrot.slane %v2095, %v3164
      %v3166 = vsel %vm2199, %v3165, %v3161
      %v3167 = vlaneseq
      %v3168 = vshrl.u32 %v3167, 7
      %v3169 = vsub.s32 %v2201, %v3168
      %v3170 = vrot.slane %v2096, %v3169
      %v3171 = vsel %vm2206, %v3170, %v3166
      %v3172 = vlaneseq
      %v3173 = vshrl.u32 %v3172, 7
      %v3174 = vsub.s32 %v2208, %v3173
      %v3175 = vrot.slane %v2097, %v3174
      %v3176 = vsel %vm2213, %v3175, %v3171
      %v3177 = vlaneseq
      %v3178 = vshrl.u32 %v3177, 7
      %v3179 = vsub.s32 %v2215, %v3178
      %v3180 = vrot.slane %v2098, %v3179
      %v3181 = vsel %vm2220, %v3180, %v3176
      %v3182 = vlaneseq
      %v3183 = vshrl.u32 %v3182, 7
      %v3184 = vsub.s32 %v2222, %v3183
      %v3185 = vrot.slane %v2099, %v3184
      %v3186 = vsel %vm2227, %v3185, %v3181
      %v3187 = vlaneseq
      %v3188 = vshrl.u32 %v3187, 7
      %v3189 = vsub.s32 %v2229, %v3188
      %v3190 = vrot.slane %v2100, %v3189
      %v3191 = vsel %vm2234, %v3190, %v3186
      %v3192 = vlaneseq
      %v3193 = vshrl.u32 %v3192, 7
      %v3194 = vsub.s32 %v2236, %v3193
      %v3195 = vrot.slane %v2101, %v3194
      %v3196 = vsel %vm2241, %v3195, %v3191
      %v3197 = vlaneseq
      %v3198 = vshrl.u32 %v3197, 7
      %v3199 = vsub.s32 %v2243, %v3198
      %v3200 = vrot.slane %v2102, %v3199
      %v3201 = vsel %vm2248, %v3200, %v3196
      %v3202 = vlaneseq
      %v3203 = vshrl.u32 %v3202, 7
      %v3204 = vsub.s32 %v2250, %v3203
      %v3205 = vrot.slane %v2103, %v3204
      %v3206 = vsel %vm2255, %v3205, %v3201
      %v3207 = vlaneseq
      %v3208 = vshrl.u32 %v3207, 7
      %v3209 = vsub.s32 %v2257, %v3208
      %v3210 = vrot.slane %v2104, %v3209
      %v3211 = vsel %vm2262, %v3210, %v3206
      %v3212 = vlaneseq
      %v3213 = vshrl.u32 %v3212, 7
      %v3214 = vsub.s32 %v2154, %v3213
      %v3215 = vrot.slane %v2105, %v3214
      %v3216 = vlaneseq
      %v3217 = vshrl.u32 %v3216, 7
      %v3218 = vsub.s32 %v2159, %v3217
      %v3219 = vrot.slane %v2106, %v3218
      %v3220 = vsel %vm2164, %v3219, %v3215
      %v3221 = vlaneseq
      %v3222 = vshrl.u32 %v3221, 7
      %v3223 = vsub.s32 %v2166, %v3222
      %v3224 = vrot.slane %v2107, %v3223
      %v3225 = vsel %vm2171, %v3224, %v3220
      %v3226 = vlaneseq
      %v3227 = vshrl.u32 %v3226, 7
      %v3228 = vsub.s32 %v2173, %v3227
      %v3229 = vrot.slane %v2108, %v3228
      %v3230 = vsel %vm2178, %v3229, %v3225
      %v3231 = vlaneseq
      %v3232 = vshrl.u32 %v3231, 7
      %v3233 = vsub.s32 %v2180, %v3232
      %v3234 = vrot.slane %v2109, %v3233
      %v3235 = vsel %vm2185, %v3234, %v3230
      %v3236 = vlaneseq
      %v3237 = vshrl.u32 %v3236, 7
      %v3238 = vsub.s32 %v2187, %v3237
      %v3239 = vrot.slane %v2110, %v3238
      %v3240 = vsel %vm2192, %v3239, %v3235
      %v3241 = vlaneseq
      %v3242 = vshrl.u32 %v3241, 7
      %v3243 = vsub.s32 %v2194, %v3242
      %v3244 = vrot.slane %v2111, %v3243
      %v3245 = vsel %vm2199, %v3244, %v3240
      %v3246 = vlaneseq
      %v3247 = vshrl.u32 %v3246, 7
      %v3248 = vsub.s32 %v2201, %v3247
      %v3249 = vrot.slane %v2112, %v3248
      %v3250 = vsel %vm2206, %v3249, %v3245
      %v3251 = vlaneseq
      %v3252 = vshrl.u32 %v3251, 7
      %v3253 = vsub.s32 %v2208, %v3252
      %v3254 = vrot.slane %v2113, %v3253
      %v3255 = vsel %vm2213, %v3254, %v3250
      %v3256 = vlaneseq
      %v3257 = vshrl.u32 %v3256, 7
      %v3258 = vsub.s32 %v2215, %v3257
      %v3259 = vrot.slane %v2114, %v3258
      %v3260 = vsel %vm2220, %v3259, %v3255
      %v3261 = vlaneseq
      %v3262 = vshrl.u32 %v3261, 7
      %v3263 = vsub.s32 %v2222, %v3262
      %v3264 = vrot.slane %v2115, %v3263
      %v3265 = vsel %vm2227, %v3264, %v3260
      %v3266 = vlaneseq
      %v3267 = vshrl.u32 %v3266, 7
      %v3268 = vsub.s32 %v2229, %v3267
      %v3269 = vrot.slane %v2116, %v3268
      %v3270 = vsel %vm2234, %v3269, %v3265
      %v3271 = vlaneseq
      %v3272 = vshrl.u32 %v3271, 7
      %v3273 = vsub.s32 %v2236, %v3272
      %v3274 = vrot.slane %v2117, %v3273
      %v3275 = vsel %vm2241, %v3274, %v3270
      %v3276 = vlaneseq
      %v3277 = vshrl.u32 %v3276, 7
      %v3278 = vsub.s32 %v2243, %v3277
      %v3279 = vrot.slane %v2118, %v3278
      %v3280 = vsel %vm2248, %v3279, %v3275
      %v3281 = vlaneseq
      %v3282 = vshrl.u32 %v3281, 7
      %v3283 = vsub.s32 %v2250, %v3282
      %v3284 = vrot.slane %v2119, %v3283
      %v3285 = vsel %vm2255, %v3284, %v3280
      %v3286 = vlaneseq
      %v3287 = vshrl.u32 %v3286, 7
      %v3288 = vsub.s32 %v2257, %v3287
      %v3289 = vrot.slane %v2120, %v3288
      %v3290 = vsel %vm2262, %v3289, %v3285
      %v3291 = vlaneseq
      %v3292 = vshrl.u32 %v3291, 7
      %v3293 = vsub.s32 %v2154, %v3292
      %v3294 = vrot.slane %v2121, %v3293
      %v3295 = vlaneseq
      %v3296 = vshrl.u32 %v3295, 7
      %v3297 = vsub.s32 %v2159, %v3296
      %v3298 = vrot.slane %v2122, %v3297
      %v3299 = vsel %vm2164, %v3298, %v3294
      %v3300 = vlaneseq
      %v3301 = vshrl.u32 %v3300, 7
      %v3302 = vsub.s32 %v2166, %v3301
      %v3303 = vrot.slane %v2123, %v3302
      %v3304 = vsel %vm2171, %v3303, %v3299
      %v3305 = vlaneseq
      %v3306 = vshrl.u32 %v3305, 7
      %v3307 = vsub.s32 %v2173, %v3306
      %v3308 = vrot.slane %v2124, %v3307
      %v3309 = vsel %vm2178, %v3308, %v3304
      %v3310 = vlaneseq
      %v3311 = vshrl.u32 %v3310, 7
      %v3312 = vsub.s32 %v2180, %v3311
      %v3313 = vrot.slane %v2125, %v3312
      %v3314 = vsel %vm2185, %v3313, %v3309
      %v3315 = vlaneseq
      %v3316 = vshrl.u32 %v3315, 7
      %v3317 = vsub.s32 %v2187, %v3316
      %v3318 = vrot.slane %v2126, %v3317
      %v3319 = vsel %vm2192, %v3318, %v3314
      %v3320 = vlaneseq
      %v3321 = vshrl.u32 %v3320, 7
      %v3322 = vsub.s32 %v2194, %v3321
      %v3323 = vrot.slane %v2127, %v3322
      %v3324 = vsel %vm2199, %v3323, %v3319
      %v3325 = vlaneseq
      %v3326 = vshrl.u32 %v3325, 7
      %v3327 = vsub.s32 %v2201, %v3326
      %v3328 = vrot.slane %v2128, %v3327
      %v3329 = vsel %vm2206, %v3328, %v3324
      %v3330 = vlaneseq
      %v3331 = vshrl.u32 %v3330, 7
      %v3332 = vsub.s32 %v2208, %v3331
      %v3333 = vrot.slane %v2129, %v3332
      %v3334 = vsel %vm2213, %v3333, %v3329
      %v3335 = vlaneseq
      %v3336 = vshrl.u32 %v3335, 7
      %v3337 = vsub.s32 %v2215, %v3336
      %v3338 = vrot.slane %v2130, %v3337
      %v3339 = vsel %vm2220, %v3338, %v3334
      %v3340 = vlaneseq
      %v3341 = vshrl.u32 %v3340, 7
      %v3342 = vsub.s32 %v2222, %v3341
      %v3343 = vrot.slane %v2131, %v3342
      %v3344 = vsel %vm2227, %v3343, %v3339
      %v3345 = vlaneseq
      %v3346 = vshrl.u32 %v3345, 7
      %v3347 = vsub.s32 %v2229, %v3346
      %v3348 = vrot.slane %v2132, %v3347
      %v3349 = vsel %vm2234, %v3348, %v3344
      %v3350 = vlaneseq
      %v3351 = vshrl.u32 %v3350, 7
      %v3352 = vsub.s32 %v2236, %v3351
      %v3353 = vrot.slane %v2133, %v3352
      %v3354 = vsel %vm2241, %v3353, %v3349
      %v3355 = vlaneseq
      %v3356 = vshrl.u32 %v3355, 7
      %v3357 = vsub.s32 %v2243, %v3356
      %v3358 = vrot.slane %v2134, %v3357
      %v3359 = vsel %vm2248, %v3358, %v3354
      %v3360 = vlaneseq
      %v3361 = vshrl.u32 %v3360, 7
      %v3362 = vsub.s32 %v2250, %v3361
      %v3363 = vrot.slane %v2135, %v3362
      %v3364 = vsel %vm2255, %v3363, %v3359
      %v3365 = vlaneseq
      %v3366 = vshrl.u32 %v3365, 7
      %v3367 = vsub.s32 %v2257, %v3366
      %v3368 = vrot.slane %v2136, %v3367
      %v3369 = vsel %vm2262, %v3368, %v3364
      %v3370 = vlaneseq
      %v3371 = vshrl.u32 %v3370, 7
      %v3372 = vsub.s32 %v2154, %v3371
      %v3373 = vrot.slane %v2137, %v3372
      %v3374 = vlaneseq
      %v3375 = vshrl.u32 %v3374, 7
      %v3376 = vsub.s32 %v2159, %v3375
      %v3377 = vrot.slane %v2138, %v3376
      %v3378 = vsel %vm2164, %v3377, %v3373
      %v3379 = vlaneseq
      %v3380 = vshrl.u32 %v3379, 7
      %v3381 = vsub.s32 %v2166, %v3380
      %v3382 = vrot.slane %v2139, %v3381
      %v3383 = vsel %vm2171, %v3382, %v3378
      %v3384 = vlaneseq
      %v3385 = vshrl.u32 %v3384, 7
      %v3386 = vsub.s32 %v2173, %v3385
      %v3387 = vrot.slane %v2140, %v3386
      %v3388 = vsel %vm2178, %v3387, %v3383
      %v3389 = vlaneseq
      %v3390 = vshrl.u32 %v3389, 7
      %v3391 = vsub.s32 %v2180, %v3390
      %v3392 = vrot.slane %v2141, %v3391
      %v3393 = vsel %vm2185, %v3392, %v3388
      %v3394 = vlaneseq
      %v3395 = vshrl.u32 %v3394, 7
      %v3396 = vsub.s32 %v2187, %v3395
      %v3397 = vrot.slane %v2142, %v3396
      %v3398 = vsel %vm2192, %v3397, %v3393
      %v3399 = vlaneseq
      %v3400 = vshrl.u32 %v3399, 7
      %v3401 = vsub.s32 %v2194, %v3400
      %v3402 = vrot.slane %v2143, %v3401
      %v3403 = vsel %vm2199, %v3402, %v3398
      %v3404 = vlaneseq
      %v3405 = vshrl.u32 %v3404, 7
      %v3406 = vsub.s32 %v2201, %v3405
      %v3407 = vrot.slane %v2144, %v3406
      %v3408 = vsel %vm2206, %v3407, %v3403
      %v3409 = vlaneseq
      %v3410 = vshrl.u32 %v3409, 7
      %v3411 = vsub.s32 %v2208, %v3410
      %v3412 = vrot.slane %v2145, %v3411
      %v3413 = vsel %vm2213, %v3412, %v3408
      %v3414 = vlaneseq
      %v3415 = vshrl.u32 %v3414, 7
      %v3416 = vsub.s32 %v2215, %v3415
      %v3417 = vrot.slane %v2146, %v3416
      %v3418 = vsel %vm2220, %v3417, %v3413
      %v3419 = vlaneseq
      %v3420 = vshrl.u32 %v3419, 7
      %v3421 = vsub.s32 %v2222, %v3420
      %v3422 = vrot.slane %v2147, %v3421
      %v3423 = vsel %vm2227, %v3422, %v3418
      %v3424 = vlaneseq
      %v3425 = vshrl.u32 %v3424, 7
      %v3426 = vsub.s32 %v2229, %v3425
      %v3427 = vrot.slane %v2148, %v3426
      %v3428 = vsel %vm2234, %v3427, %v3423
      %v3429 = vlaneseq
      %v3430 = vshrl.u32 %v3429, 7
      %v3431 = vsub.s32 %v2236, %v3430
      %v3432 = vrot.slane %v2149, %v3431
      %v3433 = vsel %vm2241, %v3432, %v3428
      %v3434 = vlaneseq
      %v3435 = vshrl.u32 %v3434, 7
      %v3436 = vsub.s32 %v2243, %v3435
      %v3437 = vrot.slane %v2150, %v3436
      %v3438 = vsel %vm2248, %v3437, %v3433
      %v3439 = vlaneseq
      %v3440 = vshrl.u32 %v3439, 7
      %v3441 = vsub.s32 %v2250, %v3440
      %v3442 = vrot.slane %v2151, %v3441
      %v3443 = vsel %vm2255, %v3442, %v3438
      %v3444 = vlaneseq
      %v3445 = vshrl.u32 %v3444, 7
      %v3446 = vsub.s32 %v2257, %v3445
      %v3447 = vrot.slane %v2152, %v3446
      %v3448 = vsel %vm2262, %v3447, %v3443
      %vm3449 = vcmask 1041409
      %v3450 = vsel %vm3449, %v2421, %v2263
      %vm3451 = vcmask 1042434
      %v3452 = vsel %vm3451, %v2579, %v3450
      %vm3453 = vcmask 1043459
      %v3454 = vsel %vm3453, %v2737, %v3452
      %vm3455 = vcmask 1044484
      %v3456 = vsel %vm3455, %v2895, %v3454
      %vm3457 = vcmask 1045509
      %v3458 = vsel %vm3457, %v3053, %v3456
      %vm3459 = vcmask 1046534
      %v3460 = vsel %vm3459, %v3211, %v3458
      %vm3461 = vcmask 1047559
      %v3462 = vsel %vm3461, %v3369, %v3460
      %v3463 = vsel %vm3449, %v2500, %v2342
      %v3464 = vsel %vm3451, %v2658, %v3463
      %v3465 = vsel %vm3453, %v2816, %v3464
      %v3466 = vsel %vm3455, %v2974, %v3465
      %v3467 = vsel %vm3457, %v3132, %v3466
      %v3468 = vsel %vm3459, %v3290, %v3467
      %v3469 = vsel %vm3461, %v3448, %v3468
      %v3470 = vpack.c.b16 %v3462, %v3462
      %v3471 = vpack.c.b16 %v3469, %v3469
      %v3506 = vunpack.c.l.b16 %v1608
      %v3507 = vunpack.c.l.b16 %v1609
      %v3508 = vunpack.c.l.b16 %v1610
      %v3509 = vunpack.c.l.b16 %v1611
      %v3510 = vunpack.c.l.b16 %v1612
      %v3511 = vunpack.c.l.b16 %v1613
      %v3512 = vunpack.c.l.b16 %v1614
      %v3513 = vunpack.c.l.b16 %v1615
      %v3514 = vunpack.c.l.b16 %v1616
      %v3515 = vunpack.c.l.b16 %v1617
      %v3516 = vunpack.c.l.b16 %v1618
      %v3517 = vunpack.c.l.b16 %v1619
      %v3518 = vunpack.c.l.b16 %v1620
      %v3519 = vunpack.c.l.b16 %v1621
      %v3520 = vunpack.c.l.b16 %v1622
      %v3521 = vunpack.c.l.b16 %v1623
      %v3522 = vunpack.c.l.b16 %v1624
      %v3523 = vunpack.c.l.b16 %v1625
      %v3524 = vunpack.c.l.b16 %v1626
      %v3525 = vunpack.c.l.b16 %v1627
      %v3526 = vunpack.c.l.b16 %v1628
      %v3527 = vunpack.c.l.b16 %v1629
      %v3528 = vunpack.c.l.b16 %v1630
      %v3529 = vunpack.c.l.b16 %v1631
      %v3530 = vunpack.c.l.b16 %v1632
      %v3531 = vunpack.c.l.b16 %v1633
      %v3532 = vunpack.c.l.b16 %v1634
      %v3533 = vunpack.c.l.b16 %v1635
      %v3534 = vunpack.c.l.b16 %v1636
      %v3535 = vunpack.c.l.b16 %v1637
      %v3536 = vunpack.c.l.b16 %v1638
      %v3537 = vunpack.c.l.b16 %v1639
      %v3538 = vpack.c.b16 %v3507, %v3506
      %v3539 = vpack.c.b16 %v3509, %v3508
      %v3540 = vpack.c.b16 %v3511, %v3510
      %v3541 = vpack.c.b16 %v3513, %v3512
      %v3542 = vpack.c.b16 %v3515, %v3514
      %v3543 = vpack.c.b16 %v3517, %v3516
      %v3544 = vpack.c.b16 %v3519, %v3518
      %v3545 = vpack.c.b16 %v3521, %v3520
      %v3546 = vpack.c.b16 %v3523, %v3522
      %v3547 = vpack.c.b16 %v3525, %v3524
      %v3548 = vpack.c.b16 %v3527, %v3526
      %v3549 = vpack.c.b16 %v3529, %v3528
      %v3550 = vpack.c.b16 %v3531, %v3530
      %v3551 = vpack.c.b16 %v3533, %v3532
      %v3552 = vpack.c.b16 %v3535, %v3534
      %v3553 = vpack.c.b16 %v3537, %v3536
      %3570 = vmatprep.subr.bf16.mxu0 0
      %3571 = vmatpush1.bf16.msra.mxu0 %v3545
      %3572 = vmatprep.subr.bf16.mxu0 0
      %3573 = vmatpush1.bf16.msra.mxu0 %v3544
      %3574 = vmatprep.subr.bf16.mxu0 0
      %3575 = vmatpush1.bf16.msra.mxu0 %v3543
      %3576 = vmatprep.subr.bf16.mxu0 0
      %3577 = vmatpush1.bf16.msra.mxu0 %v3542
      %3578 = vmatprep.subr.bf16.mxu0 0
      %3579 = vmatpush1.bf16.msra.mxu0 %v3541
      %3580 = vmatprep.subr.bf16.mxu0 0
      %3581 = vmatpush1.bf16.msra.mxu0 %v3540
      %3582 = vmatprep.subr.bf16.mxu0 0
      %3583 = vmatpush1.bf16.msra.mxu0 %v3539
      %3584 = vmatprep.subr.bf16.mxu0 0
      %3585 = vmatpush1.bf16.msra.mxu0 %v3538
      %3586 = vmatprep.subr.bf16.mxu0 0
      %3587 = vmatpush2.bf16.msra.mxu0 %v3553
      %3588 = vmatprep.subr.bf16.mxu0 0
      %3589 = vmatpush2.bf16.msra.mxu0 %v3552
      %3590 = vmatprep.subr.bf16.mxu0 0
      %3591 = vmatpush2.bf16.msra.mxu0 %v3551
      %3592 = vmatprep.subr.bf16.mxu0 0
      %3593 = vmatpush2.bf16.msra.mxu0 %v3550
      %3594 = vmatprep.subr.bf16.mxu0 0
      %3595 = vmatpush2.bf16.msra.mxu0 %v3549
      %3596 = vmatprep.subr.bf16.mxu0 0
      %3597 = vmatpush2.bf16.msra.mxu0 %v3548
      %3598 = vmatprep.subr.bf16.mxu0 0
      %3599 = vmatpush2.bf16.msra.mxu0 %v3547
      %3600 = vmatprep.subr.bf16.mxu0 0
      %3601 = vmatpush2.bf16.msra.mxu0 %v3546
      %3602 = vmatprep.mubr.bf16.mxu0 %v3471
      %3603 = vmatmul.mubr.bf16.gmra.mxu0 %v3470
      %v3604 = vpop.f32.mrf.mxu0
      %v3605 = vadd.f32 0.0, %v3604
      %v3606 = vpop.f32.mrf.mxu0
      %v3607 = vpop.f32.mrf.mxu0
      %v3608 = vpop.f32.mrf.mxu0
      %3609 = vdwg.mxu0
      %v3610 = vadd.f32 %v1640, %v3605
      %3611 = vst [vmem:[#allocation2] sm:$0xff] %v3610
      // Predicated region
      $region49: #{resnext_weighted_head.1} parent=43 // pred_check
        %p3612 = pneg %p284
      $region50: #{resnext_weighted_head.1} parent=43 // pred_check_branch
        %3614 = sbr.rel (%p3612) target = $region52
      $region51: #{resnext_weighted_head.1} parent=43 // pred_region
        %v3615 = vld [vmem:[#allocation2] sm:$0xff]
        %v3616 = vld [vmem:[%s3] sm:$0x1]
        %v3618 = vlaneseq
        %v3619 = vshrl.u32 %v3618, 7
        %v3620 = vsub.s32 0, %v3619
        %v3621 = vrot.slane %v3616, %v3620
        %v3623 = vadd.f32 %v3615, %v3621
        %v3624 = vmax.f32 %v3623, 0.0
        %v3625 = vpack.c.bf16 %v3624, %v3624
        %v3626 = vld [vmem:[%s4] sm:$0xf]
        %v3627 = vld [vmem:[%s4 + $0x4] sm:$0xf]
        %v3628 = vld [vmem:[%s4 + $0x8] sm:$0xf]
        %v3629 = vld [vmem:[%s4 + $0xc] sm:$0xf]
        %v3630 = vld [vmem:[%s4 + $0x10] sm:$0xf]
        %v3631 = vld [vmem:[%s4 + $0x14] sm:$0xf]
        %v3632 = vld [vmem:[%s4 + $0x18] sm:$0xf]
        %v3633 = vld [vmem:[%s4 + $0x1c] sm:$0xf]
        %v3634 = vld [vmem:[%s4 + $0x20] sm:$0xf]
        %v3635 = vld [vmem:[%s4 + $0x24] sm:$0xf]
        %v3636 = vld [vmem:[%s4 + $0x28] sm:$0xf]
        %v3637 = vld [vmem:[%s4 + $0x2c] sm:$0xf]
        %v3638 = vld [vmem:[%s4 + $0x30] sm:$0xf]
        %v3639 = vld [vmem:[%s4 + $0x34] sm:$0xf]
        %v3640 = vld [vmem:[%s4 + $0x38] sm:$0xf]
        %v3641 = vld [vmem:[%s4 + $0x3c] sm:$0xf]
        %v3642 = vld [vmem:[%s5] sm:$0x1]
        %v3644 = vlaneseq
        %v3645 = vshrl.u32 %v3644, 7
        %v3646 = vsub.s32 0, %v3645
        %v3647 = vrot.slane %v3642, %v3646
        %v3665 = vunpack.c.l.b16 %v3626
        %v3666 = vunpack.c.l.b16 %v3627
        %v3667 = vunpack.c.l.b16 %v3628
        %v3668 = vunpack.c.l.b16 %v3629
        %v3669 = vunpack.c.l.b16 %v3630
        %v3670 = vunpack.c.l.b16 %v3631
        %v3671 = vunpack.c.l.b16 %v3632
        %v3672 = vunpack.c.l.b16 %v3633
        %v3673 = vunpack.c.l.b16 %v3634
        %v3674 = vunpack.c.l.b16 %v3635
        %v3675 = vunpack.c.l.b16 %v3636
        %v3676 = vunpack.c.l.b16 %v3637
        %v3677 = vunpack.c.l.b16 %v3638
        %v3678 = vunpack.c.l.b16 %v3639
        %v3679 = vunpack.c.l.b16 %v3640
        %v3680 = vunpack.c.l.b16 %v3641
        %v3681 = vpack.c.b16 %v3666, %v3665
        %v3682 = vpack.c.b16 %v3668, %v3667
        %v3683 = vpack.c.b16 %v3670, %v3669
        %v3684 = vpack.c.b16 %v3672, %v3671
        %v3685 = vpack.c.b16 %v3674, %v3673
        %v3686 = vpack.c.b16 %v3676, %v3675
        %v3687 = vpack.c.b16 %v3678, %v3677
        %v3688 = vpack.c.b16 %v3680, %v3679
        %3697 = vmatprep.subr.bf16.mxu0 0
        %3698 = vmatpush1.bf16.msra.mxu0 %v3688
        %3699 = vmatprep.subr.bf16.mxu0 0
        %3700 = vmatpush1.bf16.msra.mxu0 %v3687
        %3701 = vmatprep.subr.bf16.mxu0 0
        %3702 = vmatpush1.bf16.msra.mxu0 %v3686
        %3703 = vmatprep.subr.bf16.mxu0 0
        %3704 = vmatpush1.bf16.msra.mxu0 %v3685
        %3705 = vmatprep.subr.bf16.mxu0 0
        %3706 = vmatpush1.bf16.msra.mxu0 %v3684
        %3707 = vmatprep.subr.bf16.mxu0 0
        %3708 = vmatpush1.bf16.msra.mxu0 %v3683
        %3709 = vmatprep.subr.bf16.mxu0 0
        %3710 = vmatpush1.bf16.msra.mxu0 %v3682
        %3711 = vmatprep.subr.bf16.mxu0 0
        %3712 = vmatpush1.bf16.msra.mxu0 %v3681
        %3713 = vmatprep.subr.bf16.mxu0 0
        %3714 = vmatpush2.bf16.msra.mxu0 0
        %3715 = vmatprep.subr.bf16.mxu0 0
        %3716 = vmatpush2.bf16.msra.mxu0 0
        %3717 = vmatprep.subr.bf16.mxu0 0
        %3718 = vmatpush2.bf16.msra.mxu0 0
        %3719 = vmatprep.subr.bf16.mxu0 0
        %3720 = vmatpush2.bf16.msra.mxu0 0
        %3721 = vmatprep.subr.bf16.mxu0 0
        %3722 = vmatpush2.bf16.msra.mxu0 0
        %3723 = vmatprep.subr.bf16.mxu0 0
        %3724 = vmatpush2.bf16.msra.mxu0 0
        %3725 = vmatprep.subr.bf16.mxu0 0
        %3726 = vmatpush2.bf16.msra.mxu0 0
        %3727 = vmatprep.subr.bf16.mxu0 0
        %3728 = vmatpush2.bf16.msra.mxu0 0
        %3729 = vmatprep.mubr.bf16.mxu0 0
        %3730 = vmatmul.mubr.bf16.gmra.mxu0 %v3625
        %v3731 = vpop.f32.mrf.mxu0
        %v3732 = vadd.f32 %v3647, %v3731
        %v3733 = vpop.f32.mrf.mxu0
        %v3734 = vpop.f32.mrf.mxu0
        %v3735 = vpop.f32.mrf.mxu0
        %3736 = vdwg.mxu0
        %3737 = vst [vmem:[%s282] sm:$0xff] %v3732
      $region52: #{resnext_weighted_head.1} parent=43 // pred_fallthru
        _
      %p3738 = scmp.lt.s32.totalorder %s21, 3
      %s3739 = scalar_select %p3738, %s21, 3
      %s3740 = smul.addr %s3739, 8
      %s3741 = scalar_lea.vmem %s6, %s3740
      // Predicated region
      $region53: #{resnext_weighted_head.1} parent=43 // pred_check
        %p3742 = pneg %p180
      $region54: #{resnext_weighted_head.1} parent=43 // pred_check_branch
        %3744 = sbr.rel (%p3742) target = $region56
      $region55: #{resnext_weighted_head.1} parent=43 // pred_region
        _
      $region56: #{resnext_weighted_head.1} parent=43 // pred_fallthru
        _
    $region44: #{resnext_weighted_head.1} parent=5 // pred_fallthru
      _
    %p3745 = scmp.le.s32.totalorder 2, %s12
    // Predicated region
    $region57: #{resnext_weighted_head.1} parent=5 // pred_check
      %p3746 = pneg %p3745
    $region58: #{resnext_weighted_head.1} parent=5 // pred_check_branch
      %3748 = sbr.rel (%p3746) target = $region60
    $region59: #{resnext_weighted_head.1} parent=5 // pred_region
      %s3749 = ssub.s32 %s12, 2
      // Predicated region
      $region61: #{resnext_weighted_head.1} parent=59 // pred_check
        %p3750 = pneg %p186
      $region62: #{resnext_weighted_head.1} parent=59 // pred_check_branch
        %3752 = sbr.rel (%p3750) target = $region64
      $region63: #{resnext_weighted_head.1} parent=59 // pred_region
        %p3753 = scmp.lt.s32.totalorder %s23, 3
        %s3754 = scalar_select %p3753, %s23, 3
        %s3755 = smul.addr %s3754, 8
        %s3756 = scalar_lea.vmem %s6, %s3755
      $region64: #{resnext_weighted_head.1} parent=59 // pred_fallthru
        _
    $region60: #{resnext_weighted_head.1} parent=5 // pred_fallthru
      _
  $region6: #{resnext_weighted_head.1} parent=0 // loop_footer
    %s16 = sadd.s32 1, %s12
  $region7: #{resnext_weighted_head.1} parent=0 // loop_footer_branch
    %11 = sbr.rel target = $region3
  $region8: #{resnext_weighted_head.1} parent=0 // loop_exit
    _

</llo_original>
